<compile_context>
chip_gen: v6e
topology: v6e:2x2x1
jax: 0.10.0
libtpu: 0.0.40
codegen_flags: <defaults>
</compile_context>

<pallas_src>
import functools

import numpy as np
import jax
import jax.numpy as jnp
from jax.experimental import pallas as pl
from jax.experimental.pallas import tpu as pltpu

EPS = 1e-5        # PyTorch LayerNorm default eps
NEG_INF = -1e30   # additive mask for cross-batch attention entries

VEC_ROW_NAMES = ("cb1", "g1", "be1", "cb2", "g2", "be2",
                 "bo", "ga", "ba", "fb1", "fb2", "gf", "bf")


# ----------------------------- Pallas kernel --------------------------------
def style_encoder_kernel(x_ref, conv_ref, attn_ref, misc_ref, out_ref, *,
                         nheads, hidden, embed):
    bblk, t, dpad = x_ref.shape
    n = bblk * t
    e = embed
    hd = e // nheads

    x = x_ref[...].reshape(n, dpad)                 # bf16 (N, Dpad)

    # misc slab layout (rows): [0:n) pos (tiled over the batch block),
    # [n:2n) block-diagonal additive attention mask, [2n] fused qkv bias,
    # [2n+1 : 2n+14) the 13 per-channel bias/gain rows.
    pos = misc_ref[0:n, 0:e]                        # (N, E)  f32
    amask = misc_ref[n:2 * n, 0:n]                  # (N, N)  f32 additive mask
    bqkv = misc_ref[2 * n:2 * n + 1, 0:3 * e]       # (1, 3E) f32 (Q part pre-scaled)

    def vrow(i, w):
        ri = 2 * n + 1 + i
        return misc_ref[ri:ri + 1, 0:w]
    cb1, g1, be1 = vrow(0, hidden), vrow(1, hidden), vrow(2, hidden)
    cb2, g2, be2 = vrow(3, e), vrow(4, e), vrow(5, e)
    bo, ga, ba = vrow(6, e), vrow(7, e), vrow(8, e)
    fb1, fb2 = vrow(9, e), vrow(10, e)
    gf, bf = vrow(11, e), vrow(12, e)

    # Time-boundary masks (per flattened row) for the k=3 "same"-padding conv.
    # Built from a 2-D sublane iota + a few static compares (no int div/mod).
    row = jax.lax.broadcasted_iota(jnp.int32, (n, 1), 0)
    is_first = row == 0
    is_last = row == t - 1
    for bb in range(1, bblk):
        is_first = jnp.logical_or(is_first, row == bb * t)
        is_last = jnp.logical_or(is_last, row == bb * t + t - 1)

    def conv3(h, w_idx, c_in, c_out, bias):
        # Matmul-first conv: y = h @ [w_prev|w_cur|w_next], then shift + mask
        # the three tap slices (rolls cross batch boundaries only on rows that
        # the is_first / is_last masks zero anyway).
        w = conv_ref[w_idx, 0:c_in, 0:3 * c_out]                     # bf16
        y = jnp.dot(h.astype(jnp.bfloat16), w,
                    preferred_element_type=jnp.float32)              # (N, 3*c_out)
        y_prev = y[:, 0:c_out]
        y_cur = y[:, c_out:2 * c_out]
        y_next = y[:, 2 * c_out:3 * c_out]
        out = y_cur + bias
        out = out + jnp.where(is_first, 0.0, pltpu.roll(y_prev, 1, axis=0))
        out = out + jnp.where(is_last, 0.0, pltpu.roll(y_next, n - 1, axis=0))
        return out

    def layer_norm(h, g, b):
        mu = jnp.mean(h, axis=-1, keepdims=True)
        var = jnp.mean(jnp.square(h - mu), axis=-1, keepdims=True)
        return (h - mu) * jax.lax.rsqrt(var + EPS) * g + b

    # --- pre-net: conv -> relu -> LN -> (dropout=id) -> conv -> relu -> LN ---
    h = layer_norm(jnp.maximum(conv3(x, 0, dpad, hidden, cb1), 0.0), g1, be1)
    h = layer_norm(jnp.maximum(conv3(h, 1, hidden, e, cb2), 0.0), g2, be2)

    # Positional encoding (pre-tiled over the batch block host-side).
    h = h + pos

    # --- FFT block: 4-head self-attention over the whole batch block ---------
    wqkv = attn_ref[0:e, :]                          # (E, 3E) bf16 (Q pre-scaled)
    wo = attn_ref[e:2 * e, 0:e]                      # (E, E)  bf16
    qkv = jnp.dot(h.astype(jnp.bfloat16), wqkv,
                  preferred_element_type=jnp.float32) + bqkv          # (N, 3E)
    qkv_b = qkv.astype(jnp.bfloat16)

    head_outs = []
    for hh in range(nheads):                         # static unroll over heads
        q = qkv_b[:, hh * hd:(hh + 1) * hd]
        k = qkv_b[:, e + hh * hd:e + (hh + 1) * hd]
        v = qkv_b[:, 2 * e + hh * hd:2 * e + (hh + 1) * hd]
        s = jax.lax.dot_general(q, k, (((1,), (1,)), ((), ())),
                                preferred_element_type=jnp.float32)   # (N, N)
        s = s + amask                                # block-diagonal batch mask
        s = s - jnp.max(s, axis=-1, keepdims=True)
        p = jnp.exp(s)
        p = p * pl.reciprocal(jnp.sum(p, axis=-1, keepdims=True), approx=True)
        head_outs.append(jnp.dot(p.astype(jnp.bfloat16), v,
                                 preferred_element_type=jnp.float32))
    o = jnp.concatenate(head_outs, axis=-1)                           # (N, E)
    attn_out = jnp.dot(o.astype(jnp.bfloat16), wo,
                       preferred_element_type=jnp.float32) + bo
    h = layer_norm(attn_out + h, ga, ba)

    # --- position-wise conv FF: conv -> relu -> conv -> (dropout=id), res + LN
    f = jnp.maximum(conv3(h, 2, e, e, fb1), 0.0)
    f = conv3(f, 3, e, e, fb2)
    h = layer_norm(f + h, gf, bf)

    # --- temporal mean per batch element: sum over T / T ---------------------
    out_ref[0] = jnp.sum(h.reshape(bblk, t, e), axis=1) * (1.0 / t)


# ------------------------------ wrapper --------------------------------------
def _pick_block(batch):
    # Largest divisor of `batch` that is <= 8, preferring >= 2 grid steps so
    # v7x megacore has work for both TensorCores.
    divs = [d for d in range(1, min(batch, 8) + 1) if batch % d == 0]
    pref = [d for d in divs if batch // d >= 2]
    return max(pref) if pref else max(divs)


def style_encoder_attn(x, pos, packed, nheads, *, b_blk=None):
    B, T, d_in = x.shape
    hidden, embed = packed["hidden"], packed["embed"]
    conv_slab, attn_slab = packed["conv"], packed["attn"]
    r = conv_slab.shape[1]                       # common conv-input lane width

    if b_blk is None:
        b_blk = _pick_block(B)
    assert B % b_blk == 0, "batch must be divisible by the batch block"
    nb = B // b_blk
    n = b_blk * T

    # Host-side prep: lane-pad x to the common conv width and cast to bf16.
    x_p = jnp.pad(x, ((0, 0), (0, 0), (0, r - d_in))).astype(jnp.bfloat16)

    # Assemble the f32 misc slab: tiled pos, block-diag attn mask, qkv bias,
    # and the 13 bias/gain rows — one lane-dense DMA instead of many tiny ones.
    w_misc = max(3 * embed, hidden, n)

    def rows(a):
        a = jnp.asarray(a, jnp.float32)
        return jnp.pad(a, ((0, 0), (0, w_misc - a.shape[1])))

    bid = np.arange(n) // T
    amask = np.where(bid[:, None] == bid[None, :], 0.0, NEG_INF).astype(np.float32)
    misc = jnp.concatenate(
        [rows(jnp.tile(pos, (b_blk, 1))), rows(amask), rows(packed["bqkv"])]
        + [rows(packed[k]) for k in VEC_ROW_NAMES], axis=0)

    kernel = functools.partial(style_encoder_kernel, nheads=nheads,
                               hidden=hidden, embed=embed)
    out = pl.pallas_call(
        kernel,
        out_shape=jax.ShapeDtypeStruct((nb, b_blk, embed), jnp.float32),
        grid=(nb,),
        in_specs=[
            pl.BlockSpec((b_blk, T, r), lambda b: (b, 0, 0)),
            pl.BlockSpec(conv_slab.shape, lambda b: (0, 0, 0)),
            pl.BlockSpec(attn_slab.shape, lambda b: (0, 0)),
            pl.BlockSpec(misc.shape, lambda b: (0, 0)),
        ],
        out_specs=pl.BlockSpec((1, b_blk, embed), lambda b: (b, 0, 0)),
        compiler_params=pltpu.CompilerParams(
            dimension_semantics=("parallel",)),
    )(x_p, conv_slab, attn_slab, misc)
    return out.reshape(B, embed)


# --------------------------- glue / parameters --------------------------------
def positional_encoding(T, E):
    pos = np.arange(T, dtype=np.float32)[:, None]
    div = np.exp(np.arange(0, E, 2, dtype=np.float32) * (-np.log(10000.0) / E))
    pe = np.zeros((T, E), np.float32)
    pe[:, 0::2] = np.sin(pos * div)
    pe[:, 1::2] = np.cos(pos * div)
    return jnp.asarray(pe)


def build_params(key, d_in, hidden, embed):
    """Natural-form parameters (used by the pure-JAX reference)."""
    keys = jax.random.split(key, 16)

    def w(k, shape, s=0.15):
        return s * jax.random.normal(k, shape, jnp.float32)

    return dict(
        cw1=w(keys[0], (3, d_in, hidden)), cb1=w(keys[1], (1, hidden)),
        g1=jnp.ones((1, hidden), jnp.float32), be1=jnp.zeros((1, hidden), jnp.float32),
        cw2=w(keys[2], (3, hidden, embed)), cb2=w(keys[3], (1, embed)),
        g2=jnp.ones((1, embed), jnp.float32), be2=jnp.zeros((1, embed), jnp.float32),
        wq=w(keys[8], (embed, embed)), wk=w(keys[9], (embed, embed)),
        wv=w(keys[10], (embed, embed)),
        bq=w(keys[11], (embed,)), bk=w(keys[12], (embed,)), bv=w(keys[13], (embed,)),
        wo=w(keys[14], (embed, embed)), bo=w(keys[15], (1, embed)),
        ga=jnp.ones((1, embed), jnp.float32), ba=jnp.zeros((1, embed), jnp.float32),
        fw1=w(keys[4], (3, embed, embed)), fb1=w(keys[5], (1, embed)),
        fw2=w(keys[6], (3, embed, embed)), fb2=w(keys[7], (1, embed)),
        gf=jnp.ones((1, embed), jnp.float32), bf=jnp.zeros((1, embed), jnp.float32),
    )


def pack_params(p, nheads):
    """Host-side repack: bf16 matmul slabs, matmul-first conv taps, scaled-Q fold."""
    d_in, hidden = p["cw1"].shape[1], p["cw1"].shape[2]
    embed = p["wo"].shape[0]
    hd = embed // nheads
    scale = 1.0 / float(np.sqrt(hd))

    r = max(d_in, hidden, embed)          # common conv-input lane width
    wcol = 3 * max(hidden, embed)

    def conv_pack(w):                     # (3, C_in, C_out) -> (r, wcol), zero-padded
        m = jnp.concatenate([w[0], w[1], w[2]], axis=1)
        return jnp.pad(m, ((0, r - m.shape[0]), (0, wcol - m.shape[1])))

    conv_slab = jnp.stack([conv_pack(p["cw1"]), conv_pack(p["cw2"]),
                           conv_pack(p["fw1"]), conv_pack(p["fw2"])]
                          ).astype(jnp.bfloat16)                      # (4, r, wcol)

    wqkv = jnp.concatenate([p["wq"] * scale, p["wk"], p["wv"]], axis=1)   # (E, 3E)
    wo_pad = jnp.pad(p["wo"], ((0, 0), (0, 2 * embed)))                   # (E, 3E)
    attn_slab = jnp.concatenate([wqkv, wo_pad], axis=0).astype(jnp.bfloat16)

    packed = {k: p[k] for k in VEC_ROW_NAMES}
    packed.update(
        conv=conv_slab, attn=attn_slab,
        bqkv=jnp.concatenate([p["bq"] * scale, p["bk"], p["bv"]])[None, :],
        hidden=hidden, embed=embed)
    return packed


# ------------------------- pure-JAX reference ---------------------------------
def _conv3_ref(x, w, b):
    T = x.shape[1]
    xp = jnp.pad(x, ((0, 0), (1, 1), (0, 0)))
    return xp[:, :T] @ w[0] + xp[:, 1:T + 1] @ w[1] + xp[:, 2:T + 2] @ w[2] + b


def _ln_ref(x, g, b):
    mu = x.mean(-1, keepdims=True)
    var = ((x - mu) ** 2).mean(-1, keepdims=True)
    return (x - mu) / jnp.sqrt(var + EPS) * g + b


def ref_forward(x, pos, p, nheads):
    B, T, _ = x.shape
    E = pos.shape[1]
    hd = E // nheads
    h = _ln_ref(jnp.maximum(_conv3_ref(x, p["cw1"], p["cb1"]), 0.0), p["g1"], p["be1"])
    h = _ln_ref(jnp.maximum(_conv3_ref(h, p["cw2"], p["cb2"]), 0.0), p["g2"], p["be2"])
    h = h + pos[None]
    q = (h @ p["wq"] + p["bq"]).reshape(B, T, nheads, hd)
    k = (h @ p["wk"] + p["bk"]).reshape(B, T, nheads, hd)
    v = (h @ p["wv"] + p["bv"]).reshape(B, T, nheads, hd)
    s = jnp.einsum("bqhd,bkhd->bhqk", q, k) / np.sqrt(hd)
    a = jnp.einsum("bhqk,bkhd->bqhd", jax.nn.softmax(s, -1), v).reshape(B, T, E)
    a = a @ p["wo"] + p["bo"]
    h = _ln_ref(a + h, p["ga"], p["ba"])
    f = jnp.maximum(_conv3_ref(h, p["fw1"], p["fb1"]), 0.0)
    f = _conv3_ref(f, p["fw2"], p["fb2"])
    h = _ln_ref(f + h, p["gf"], p["bf"])
    return h.sum(axis=1) / T


# ---------------------------------- main ---------------------------------------
if __name__ == "__main__":
    # B=8 so the batched grid is (2,) with 4 batch elements per step
    # (keeps both v7x TensorCores busy while amortizing per-step overhead).
    B, T, D_IN, HID, EMB, NHEADS = 8, 16, 12, 32, 32, 4
    key = jax.random.PRNGKey(0)
    kx, kp = jax.random.split(key)
    x = jax.random.normal(kx, (B, T, D_IN), jnp.float32)
    params = build_params(kp, D_IN, HID, EMB)
    packed = pack_params(params, NHEADS)
    pos = positional_encoding(T, EMB)

    out = style_encoder_attn(x, pos, packed, NHEADS)
    out = jax.block_until_ready(out)

    ref = ref_forward(x, pos, params, NHEADS)
    assert out.shape == (B, EMB)
    # Tolerance relaxed vs the pure-f32 version: matmul operands (weights and
    # activations, incl. x) are bf16 on the MXU and the softmax denominator
    # uses the EUP's approximate reciprocal; accumulation/LN/softmax stay f32.
    np.testing.assert_allclose(np.asarray(out), np.asarray(ref),
                               rtol=3e-2, atol=3e-2)
    print("KERNEL_OK")
</pallas_src>

<mosaic_0001>
module attributes {stable_mosaic.version = 11 : i64} {
  func.func @style_encoder_kernel(%arg0: i32, %arg1: memref<4x16x32xbf16, #tpu.memory_space<vmem>>, %arg2: memref<4x32x96xbf16, #tpu.memory_space<vmem>>, %arg3: memref<64x96xbf16, #tpu.memory_space<vmem>>, %arg4: memref<142x96xf32, #tpu.memory_space<vmem>>, %arg5: memref<1x4x32xf32, #tpu.memory_space<vmem>>) attributes {dimension_semantics = [#tpu.dimension_semantics<parallel>], iteration_bounds = array<i64: 2>, scalar_prefetch = 0 : i64, scratch_operands = 0 : i64, tpu.core_type = #tpu.core_type<tc>, window_params = [{transform_indices = @transform_0, window_bounds = array<i64: 4, 16, 32>}, {pipeline_mode = #tpu.pipeline_mode<synchronous>, transform_indices = @transform_1, window_bounds = array<i64: 4, 32, 96>}, {pipeline_mode = #tpu.pipeline_mode<synchronous>, transform_indices = @transform_2, window_bounds = array<i64: 64, 96>}, {pipeline_mode = #tpu.pipeline_mode<synchronous>, transform_indices = @transform_3, window_bounds = array<i64: 142, 96>}, {transform_indices = @transform_4, window_bounds = array<i64: 1, 4, 32>}]} {
    %c0 = arith.constant 0 : index
    %c0_0 = arith.constant 0 : index
    %c0_1 = arith.constant 0 : index
    %0 = vector.load %arg1[%c0, %c0_0, %c0_1] : memref<4x16x32xbf16, #tpu.memory_space<vmem>>, vector<4x16x32xbf16>
    %1 = vector.shape_cast %0 : vector<4x16x32xbf16> to vector<64x32xbf16>
    %c0_2 = arith.constant 0 : index
    %c0_3 = arith.constant 0 : index
    %2 = vector.load %arg4[%c0_2, %c0_3] : memref<142x96xf32, #tpu.memory_space<vmem>>, vector<64x32xf32>
    %c64 = arith.constant 64 : index
    %c0_4 = arith.constant 0 : index
    %3 = vector.load %arg4[%c64, %c0_4] : memref<142x96xf32, #tpu.memory_space<vmem>>, vector<64x64xf32>
    %c128 = arith.constant 128 : index
    %c0_5 = arith.constant 0 : index
    %4 = vector.load %arg4[%c128, %c0_5] : memref<142x96xf32, #tpu.memory_space<vmem>>, vector<1x96xf32>
    %c129 = arith.constant 129 : index
    %c0_6 = arith.constant 0 : index
    %5 = vector.load %arg4[%c129, %c0_6] : memref<142x96xf32, #tpu.memory_space<vmem>>, vector<1x32xf32>
    %c130 = arith.constant 130 : index
    %c0_7 = arith.constant 0 : index
    %6 = vector.load %arg4[%c130, %c0_7] : memref<142x96xf32, #tpu.memory_space<vmem>>, vector<1x32xf32>
    %c131 = arith.constant 131 : index
    %c0_8 = arith.constant 0 : index
    %7 = vector.load %arg4[%c131, %c0_8] : memref<142x96xf32, #tpu.memory_space<vmem>>, vector<1x32xf32>
    %c132 = arith.constant 132 : index
    %c0_9 = arith.constant 0 : index
    %8 = vector.load %arg4[%c132, %c0_9] : memref<142x96xf32, #tpu.memory_space<vmem>>, vector<1x32xf32>
    %c133 = arith.constant 133 : index
    %c0_10 = arith.constant 0 : index
    %9 = vector.load %arg4[%c133, %c0_10] : memref<142x96xf32, #tpu.memory_space<vmem>>, vector<1x32xf32>
    %c134 = arith.constant 134 : index
    %c0_11 = arith.constant 0 : index
    %10 = vector.load %arg4[%c134, %c0_11] : memref<142x96xf32, #tpu.memory_space<vmem>>, vector<1x32xf32>
    %c135 = arith.constant 135 : index
    %c0_12 = arith.constant 0 : index
    %11 = vector.load %arg4[%c135, %c0_12] : memref<142x96xf32, #tpu.memory_space<vmem>>, vector<1x32xf32>
    %c136 = arith.constant 136 : index
    %c0_13 = arith.constant 0 : index
    %12 = vector.load %arg4[%c136, %c0_13] : memref<142x96xf32, #tpu.memory_space<vmem>>, vector<1x32xf32>
    %c137 = arith.constant 137 : index
    %c0_14 = arith.constant 0 : index
    %13 = vector.load %arg4[%c137, %c0_14] : memref<142x96xf32, #tpu.memory_space<vmem>>, vector<1x32xf32>
    %c138 = arith.constant 138 : index
    %c0_15 = arith.constant 0 : index
    %14 = vector.load %arg4[%c138, %c0_15] : memref<142x96xf32, #tpu.memory_space<vmem>>, vector<1x32xf32>
    %c139 = arith.constant 139 : index
    %c0_16 = arith.constant 0 : index
    %15 = vector.load %arg4[%c139, %c0_16] : memref<142x96xf32, #tpu.memory_space<vmem>>, vector<1x32xf32>
    %c140 = arith.constant 140 : index
    %c0_17 = arith.constant 0 : index
    %16 = vector.load %arg4[%c140, %c0_17] : memref<142x96xf32, #tpu.memory_space<vmem>>, vector<1x32xf32>
    %c141 = arith.constant 141 : index
    %c0_18 = arith.constant 0 : index
    %17 = vector.load %arg4[%c141, %c0_18] : memref<142x96xf32, #tpu.memory_space<vmem>>, vector<1x32xf32>
    %18 = tpu.iota {dimensions = array<i32: 0>} : vector<64x1xi32>
    %c0_i32 = arith.constant 0 : i32
    %19 = vector.broadcast %c0_i32 : i32 to vector<64x1xi32>
    %20 = arith.cmpi eq, %18, %19 : vector<64x1xi32>
    %c15_i32 = arith.constant 15 : i32
    %21 = vector.broadcast %c15_i32 : i32 to vector<64x1xi32>
    %22 = arith.cmpi eq, %18, %21 : vector<64x1xi32>
    %c16_i32 = arith.constant 16 : i32
    %23 = vector.broadcast %c16_i32 : i32 to vector<64x1xi32>
    %24 = arith.cmpi eq, %18, %23 : vector<64x1xi32>
    %25 = arith.ori %20, %24 : vector<64x1xi1>
    %c31_i32 = arith.constant 31 : i32
    %26 = vector.broadcast %c31_i32 : i32 to vector<64x1xi32>
    %27 = arith.cmpi eq, %18, %26 : vector<64x1xi32>
    %28 = arith.ori %22, %27 : vector<64x1xi1>
    %c32_i32 = arith.constant 32 : i32
    %29 = vector.broadcast %c32_i32 : i32 to vector<64x1xi32>
    %30 = arith.cmpi eq, %18, %29 : vector<64x1xi32>
    %31 = arith.ori %25, %30 : vector<64x1xi1>
    %c47_i32 = arith.constant 47 : i32
    %32 = vector.broadcast %c47_i32 : i32 to vector<64x1xi32>
    %33 = arith.cmpi eq, %18, %32 : vector<64x1xi32>
    %34 = arith.ori %28, %33 : vector<64x1xi1>
    %c48_i32 = arith.constant 48 : i32
    %35 = vector.broadcast %c48_i32 : i32 to vector<64x1xi32>
    %36 = arith.cmpi eq, %18, %35 : vector<64x1xi32>
    %37 = arith.ori %31, %36 : vector<64x1xi1>
    %c63_i32 = arith.constant 63 : i32
    %38 = vector.broadcast %c63_i32 : i32 to vector<64x1xi32>
    %39 = arith.cmpi eq, %18, %38 : vector<64x1xi32>
    %40 = arith.ori %34, %39 : vector<64x1xi1>
    %c0_19 = arith.constant 0 : index
    %c0_20 = arith.constant 0 : index
    %c0_21 = arith.constant 0 : index
    %41 = vector.load %arg2[%c0_19, %c0_20, %c0_21] : memref<4x32x96xbf16, #tpu.memory_space<vmem>>, vector<1x32x96xbf16>
    %42 = vector.shape_cast %41 : vector<1x32x96xbf16> to vector<32x96xbf16>
    %cst = arith.constant dense<0.000000e+00> : vector<64x96xf32>
    %43 = tpu.matmul %1, %42, %cst {dimension_numbers = #tpu.dot_dimension_numbers<[1], [0], [0], [1], [0, 0, 1, 1], [], []>} : vector<64x32xbf16>, vector<32x96xbf16>, vector<64x96xf32> -> vector<64x96xf32>
    %44 = vector.extract_strided_slice %43 {offsets = [0, 0], sizes = [64, 32], strides = [1, 1]} : vector<64x96xf32> to vector<64x32xf32>
    %45 = vector.extract_strided_slice %43 {offsets = [0, 32], sizes = [64, 32], strides = [1, 1]} : vector<64x96xf32> to vector<64x32xf32>
    %46 = vector.extract_strided_slice %43 {offsets = [0, 64], sizes = [64, 32], strides = [1, 1]} : vector<64x96xf32> to vector<64x32xf32>
    %47 = vector.broadcast %5 : vector<1x32xf32> to vector<64x32xf32>
    %48 = arith.addf %45, %47 : vector<64x32xf32>
    %c1_i32 = arith.constant 1 : i32
    %49 = tpu.dynamic_rotate %44 by %c1_i32 dim 0 : vector<64x32xf32>, i32 -> vector<64x32xf32>
    %cst_22 = arith.constant 0.000000e+00 : f32
    %50 = vector.shape_cast %37 : vector<64x1xi1> to vector<64x1xi1>
    %51 = vector.broadcast %50 : vector<64x1xi1> to vector<64x32xi1>
    %52 = vector.broadcast %cst_22 : f32 to vector<64x32xf32>
    %53 = arith.select %51, %52, %49 : vector<64x32xi1>, vector<64x32xf32>
    %54 = arith.addf %48, %53 : vector<64x32xf32>
    %c63_i32_23 = arith.constant 63 : i32
    %55 = tpu.dynamic_rotate %46 by %c63_i32_23 dim 0 : vector<64x32xf32>, i32 -> vector<64x32xf32>
    %cst_24 = arith.constant 0.000000e+00 : f32
    %56 = vector.shape_cast %40 : vector<64x1xi1> to vector<64x1xi1>
    %57 = vector.broadcast %56 : vector<64x1xi1> to vector<64x32xi1>
    %58 = vector.broadcast %cst_24 : f32 to vector<64x32xf32>
    %59 = arith.select %57, %58, %55 : vector<64x32xi1>, vector<64x32xf32>
    %60 = arith.addf %54, %59 : vector<64x32xf32>
    %cst_25 = arith.constant 0.000000e+00 : f32
    %61 = vector.broadcast %cst_25 : f32 to vector<64x32xf32>
    %62 = arith.maximumf %60, %61 : vector<64x32xf32>
    %cst_26 = arith.constant dense<0.000000e+00> : vector<64xf32>
    %63 = vector.multi_reduction <add>, %62, %cst_26 [1] : vector<64x32xf32> to vector<64xf32>
    %64 = vector.shape_cast %63 : vector<64xf32> to vector<64x1xf32>
    %cst_27 = arith.constant 3.200000e+01 : f32
    %65 = vector.broadcast %cst_27 : f32 to vector<64x1xf32>
    %66 = arith.divf %64, %65 : vector<64x1xf32>
    %67 = vector.broadcast %66 : vector<64x1xf32> to vector<64x32xf32>
    %68 = arith.subf %62, %67 : vector<64x32xf32>
    %69 = arith.mulf %68, %68 : vector<64x32xf32>
    %cst_28 = arith.constant dense<0.000000e+00> : vector<64xf32>
    %70 = vector.multi_reduction <add>, %69, %cst_28 [1] : vector<64x32xf32> to vector<64xf32>
    %71 = vector.shape_cast %70 : vector<64xf32> to vector<64x1xf32>
    %cst_29 = arith.constant 3.200000e+01 : f32
    %72 = vector.broadcast %cst_29 : f32 to vector<64x1xf32>
    %73 = arith.divf %71, %72 : vector<64x1xf32>
    %74 = vector.broadcast %66 : vector<64x1xf32> to vector<64x32xf32>
    %75 = arith.subf %62, %74 : vector<64x32xf32>
    %cst_30 = arith.constant 9.99999974E-6 : f32
    %76 = vector.broadcast %cst_30 : f32 to vector<64x1xf32>
    %77 = arith.addf %73, %76 : vector<64x1xf32>
    %78 = math.rsqrt %77 : vector<64x1xf32>
    %79 = vector.broadcast %78 : vector<64x1xf32> to vector<64x32xf32>
    %80 = arith.mulf %75, %79 : vector<64x32xf32>
    %81 = vector.broadcast %6 : vector<1x32xf32> to vector<64x32xf32>
    %82 = arith.mulf %80, %81 : vector<64x32xf32>
    %83 = vector.broadcast %7 : vector<1x32xf32> to vector<64x32xf32>
    %84 = arith.addf %82, %83 : vector<64x32xf32>
    %c1 = arith.constant 1 : index
    %c0_31 = arith.constant 0 : index
    %c0_32 = arith.constant 0 : index
    %85 = vector.load %arg2[%c1, %c0_31, %c0_32] : memref<4x32x96xbf16, #tpu.memory_space<vmem>>, vector<1x32x96xbf16>
    %86 = vector.shape_cast %85 : vector<1x32x96xbf16> to vector<32x96xbf16>
    %87 = arith.truncf %84 : vector<64x32xf32> to vector<64x32xbf16>
    %cst_33 = arith.constant dense<0.000000e+00> : vector<64x96xf32>
    %88 = tpu.matmul %87, %86, %cst_33 {dimension_numbers = #tpu.dot_dimension_numbers<[1], [0], [0], [1], [0, 0, 1, 1], [], []>} : vector<64x32xbf16>, vector<32x96xbf16>, vector<64x96xf32> -> vector<64x96xf32>
    %89 = vector.extract_strided_slice %88 {offsets = [0, 0], sizes = [64, 32], strides = [1, 1]} : vector<64x96xf32> to vector<64x32xf32>
    %90 = vector.extract_strided_slice %88 {offsets = [0, 32], sizes = [64, 32], strides = [1, 1]} : vector<64x96xf32> to vector<64x32xf32>
    %91 = vector.extract_strided_slice %88 {offsets = [0, 64], sizes = [64, 32], strides = [1, 1]} : vector<64x96xf32> to vector<64x32xf32>
    %92 = vector.broadcast %8 : vector<1x32xf32> to vector<64x32xf32>
    %93 = arith.addf %90, %92 : vector<64x32xf32>
    %c1_i32_34 = arith.constant 1 : i32
    %94 = tpu.dynamic_rotate %89 by %c1_i32_34 dim 0 : vector<64x32xf32>, i32 -> vector<64x32xf32>
    %cst_35 = arith.constant 0.000000e+00 : f32
    %95 = vector.shape_cast %37 : vector<64x1xi1> to vector<64x1xi1>
    %96 = vector.broadcast %95 : vector<64x1xi1> to vector<64x32xi1>
    %97 = vector.broadcast %cst_35 : f32 to vector<64x32xf32>
    %98 = arith.select %96, %97, %94 : vector<64x32xi1>, vector<64x32xf32>
    %99 = arith.addf %93, %98 : vector<64x32xf32>
    %c63_i32_36 = arith.constant 63 : i32
    %100 = tpu.dynamic_rotate %91 by %c63_i32_36 dim 0 : vector<64x32xf32>, i32 -> vector<64x32xf32>
    %cst_37 = arith.constant 0.000000e+00 : f32
    %101 = vector.shape_cast %40 : vector<64x1xi1> to vector<64x1xi1>
    %102 = vector.broadcast %101 : vector<64x1xi1> to vector<64x32xi1>
    %103 = vector.broadcast %cst_37 : f32 to vector<64x32xf32>
    %104 = arith.select %102, %103, %100 : vector<64x32xi1>, vector<64x32xf32>
    %105 = arith.addf %99, %104 : vector<64x32xf32>
    %cst_38 = arith.constant 0.000000e+00 : f32
    %106 = vector.broadcast %cst_38 : f32 to vector<64x32xf32>
    %107 = arith.maximumf %105, %106 : vector<64x32xf32>
    %cst_39 = arith.constant dense<0.000000e+00> : vector<64xf32>
    %108 = vector.multi_reduction <add>, %107, %cst_39 [1] : vector<64x32xf32> to vector<64xf32>
    %109 = vector.shape_cast %108 : vector<64xf32> to vector<64x1xf32>
    %cst_40 = arith.constant 3.200000e+01 : f32
    %110 = vector.broadcast %cst_40 : f32 to vector<64x1xf32>
    %111 = arith.divf %109, %110 : vector<64x1xf32>
    %112 = vector.broadcast %111 : vector<64x1xf32> to vector<64x32xf32>
    %113 = arith.subf %107, %112 : vector<64x32xf32>
    %114 = arith.mulf %113, %113 : vector<64x32xf32>
    %cst_41 = arith.constant dense<0.000000e+00> : vector<64xf32>
    %115 = vector.multi_reduction <add>, %114, %cst_41 [1] : vector<64x32xf32> to vector<64xf32>
    %116 = vector.shape_cast %115 : vector<64xf32> to vector<64x1xf32>
    %cst_42 = arith.constant 3.200000e+01 : f32
    %117 = vector.broadcast %cst_42 : f32 to vector<64x1xf32>
    %118 = arith.divf %116, %117 : vector<64x1xf32>
    %119 = vector.broadcast %111 : vector<64x1xf32> to vector<64x32xf32>
    %120 = arith.subf %107, %119 : vector<64x32xf32>
    %cst_43 = arith.constant 9.99999974E-6 : f32
    %121 = vector.broadcast %cst_43 : f32 to vector<64x1xf32>
    %122 = arith.addf %118, %121 : vector<64x1xf32>
    %123 = math.rsqrt %122 : vector<64x1xf32>
    %124 = vector.broadcast %123 : vector<64x1xf32> to vector<64x32xf32>
    %125 = arith.mulf %120, %124 : vector<64x32xf32>
    %126 = vector.broadcast %9 : vector<1x32xf32> to vector<64x32xf32>
    %127 = arith.mulf %125, %126 : vector<64x32xf32>
    %128 = vector.broadcast %10 : vector<1x32xf32> to vector<64x32xf32>
    %129 = arith.addf %127, %128 : vector<64x32xf32>
    %130 = arith.addf %129, %2 : vector<64x32xf32>
    %c0_44 = arith.constant 0 : index
    %c0_45 = arith.constant 0 : index
    %131 = vector.load %arg3[%c0_44, %c0_45] : memref<64x96xbf16, #tpu.memory_space<vmem>>, vector<32x96xbf16>
    %c32 = arith.constant 32 : index
    %c0_46 = arith.constant 0 : index
    %132 = vector.load %arg3[%c32, %c0_46] : memref<64x96xbf16, #tpu.memory_space<vmem>>, vector<32x32xbf16>
    %133 = arith.truncf %130 : vector<64x32xf32> to vector<64x32xbf16>
    %cst_47 = arith.constant dense<0.000000e+00> : vector<64x96xf32>
    %134 = tpu.matmul %133, %131, %cst_47 {dimension_numbers = #tpu.dot_dimension_numbers<[1], [0], [0], [1], [0, 0, 1, 1], [], []>} : vector<64x32xbf16>, vector<32x96xbf16>, vector<64x96xf32> -> vector<64x96xf32>
    %135 = vector.broadcast %4 : vector<1x96xf32> to vector<64x96xf32>
    %136 = arith.addf %134, %135 : vector<64x96xf32>
    %137 = arith.truncf %136 : vector<64x96xf32> to vector<64x96xbf16>
    %138 = vector.extract_strided_slice %137 {offsets = [0, 0], sizes = [64, 8], strides = [1, 1]} : vector<64x96xbf16> to vector<64x8xbf16>
    %139 = vector.extract_strided_slice %137 {offsets = [0, 32], sizes = [64, 8], strides = [1, 1]} : vector<64x96xbf16> to vector<64x8xbf16>
    %140 = vector.extract_strided_slice %137 {offsets = [0, 64], sizes = [64, 8], strides = [1, 1]} : vector<64x96xbf16> to vector<64x8xbf16>
    %cst_48 = arith.constant dense<0.000000e+00> : vector<64x64xf32>
    %141 = tpu.matmul %138, %139, %cst_48 {dimension_numbers = #tpu.dot_dimension_numbers<[1], [1], [0], [0], [0, 0, 1, 0], [], []>} : vector<64x8xbf16>, vector<64x8xbf16>, vector<64x64xf32> -> vector<64x64xf32>
    %142 = arith.addf %141, %3 : vector<64x64xf32>
    %cst_49 = arith.constant dense<0xFF800000> : vector<64xf32>
    %143 = vector.multi_reduction <maximumf>, %142, %cst_49 [1] : vector<64x64xf32> to vector<64xf32>
    %144 = vector.shape_cast %143 : vector<64xf32> to vector<64x1xf32>
    %145 = vector.broadcast %144 : vector<64x1xf32> to vector<64x64xf32>
    %146 = arith.subf %142, %145 : vector<64x64xf32>
    %147 = math.exp %146 : vector<64x64xf32>
    %cst_50 = arith.constant dense<0.000000e+00> : vector<64xf32>
    %148 = vector.multi_reduction <add>, %147, %cst_50 [1] : vector<64x64xf32> to vector<64xf32>
    %149 = vector.shape_cast %148 : vector<64xf32> to vector<64x1xf32>
    %150 = tpu.reciprocal %149 {approx = true} : vector<64x1xf32> -> vector<64x1xf32>
    %151 = vector.broadcast %150 : vector<64x1xf32> to vector<64x64xf32>
    %152 = arith.mulf %147, %151 : vector<64x64xf32>
    %153 = arith.truncf %152 : vector<64x64xf32> to vector<64x64xbf16>
    %cst_51 = arith.constant dense<0.000000e+00> : vector<64x8xf32>
    %154 = tpu.matmul %153, %140, %cst_51 {dimension_numbers = #tpu.dot_dimension_numbers<[1], [0], [0], [1], [0, 0, 1, 1], [], []>} : vector<64x64xbf16>, vector<64x8xbf16>, vector<64x8xf32> -> vector<64x8xf32>
    %155 = vector.extract_strided_slice %137 {offsets = [0, 8], sizes = [64, 8], strides = [1, 1]} : vector<64x96xbf16> to vector<64x8xbf16>
    %156 = vector.extract_strided_slice %137 {offsets = [0, 40], sizes = [64, 8], strides = [1, 1]} : vector<64x96xbf16> to vector<64x8xbf16>
    %157 = vector.extract_strided_slice %137 {offsets = [0, 72], sizes = [64, 8], strides = [1, 1]} : vector<64x96xbf16> to vector<64x8xbf16>
    %cst_52 = arith.constant dense<0.000000e+00> : vector<64x64xf32>
    %158 = tpu.matmul %155, %156, %cst_52 {dimension_numbers = #tpu.dot_dimension_numbers<[1], [1], [0], [0], [0, 0, 1, 0], [], []>} : vector<64x8xbf16>, vector<64x8xbf16>, vector<64x64xf32> -> vector<64x64xf32>
    %159 = arith.addf %158, %3 : vector<64x64xf32>
    %cst_53 = arith.constant dense<0xFF800000> : vector<64xf32>
    %160 = vector.multi_reduction <maximumf>, %159, %cst_53 [1] : vector<64x64xf32> to vector<64xf32>
    %161 = vector.shape_cast %160 : vector<64xf32> to vector<64x1xf32>
    %162 = vector.broadcast %161 : vector<64x1xf32> to vector<64x64xf32>
    %163 = arith.subf %159, %162 : vector<64x64xf32>
    %164 = math.exp %163 : vector<64x64xf32>
    %cst_54 = arith.constant dense<0.000000e+00> : vector<64xf32>
    %165 = vector.multi_reduction <add>, %164, %cst_54 [1] : vector<64x64xf32> to vector<64xf32>
    %166 = vector.shape_cast %165 : vector<64xf32> to vector<64x1xf32>
    %167 = tpu.reciprocal %166 {approx = true} : vector<64x1xf32> -> vector<64x1xf32>
    %168 = vector.broadcast %167 : vector<64x1xf32> to vector<64x64xf32>
    %169 = arith.mulf %164, %168 : vector<64x64xf32>
    %170 = arith.truncf %169 : vector<64x64xf32> to vector<64x64xbf16>
    %cst_55 = arith.constant dense<0.000000e+00> : vector<64x8xf32>
    %171 = tpu.matmul %170, %157, %cst_55 {dimension_numbers = #tpu.dot_dimension_numbers<[1], [0], [0], [1], [0, 0, 1, 1], [], []>} : vector<64x64xbf16>, vector<64x8xbf16>, vector<64x8xf32> -> vector<64x8xf32>
    %172 = vector.extract_strided_slice %137 {offsets = [0, 16], sizes = [64, 8], strides = [1, 1]} : vector<64x96xbf16> to vector<64x8xbf16>
    %173 = vector.extract_strided_slice %137 {offsets = [0, 48], sizes = [64, 8], strides = [1, 1]} : vector<64x96xbf16> to vector<64x8xbf16>
    %174 = vector.extract_strided_slice %137 {offsets = [0, 80], sizes = [64, 8], strides = [1, 1]} : vector<64x96xbf16> to vector<64x8xbf16>
    %cst_56 = arith.constant dense<0.000000e+00> : vector<64x64xf32>
    %175 = tpu.matmul %172, %173, %cst_56 {dimension_numbers = #tpu.dot_dimension_numbers<[1], [1], [0], [0], [0, 0, 1, 0], [], []>} : vector<64x8xbf16>, vector<64x8xbf16>, vector<64x64xf32> -> vector<64x64xf32>
    %176 = arith.addf %175, %3 : vector<64x64xf32>
    %cst_57 = arith.constant dense<0xFF800000> : vector<64xf32>
    %177 = vector.multi_reduction <maximumf>, %176, %cst_57 [1] : vector<64x64xf32> to vector<64xf32>
    %178 = vector.shape_cast %177 : vector<64xf32> to vector<64x1xf32>
    %179 = vector.broadcast %178 : vector<64x1xf32> to vector<64x64xf32>
    %180 = arith.subf %176, %179 : vector<64x64xf32>
    %181 = math.exp %180 : vector<64x64xf32>
    %cst_58 = arith.constant dense<0.000000e+00> : vector<64xf32>
    %182 = vector.multi_reduction <add>, %181, %cst_58 [1] : vector<64x64xf32> to vector<64xf32>
    %183 = vector.shape_cast %182 : vector<64xf32> to vector<64x1xf32>
    %184 = tpu.reciprocal %183 {approx = true} : vector<64x1xf32> -> vector<64x1xf32>
    %185 = vector.broadcast %184 : vector<64x1xf32> to vector<64x64xf32>
    %186 = arith.mulf %181, %185 : vector<64x64xf32>
    %187 = arith.truncf %186 : vector<64x64xf32> to vector<64x64xbf16>
    %cst_59 = arith.constant dense<0.000000e+00> : vector<64x8xf32>
    %188 = tpu.matmul %187, %174, %cst_59 {dimension_numbers = #tpu.dot_dimension_numbers<[1], [0], [0], [1], [0, 0, 1, 1], [], []>} : vector<64x64xbf16>, vector<64x8xbf16>, vector<64x8xf32> -> vector<64x8xf32>
    %189 = vector.extract_strided_slice %137 {offsets = [0, 24], sizes = [64, 8], strides = [1, 1]} : vector<64x96xbf16> to vector<64x8xbf16>
    %190 = vector.extract_strided_slice %137 {offsets = [0, 56], sizes = [64, 8], strides = [1, 1]} : vector<64x96xbf16> to vector<64x8xbf16>
    %191 = vector.extract_strided_slice %137 {offsets = [0, 88], sizes = [64, 8], strides = [1, 1]} : vector<64x96xbf16> to vector<64x8xbf16>
    %cst_60 = arith.constant dense<0.000000e+00> : vector<64x64xf32>
    %192 = tpu.matmul %189, %190, %cst_60 {dimension_numbers = #tpu.dot_dimension_numbers<[1], [1], [0], [0], [0, 0, 1, 0], [], []>} : vector<64x8xbf16>, vector<64x8xbf16>, vector<64x64xf32> -> vector<64x64xf32>
    %193 = arith.addf %192, %3 : vector<64x64xf32>
    %cst_61 = arith.constant dense<0xFF800000> : vector<64xf32>
    %194 = vector.multi_reduction <maximumf>, %193, %cst_61 [1] : vector<64x64xf32> to vector<64xf32>
    %195 = vector.shape_cast %194 : vector<64xf32> to vector<64x1xf32>
    %196 = vector.broadcast %195 : vector<64x1xf32> to vector<64x64xf32>
    %197 = arith.subf %193, %196 : vector<64x64xf32>
    %198 = math.exp %197 : vector<64x64xf32>
    %cst_62 = arith.constant dense<0.000000e+00> : vector<64xf32>
    %199 = vector.multi_reduction <add>, %198, %cst_62 [1] : vector<64x64xf32> to vector<64xf32>
    %200 = vector.shape_cast %199 : vector<64xf32> to vector<64x1xf32>
    %201 = tpu.reciprocal %200 {approx = true} : vector<64x1xf32> -> vector<64x1xf32>
    %202 = vector.broadcast %201 : vector<64x1xf32> to vector<64x64xf32>
    %203 = arith.mulf %198, %202 : vector<64x64xf32>
    %204 = arith.truncf %203 : vector<64x64xf32> to vector<64x64xbf16>
    %cst_63 = arith.constant dense<0.000000e+00> : vector<64x8xf32>
    %205 = tpu.matmul %204, %191, %cst_63 {dimension_numbers = #tpu.dot_dimension_numbers<[1], [0], [0], [1], [0, 0, 1, 1], [], []>} : vector<64x64xbf16>, vector<64x8xbf16>, vector<64x8xf32> -> vector<64x8xf32>
    %206 = tpu.concatenate %154, %171, %188, %205 in 1 : vector<64x8xf32>, vector<64x8xf32>, vector<64x8xf32>, vector<64x8xf32> -> vector<64x32xf32>
    %207 = arith.truncf %206 : vector<64x32xf32> to vector<64x32xbf16>
    %cst_64 = arith.constant dense<0.000000e+00> : vector<64x32xf32>
    %208 = tpu.matmul %207, %132, %cst_64 {dimension_numbers = #tpu.dot_dimension_numbers<[1], [0], [0], [1], [0, 0, 1, 1], [], []>} : vector<64x32xbf16>, vector<32x32xbf16>, vector<64x32xf32> -> vector<64x32xf32>
    %209 = vector.broadcast %11 : vector<1x32xf32> to vector<64x32xf32>
    %210 = arith.addf %208, %209 : vector<64x32xf32>
    %211 = arith.addf %210, %130 : vector<64x32xf32>
    %cst_65 = arith.constant dense<0.000000e+00> : vector<64xf32>
    %212 = vector.multi_reduction <add>, %211, %cst_65 [1] : vector<64x32xf32> to vector<64xf32>
    %213 = vector.shape_cast %212 : vector<64xf32> to vector<64x1xf32>
    %cst_66 = arith.constant 3.200000e+01 : f32
    %214 = vector.broadcast %cst_66 : f32 to vector<64x1xf32>
    %215 = arith.divf %213, %214 : vector<64x1xf32>
    %216 = vector.broadcast %215 : vector<64x1xf32> to vector<64x32xf32>
    %217 = arith.subf %211, %216 : vector<64x32xf32>
    %218 = arith.mulf %217, %217 : vector<64x32xf32>
    %cst_67 = arith.constant dense<0.000000e+00> : vector<64xf32>
    %219 = vector.multi_reduction <add>, %218, %cst_67 [1] : vector<64x32xf32> to vector<64xf32>
    %220 = vector.shape_cast %219 : vector<64xf32> to vector<64x1xf32>
    %cst_68 = arith.constant 3.200000e+01 : f32
    %221 = vector.broadcast %cst_68 : f32 to vector<64x1xf32>
    %222 = arith.divf %220, %221 : vector<64x1xf32>
    %223 = vector.broadcast %215 : vector<64x1xf32> to vector<64x32xf32>
    %224 = arith.subf %211, %223 : vector<64x32xf32>
    %cst_69 = arith.constant 9.99999974E-6 : f32
    %225 = vector.broadcast %cst_69 : f32 to vector<64x1xf32>
    %226 = arith.addf %222, %225 : vector<64x1xf32>
    %227 = math.rsqrt %226 : vector<64x1xf32>
    %228 = vector.broadcast %227 : vector<64x1xf32> to vector<64x32xf32>
    %229 = arith.mulf %224, %228 : vector<64x32xf32>
    %230 = vector.broadcast %12 : vector<1x32xf32> to vector<64x32xf32>
    %231 = arith.mulf %229, %230 : vector<64x32xf32>
    %232 = vector.broadcast %13 : vector<1x32xf32> to vector<64x32xf32>
    %233 = arith.addf %231, %232 : vector<64x32xf32>
    %c2 = arith.constant 2 : index
    %c0_70 = arith.constant 0 : index
    %c0_71 = arith.constant 0 : index
    %234 = vector.load %arg2[%c2, %c0_70, %c0_71] : memref<4x32x96xbf16, #tpu.memory_space<vmem>>, vector<1x32x96xbf16>
    %235 = vector.shape_cast %234 : vector<1x32x96xbf16> to vector<32x96xbf16>
    %236 = arith.truncf %233 : vector<64x32xf32> to vector<64x32xbf16>
    %cst_72 = arith.constant dense<0.000000e+00> : vector<64x96xf32>
    %237 = tpu.matmul %236, %235, %cst_72 {dimension_numbers = #tpu.dot_dimension_numbers<[1], [0], [0], [1], [0, 0, 1, 1], [], []>} : vector<64x32xbf16>, vector<32x96xbf16>, vector<64x96xf32> -> vector<64x96xf32>
    %238 = vector.extract_strided_slice %237 {offsets = [0, 0], sizes = [64, 32], strides = [1, 1]} : vector<64x96xf32> to vector<64x32xf32>
    %239 = vector.extract_strided_slice %237 {offsets = [0, 32], sizes = [64, 32], strides = [1, 1]} : vector<64x96xf32> to vector<64x32xf32>
    %240 = vector.extract_strided_slice %237 {offsets = [0, 64], sizes = [64, 32], strides = [1, 1]} : vector<64x96xf32> to vector<64x32xf32>
    %241 = vector.broadcast %14 : vector<1x32xf32> to vector<64x32xf32>
    %242 = arith.addf %239, %241 : vector<64x32xf32>
    %c1_i32_73 = arith.constant 1 : i32
    %243 = tpu.dynamic_rotate %238 by %c1_i32_73 dim 0 : vector<64x32xf32>, i32 -> vector<64x32xf32>
    %cst_74 = arith.constant 0.000000e+00 : f32
    %244 = vector.shape_cast %37 : vector<64x1xi1> to vector<64x1xi1>
    %245 = vector.broadcast %244 : vector<64x1xi1> to vector<64x32xi1>
    %246 = vector.broadcast %cst_74 : f32 to vector<64x32xf32>
    %247 = arith.select %245, %246, %243 : vector<64x32xi1>, vector<64x32xf32>
    %248 = arith.addf %242, %247 : vector<64x32xf32>
    %c63_i32_75 = arith.constant 63 : i32
    %249 = tpu.dynamic_rotate %240 by %c63_i32_75 dim 0 : vector<64x32xf32>, i32 -> vector<64x32xf32>
    %cst_76 = arith.constant 0.000000e+00 : f32
    %250 = vector.shape_cast %40 : vector<64x1xi1> to vector<64x1xi1>
    %251 = vector.broadcast %250 : vector<64x1xi1> to vector<64x32xi1>
    %252 = vector.broadcast %cst_76 : f32 to vector<64x32xf32>
    %253 = arith.select %251, %252, %249 : vector<64x32xi1>, vector<64x32xf32>
    %254 = arith.addf %248, %253 : vector<64x32xf32>
    %cst_77 = arith.constant 0.000000e+00 : f32
    %255 = vector.broadcast %cst_77 : f32 to vector<64x32xf32>
    %256 = arith.maximumf %254, %255 : vector<64x32xf32>
    %c3 = arith.constant 3 : index
    %c0_78 = arith.constant 0 : index
    %c0_79 = arith.constant 0 : index
    %257 = vector.load %arg2[%c3, %c0_78, %c0_79] : memref<4x32x96xbf16, #tpu.memory_space<vmem>>, vector<1x32x96xbf16>
    %258 = vector.shape_cast %257 : vector<1x32x96xbf16> to vector<32x96xbf16>
    %259 = arith.truncf %256 : vector<64x32xf32> to vector<64x32xbf16>
    %cst_80 = arith.constant dense<0.000000e+00> : vector<64x96xf32>
    %260 = tpu.matmul %259, %258, %cst_80 {dimension_numbers = #tpu.dot_dimension_numbers<[1], [0], [0], [1], [0, 0, 1, 1], [], []>} : vector<64x32xbf16>, vector<32x96xbf16>, vector<64x96xf32> -> vector<64x96xf32>
    %261 = vector.extract_strided_slice %260 {offsets = [0, 0], sizes = [64, 32], strides = [1, 1]} : vector<64x96xf32> to vector<64x32xf32>
    %262 = vector.extract_strided_slice %260 {offsets = [0, 32], sizes = [64, 32], strides = [1, 1]} : vector<64x96xf32> to vector<64x32xf32>
    %263 = vector.extract_strided_slice %260 {offsets = [0, 64], sizes = [64, 32], strides = [1, 1]} : vector<64x96xf32> to vector<64x32xf32>
    %264 = vector.broadcast %15 : vector<1x32xf32> to vector<64x32xf32>
    %265 = arith.addf %262, %264 : vector<64x32xf32>
    %c1_i32_81 = arith.constant 1 : i32
    %266 = tpu.dynamic_rotate %261 by %c1_i32_81 dim 0 : vector<64x32xf32>, i32 -> vector<64x32xf32>
    %cst_82 = arith.constant 0.000000e+00 : f32
    %267 = vector.shape_cast %37 : vector<64x1xi1> to vector<64x1xi1>
    %268 = vector.broadcast %267 : vector<64x1xi1> to vector<64x32xi1>
    %269 = vector.broadcast %cst_82 : f32 to vector<64x32xf32>
    %270 = arith.select %268, %269, %266 : vector<64x32xi1>, vector<64x32xf32>
    %271 = arith.addf %265, %270 : vector<64x32xf32>
    %c63_i32_83 = arith.constant 63 : i32
    %272 = tpu.dynamic_rotate %263 by %c63_i32_83 dim 0 : vector<64x32xf32>, i32 -> vector<64x32xf32>
    %cst_84 = arith.constant 0.000000e+00 : f32
    %273 = vector.shape_cast %40 : vector<64x1xi1> to vector<64x1xi1>
    %274 = vector.broadcast %273 : vector<64x1xi1> to vector<64x32xi1>
    %275 = vector.broadcast %cst_84 : f32 to vector<64x32xf32>
    %276 = arith.select %274, %275, %272 : vector<64x32xi1>, vector<64x32xf32>
    %277 = arith.addf %271, %276 : vector<64x32xf32>
    %278 = arith.addf %277, %233 : vector<64x32xf32>
    %cst_85 = arith.constant dense<0.000000e+00> : vector<64xf32>
    %279 = vector.multi_reduction <add>, %278, %cst_85 [1] : vector<64x32xf32> to vector<64xf32>
    %280 = vector.shape_cast %279 : vector<64xf32> to vector<64x1xf32>
    %cst_86 = arith.constant 3.200000e+01 : f32
    %281 = vector.broadcast %cst_86 : f32 to vector<64x1xf32>
    %282 = arith.divf %280, %281 : vector<64x1xf32>
    %283 = vector.broadcast %282 : vector<64x1xf32> to vector<64x32xf32>
    %284 = arith.subf %278, %283 : vector<64x32xf32>
    %285 = arith.mulf %284, %284 : vector<64x32xf32>
    %cst_87 = arith.constant dense<0.000000e+00> : vector<64xf32>
    %286 = vector.multi_reduction <add>, %285, %cst_87 [1] : vector<64x32xf32> to vector<64xf32>
    %287 = vector.shape_cast %286 : vector<64xf32> to vector<64x1xf32>
    %cst_88 = arith.constant 3.200000e+01 : f32
    %288 = vector.broadcast %cst_88 : f32 to vector<64x1xf32>
    %289 = arith.divf %287, %288 : vector<64x1xf32>
    %290 = vector.broadcast %282 : vector<64x1xf32> to vector<64x32xf32>
    %291 = arith.subf %278, %290 : vector<64x32xf32>
    %cst_89 = arith.constant 9.99999974E-6 : f32
    %292 = vector.broadcast %cst_89 : f32 to vector<64x1xf32>
    %293 = arith.addf %289, %292 : vector<64x1xf32>
    %294 = math.rsqrt %293 : vector<64x1xf32>
    %295 = vector.broadcast %294 : vector<64x1xf32> to vector<64x32xf32>
    %296 = arith.mulf %291, %295 : vector<64x32xf32>
    %297 = vector.broadcast %16 : vector<1x32xf32> to vector<64x32xf32>
    %298 = arith.mulf %296, %297 : vector<64x32xf32>
    %299 = vector.broadcast %17 : vector<1x32xf32> to vector<64x32xf32>
    %300 = arith.addf %298, %299 : vector<64x32xf32>
    %301 = vector.shape_cast %300 : vector<64x32xf32> to vector<4x16x32xf32>
    %cst_90 = arith.constant dense<0.000000e+00> : vector<4x32xf32>
    %302 = vector.multi_reduction <add>, %301, %cst_90 [1] : vector<4x16x32xf32> to vector<4x32xf32>
    %cst_91 = arith.constant 6.250000e-02 : f32
    %303 = vector.broadcast %cst_91 : f32 to vector<4x32xf32>
    %304 = arith.mulf %302, %303 : vector<4x32xf32>
    %c0_92 = arith.constant 0 : index
    %c0_93 = arith.constant 0 : index
    %c0_94 = arith.constant 0 : index
    %305 = vector.load %arg5[%c0_92, %c0_93, %c0_94] : memref<1x4x32xf32, #tpu.memory_space<vmem>>, vector<1x4x32xf32>
    %306 = vector.shape_cast %305 : vector<1x4x32xf32> to vector<4x32xf32>
    %307 = vector.shape_cast %304 : vector<4x32xf32> to vector<1x4x32xf32>
    tpu.vector_store %arg5[%c0_92, %c0_93, %c0_94], %307 {strides = array<i32>} : memref<1x4x32xf32, #tpu.memory_space<vmem>>, vector<1x4x32xf32>,
    return
  }
  func.func @transform_0(%arg0: i32) -> (i32, i32, i32) {
    %c0_i32 = arith.constant 0 : i32
    %c0_i32_0 = arith.constant 0 : i32
    %c0_i32_1 = arith.constant 0 : i32
    return %arg0, %c0_i32, %c0_i32_0 : i32, i32, i32
  }
  func.func @transform_1(%arg0: i32) -> (i32, i32, i32) {
    %c0_i32 = arith.constant 0 : i32
    %c0_i32_0 = arith.constant 0 : i32
    %c0_i32_1 = arith.constant 0 : i32
    %c0_i32_2 = arith.constant 0 : i32
    return %c0_i32, %c0_i32_0, %c0_i32_1 : i32, i32, i32
  }
  func.func @transform_2(%arg0: i32) -> (i32, i32) {
    %c0_i32 = arith.constant 0 : i32
    %c0_i32_0 = arith.constant 0 : i32
    %c0_i32_1 = arith.constant 0 : i32
    return %c0_i32, %c0_i32_0 : i32, i32
  }
  func.func @transform_3(%arg0: i32) -> (i32, i32) {
    %c0_i32 = arith.constant 0 : i32
    %c0_i32_0 = arith.constant 0 : i32
    %c0_i32_1 = arith.constant 0 : i32
    return %c0_i32, %c0_i32_0 : i32, i32
  }
  func.func @transform_4(%arg0: i32) -> (i32, i32, i32) {
    %c0_i32 = arith.constant 0 : i32
    %c0_i32_0 = arith.constant 0 : i32
    %c0_i32_1 = arith.constant 0 : i32
    return %arg0, %c0_i32, %c0_i32_0 : i32, i32, i32
  }
}

</mosaic_0001>

<llo_original>
// kernel: tpu_custom_call.1
$region0: #{tpu_custom_call.1}
  #allocation0 [shape = 'u32[]', space=smem, size = 0x4, offset = 0x4, fixed_abs, tag = 'smem constant byte address 0x4 - core index']
  #allocation1 [shape = 'u32[144,128]{1,0:T(1,128)}', space=vmem, size = 0x12000, scoped, tag = 'internal scratch']
  %s0 = inlined_call_operand.hbm [shape: bf16[8,16,32], index: 0, kind: input, shape index: {}]
  %s1 = inlined_call_operand.hbm [shape: bf16[4,32,96], index: 1, kind: input, shape index: {}]
  %s2 = inlined_call_operand.hbm [shape: bf16[64,96], index: 2, kind: input, shape index: {}]
  %s3 = inlined_call_operand.hbm [shape: f32[142,96], index: 3, kind: input, shape index: {}]
  %s4 = inlined_call_operand.hbm [shape: f32[2,4,32], index: 4, kind: output, shape index: {}]
  %s5 = sld [smem:[#allocation0]]
  $region65: #{tpu_custom_call.1} parent=0
    _
  %s7 = ssub.s32 1, %s5
  %s8 = scalar_select 0, %s7, %s5
  $region1: #{tpu_custom_call.1} parent=0
    #allocation2 [shape = 'u8[32768]{0}', space=vmem, size = 0x8000, scoped, tag = 'input window, operand 0']
    #allocation3 [shape = 's32[2]{0}', space=sflag, size = 0x8, scoped, tag = 'scoped memory for tpu_custom_call.1']
    #allocation4 [shape = 's32[2]{0}', space=sflag, size = 0x8, scoped, tag = 'scoped memory for tpu_custom_call.1']
    #allocation5 [shape = 'u8[32768]{0}', space=vmem, size = 0x8000, scoped, tag = 'input window, operand 1, single buffered']
    #allocation6 [shape = 's32[1]{0}', space=sflag, size = 0x4, scoped, tag = 'scoped memory for tpu_custom_call.1']
    #allocation7 [shape = 'u8[16384]{0}', space=vmem, size = 0x4000, scoped, tag = 'input window, operand 2, single buffered']
    #allocation8 [shape = 'u8[73728]{0}', space=vmem, size = 0x12000, scoped, tag = 'input window, operand 3, single buffered']
    #allocation9 [shape = 's32[1]{0}', space=sflag, size = 0x4, scoped, tag = 'scoped memory for tpu_custom_call.1']
    #allocation10 [shape = 'u8[4096]{0}', space=vmem, size = 0x1000, scoped, tag = 'output window, operand 0']
    %9 = vsyncpa [#allocation3], 0
    %s10 = scalar_lea.sflag [#allocation3], 1
    %11 = vsyncpa %s10, 0
    %12 = vsyncpa [#allocation6], 0
    %13 = vsyncpa [#allocation9], 0
    %14 = vsyncpa [#allocation4], 0
    %s15 = scalar_lea.sflag [#allocation4], 1
    %16 = vsyncpa %s15, 0
    loop: start=0, step=1, limit=4
    $region2: #{tpu_custom_call.1} parent=1 // loop_pre_header
      _
    $region3: #{tpu_custom_call.1} parent=1 // loop_header
      %s18 = sphi 0, %s22
      %p19 = scmp.ge.s32.totalorder %s18, 4
      %s28 = sphi 0, %s30
      %s31 = sphi 0, %s28
      %s32 = sphi 0, %s31
      %s48 = sphi 0, %s32
      %s52 = sphi 0, %s52
      %s54 = sphi 0, %s52
      %s55 = sphi 0, %s54
      %s69 = sphi 0, %s55
      %s73 = sphi 0, %s73
      %s75 = sphi 0, %s73
      %s76 = sphi 0, %s75
      %s90 = sphi 0, %s76
      %s94 = sphi 0, %s94
      %s96 = sphi 0, %s94
      %s97 = sphi 0, %s96
      %s111 = sphi 0, %s97
      %s117 = sphi 0, %s119
      %s120 = sphi 0, %s117
      %s121 = sphi 0, %s120
      %s137 = sphi 0, %s121
    $region4: #{tpu_custom_call.1} parent=1 // loop_header_branch
      %21 = sbr.rel (%p19) target = $region8
    $region5: #{tpu_custom_call.1} parent=1 // loop_body
      %s23 = ssub.s32 %s18, 1
      %s24 = ssub.s32 %s18, 2
      %s25 = sadd.s32 %s18, 1
      %s26 = ssub.s32 %s18, %s25
      %p27 = scmp.eq.s32.totalorder %s26, 0
      %s29 = sadd.s32 %s28, 1
      %s30 = scalar_select %p27, %s28, %s29
      %p33 = pneg %p27
      %p34 = scmp.eq.s32.totalorder %s18, 1
      %p35 = por %p33, %p34
      %p36 = scmp.ne.s32.totalorder %s28, %s31
      %p37 = scmp.eq.s32.totalorder %s18, 0
      %p38 = por %p36, %p37
      %p39 = scmp.ne.s32.totalorder %s28, %s31
      %p40 = scmp.eq.s32.totalorder %s23, 1
      %p41 = por %p39, %p40
      %p42 = scmp.ne.s32.totalorder %s31, %s32
      %p43 = scmp.eq.s32.totalorder %s23, 0
      %p44 = por %p42, %p43
      %p45 = scmp.ne.s32.totalorder %s31, %s32
      %p46 = scmp.eq.s32.totalorder %s24, 1
      %p47 = por %p45, %p46
      %p49 = scmp.ne.s32.totalorder %s32, %s48
      %p50 = scmp.eq.s32.totalorder %s24, 0
      %p51 = por %p49, %p50
      %s53 = sadd.s32 %s52, 1
      %p56 = scmp.eq.s32.totalorder %s18, 1
      %p57 = scmp.ne.s32.totalorder %s52, %s54
      %p58 = scmp.eq.s32.totalorder %s18, 0
      %p59 = por %p57, %p58
      %p60 = scmp.ne.s32.totalorder %s52, %s54
      %p61 = scmp.eq.s32.totalorder %s23, 1
      %p62 = por %p60, %p61
      %p63 = scmp.ne.s32.totalorder %s54, %s55
      %p64 = scmp.eq.s32.totalorder %s23, 0
      %p65 = por %p63, %p64
      %p66 = scmp.ne.s32.totalorder %s54, %s55
      %p67 = scmp.eq.s32.totalorder %s24, 1
      %p68 = por %p66, %p67
      %p70 = scmp.ne.s32.totalorder %s55, %s69
      %p71 = scmp.eq.s32.totalorder %s24, 0
      %p72 = por %p70, %p71
      %s74 = sadd.s32 %s73, 1
      %p77 = scmp.eq.s32.totalorder %s18, 1
      %p78 = scmp.ne.s32.totalorder %s73, %s75
      %p79 = scmp.eq.s32.totalorder %s18, 0
      %p80 = por %p78, %p79
      %p81 = scmp.ne.s32.totalorder %s73, %s75
      %p82 = scmp.eq.s32.totalorder %s23, 1
      %p83 = por %p81, %p82
      %p84 = scmp.ne.s32.totalorder %s75, %s76
      %p85 = scmp.eq.s32.totalorder %s23, 0
      %p86 = por %p84, %p85
      %p87 = scmp.ne.s32.totalorder %s75, %s76
      %p88 = scmp.eq.s32.totalorder %s24, 1
      %p89 = por %p87, %p88
      %p91 = scmp.ne.s32.totalorder %s76, %s90
      %p92 = scmp.eq.s32.totalorder %s24, 0
      %p93 = por %p91, %p92
      %s95 = sadd.s32 %s94, 1
      %p98 = scmp.eq.s32.totalorder %s18, 1
      %p99 = scmp.ne.s32.totalorder %s94, %s96
      %p100 = scmp.eq.s32.totalorder %s18, 0
      %p101 = por %p99, %p100
      %p102 = scmp.ne.s32.totalorder %s94, %s96
      %p103 = scmp.eq.s32.totalorder %s23, 1
      %p104 = por %p102, %p103
      %p105 = scmp.ne.s32.totalorder %s96, %s97
      %p106 = scmp.eq.s32.totalorder %s23, 0
      %p107 = por %p105, %p106
      %p108 = scmp.ne.s32.totalorder %s96, %s97
      %p109 = scmp.eq.s32.totalorder %s24, 1
      %p110 = por %p108, %p109
      %p112 = scmp.ne.s32.totalorder %s97, %s111
      %p113 = scmp.eq.s32.totalorder %s24, 0
      %p114 = por %p112, %p113
      %s115 = ssub.s32 %s18, %s25
      %p116 = scmp.eq.s32.totalorder %s115, 0
      %s118 = sadd.s32 %s117, 1
      %s119 = scalar_select %p116, %s117, %s118
      %p122 = pneg %p116
      %p123 = scmp.eq.s32.totalorder %s18, 1
      %p124 = por %p122, %p123
      %p125 = scmp.ne.s32.totalorder %s117, %s120
      %p126 = scmp.eq.s32.totalorder %s18, 0
      %p127 = por %p125, %p126
      %p128 = scmp.ne.s32.totalorder %s117, %s120
      %p129 = scmp.eq.s32.totalorder %s23, 1
      %p130 = por %p128, %p129
      %p131 = scmp.ne.s32.totalorder %s120, %s121
      %p132 = scmp.eq.s32.totalorder %s23, 0
      %p133 = por %p131, %p132
      %p134 = scmp.ne.s32.totalorder %s120, %s121
      %p135 = scmp.eq.s32.totalorder %s24, 1
      %p136 = por %p134, %p135
      %p138 = scmp.ne.s32.totalorder %s121, %s137
      %p139 = scmp.eq.s32.totalorder %s24, 0
      %p140 = por %p138, %p139
      %p141 = scmp.le.s32.totalorder 1, %s18
      %p142 = scmp.lt.s32.totalorder %s18, 3
      %p143 = pnand %p141, %p142
      %p144 = pneg %p143
      // Predicated region
      $region9: #{tpu_custom_call.1} parent=5 // pred_check
        _
      $region10: #{tpu_custom_call.1} parent=5 // pred_check_branch
        %146 = sbr.rel (%p143) target = $region12
      $region11: #{tpu_custom_call.1} parent=5 // pred_region
        %s147 = ssub.s32 %s18, 1
        // Predicated region
        $region13: #{tpu_custom_call.1} parent=11 // pred_check
          %p148 = pneg %p65
        $region14: #{tpu_custom_call.1} parent=11 // pred_check_branch
          %150 = sbr.rel (%p148) target = $region16
        $region15: #{tpu_custom_call.1} parent=11 // pred_region
          %s152 = ssub.s32 1024, 1024
          %153 = vsyncadd [#allocation6], %s152
          %s154 = sshll.u32 [#allocation5], 4
          %s155 = int_to_ptr.vmem [resolvable:$true] %s154
          %160 = dma.hbm_to_vmem [thread:$0]  %s1, 1024, %s155, [#allocation6], 64, 64, 4
        $region16: #{tpu_custom_call.1} parent=11 // pred_fallthru
          _
        // Predicated region
        $region17: #{tpu_custom_call.1} parent=11 // pred_check
          %p161 = pneg %p86
        $region18: #{tpu_custom_call.1} parent=11 // pred_check_branch
          %163 = sbr.rel (%p161) target = $region20
        $region19: #{tpu_custom_call.1} parent=11 // pred_region
          %s165 = ssub.s32 512, 512
          %166 = vsyncadd [#allocation6], %s165
          %s167 = sshll.u32 [#allocation7], 4
          %s168 = int_to_ptr.vmem [resolvable:$true] %s167
          %173 = dma.hbm_to_vmem [thread:$0]  %s2, 512, %s168, [#allocation6], 64, 64, 4
        $region20: #{tpu_custom_call.1} parent=11 // pred_fallthru
          _
        // Predicated region
        $region21: #{tpu_custom_call.1} parent=11 // pred_check
          %p174 = pneg %p107
        $region22: #{tpu_custom_call.1} parent=11 // pred_check_branch
          %176 = sbr.rel (%p174) target = $region24
        $region23: #{tpu_custom_call.1} parent=11 // pred_region
          %s178 = ssub.s32 2304, 2304
          %179 = vsyncadd [#allocation9], %s178
          %s180 = sshll.u32 [#allocation8], 4
          %s181 = int_to_ptr.vmem [resolvable:$true] %s180
          %186 = dma.hbm_to_vmem [thread:$0]  %s3, 2304, %s181, [#allocation9], 128, 128, 8
        $region24: #{tpu_custom_call.1} parent=11 // pred_fallthru
          _
      $region12: #{tpu_custom_call.1} parent=5 // pred_fallthru
        _
      %p187 = scmp.lt.s32.totalorder %s18, 2
      // Predicated region
      $region25: #{tpu_custom_call.1} parent=5 // pred_check
        %p188 = pneg %p187
      $region26: #{tpu_custom_call.1} parent=5 // pred_check_branch
        %190 = sbr.rel (%p188) target = $region28
      $region27: #{tpu_custom_call.1} parent=5 // pred_region
        // Predicated region
        $region29: #{tpu_custom_call.1} parent=27 // pred_check
          %p191 = pneg %p38
        $region30: #{tpu_custom_call.1} parent=27 // pred_check_branch
          %193 = sbr.rel (%p191) target = $region32
        $region31: #{tpu_custom_call.1} parent=27 // pred_region
          %s194 = sand.u32 %s28, 1
          %s195 = scalar_lea.sflag [#allocation3], %s194
          %s196 = sand.u32 %s28, 1
          %s197 = smul.addr %s196, 32
          %s198 = scalar_lea.vmem [#allocation2], %s197
          %s199 = smul.u32 4, %s18
          %s201 = ssub.s32 512, 512
          %202 = vsyncadd %s195, %s201
          %s203 = smul.addr %s199, 2
          %s204 = smul.addr %s203, 64
          %s205 = scalar_lea.hbm %s0, %s204
          %s206 = sshll.u32 %s198, 4
          %s207 = int_to_ptr.vmem [resolvable:$true] %s206
          %212 = dma.hbm_to_vmem [thread:$0]  %s205, 512, %s207, %s195, 64, 64, 4
        $region32: #{tpu_custom_call.1} parent=27 // pred_fallthru
          _
      $region28: #{tpu_custom_call.1} parent=5 // pred_fallthru
        _
      %p213 = scmp.le.s32.totalorder 1, %s18
      %p214 = scmp.lt.s32.totalorder %s18, 3
      %p215 = pnand %p213, %p214
      %p216 = pneg %p215
      // Predicated region
      $region33: #{tpu_custom_call.1} parent=5 // pred_check
        _
      $region34: #{tpu_custom_call.1} parent=5 // pred_check_branch
        %218 = sbr.rel (%p215) target = $region36
      $region35: #{tpu_custom_call.1} parent=5 // pred_region
        %s219 = ssub.s32 %s18, 1
        %s220 = sand.u32 %s31, 1
        %s221 = scalar_lea.sflag [#allocation3], %s220
        %s222 = sand.u32 %s31, 1
        %s223 = smul.addr %s222, 32
        %s224 = scalar_lea.vmem [#allocation2], %s223
        // Predicated region
        $region37: #{tpu_custom_call.1} parent=35 // pred_check
          %p225 = pneg %p44
        $region38: #{tpu_custom_call.1} parent=35 // pred_check_branch
          %227 = sbr.rel (%p225) target = $region40
        $region39: #{tpu_custom_call.1} parent=35 // pred_region
          %228 = dma.done %s221, 512
        $region40: #{tpu_custom_call.1} parent=35 // pred_fallthru
          _
        // Predicated region
        $region41: #{tpu_custom_call.1} parent=35 // pred_check
          %p229 = pneg %p65
        $region42: #{tpu_custom_call.1} parent=35 // pred_check_branch
          %231 = sbr.rel (%p229) target = $region44
        $region43: #{tpu_custom_call.1} parent=35 // pred_region
          %232 = dma.done [#allocation6], 1024
        $region44: #{tpu_custom_call.1} parent=35 // pred_fallthru
          _
        // Predicated region
        $region45: #{tpu_custom_call.1} parent=35 // pred_check
          %p233 = pneg %p86
        $region46: #{tpu_custom_call.1} parent=35 // pred_check_branch
          %235 = sbr.rel (%p233) target = $region48
        $region47: #{tpu_custom_call.1} parent=35 // pred_region
          %236 = dma.done [#allocation6], 512
        $region48: #{tpu_custom_call.1} parent=35 // pred_fallthru
          _
        // Predicated region
        $region49: #{tpu_custom_call.1} parent=35 // pred_check
          %p237 = pneg %p107
        $region50: #{tpu_custom_call.1} parent=35 // pred_check_branch
          %239 = sbr.rel (%p237) target = $region52
        $region51: #{tpu_custom_call.1} parent=35 // pred_region
          %240 = dma.done [#allocation9], 2304
        $region52: #{tpu_custom_call.1} parent=35 // pred_fallthru
          _
        %s241 = sand.u32 %s31, 1
        %s242 = scalar_lea.sflag [#allocation3], %s241
        %s243 = sand.u32 %s31, 1
        %s244 = smul.addr %s243, 32
        %s245 = scalar_lea.vmem [#allocation2], %s244
        %p246 = pneg %p44
        %p247 = pneg %p41
        %p248 = pneg %p65
        %p249 = pneg %p62
        %p250 = pneg %p86
        %p251 = pneg %p83
        %p252 = pneg %p107
        %p253 = pneg %p104
        %p254 = pneg %p133
        %p255 = pneg %p130
        %s256 = sand.u32 %s120, 1
        %s257 = scalar_lea.sflag [#allocation4], %s256
        %s258 = sand.u32 %s120, 1
        %s259 = smul.addr %s258, 4
        %s260 = scalar_lea.vmem [#allocation10], %s259
        %s261 = smul.u32 4, %s23
        %v263 = vld [vmem:[%s224] sm:$0xf]
        %v264 = vld [vmem:[%s224 + $0x4] sm:$0xf]
        %v265 = vld [vmem:[%s224 + $0x8] sm:$0xf]
        %v266 = vld [vmem:[%s224 + $0xc] sm:$0xf]
        %v267 = vld [vmem:[%s224 + $0x10] sm:$0xf]
        %v268 = vld [vmem:[%s224 + $0x14] sm:$0xf]
        %v269 = vld [vmem:[%s224 + $0x18] sm:$0xf]
        %v270 = vld [vmem:[%s224 + $0x1c] sm:$0xf]
        %v271 = vld [vmem:[#allocation8] sm:$0xff]
        %v272 = vld [vmem:[#allocation8 + $0x8] sm:$0xff]
        %v273 = vld [vmem:[#allocation8 + $0x10] sm:$0xff]
        %v274 = vld [vmem:[#allocation8 + $0x18] sm:$0xff]
        %v275 = vld [vmem:[#allocation8 + $0x20] sm:$0xff]
        %v276 = vld [vmem:[#allocation8 + $0x28] sm:$0xff]
        %v277 = vld [vmem:[#allocation8 + $0x30] sm:$0xff]
        %v278 = vld [vmem:[#allocation8 + $0x38] sm:$0xff]
        %v279 = vld [vmem:[#allocation8 + $0x40] sm:$0xff]
        %v280 = vld [vmem:[#allocation8 + $0x48] sm:$0xff]
        %v281 = vld [vmem:[#allocation8 + $0x50] sm:$0xff]
        %v282 = vld [vmem:[#allocation8 + $0x58] sm:$0xff]
        %v283 = vld [vmem:[#allocation8 + $0x60] sm:$0xff]
        %v284 = vld [vmem:[#allocation8 + $0x68] sm:$0xff]
        %v285 = vld [vmem:[#allocation8 + $0x70] sm:$0xff]
        %v286 = vld [vmem:[#allocation8 + $0x78] sm:$0xff]
        %v287 = vld [vmem:[#allocation8 + $0x80] sm:$0x1]
        %v288 = vld [vmem:[#allocation8 + $0x81] sm:$0x1]
        %v289 = vld [vmem:[#allocation8 + $0x82] sm:$0x1]
        %v290 = vld [vmem:[#allocation8 + $0x83] sm:$0x1]
        %v291 = vld [vmem:[#allocation8 + $0x84] sm:$0x1]
        %v292 = vld [vmem:[#allocation8 + $0x85] sm:$0x1]
        %v293 = vld [vmem:[#allocation8 + $0x86] sm:$0x1]
        %v294 = vld [vmem:[#allocation8 + $0x87] sm:$0x1]
        %v295 = vld [vmem:[#allocation8 + $0x88] sm:$0x1]
        %v296 = vld [vmem:[#allocation8 + $0x89] sm:$0x1]
        %v297 = vld [vmem:[#allocation8 + $0x8a] sm:$0x1]
        %v298 = vld [vmem:[#allocation8 + $0x8b] sm:$0x1]
        %v299 = vld [vmem:[#allocation8 + $0x8c] sm:$0x1]
        %v300 = vld [vmem:[#allocation8 + $0x8d] sm:$0x1]
        %v301 = vlaneseq
        %v302 = vshrl.u32 %v301, 7
        %v303 = vadd.s32 %v302, 8
        %v304 = vadd.s32 %v302, 16
        %v305 = vadd.s32 %v302, 24
        %v306 = vadd.s32 %v302, 32
        %v307 = vadd.s32 %v302, 40
        %v308 = vadd.s32 %v302, 48
        %v309 = vadd.s32 %v302, 56
        %vm310 = vcmp.eq.s32.totalorder %v302, 0
        %vm311 = vcmp.eq.s32.totalorder %v303, 0
        %vm312 = vcmp.eq.s32.totalorder %v304, 0
        %vm313 = vcmp.eq.s32.totalorder %v305, 0
        %vm314 = vcmp.eq.s32.totalorder %v306, 0
        %vm315 = vcmp.eq.s32.totalorder %v307, 0
        %vm316 = vcmp.eq.s32.totalorder %v308, 0
        %vm317 = vcmp.eq.s32.totalorder %v309, 0
        %vm318 = vcmp.eq.s32.totalorder %v302, 15
        %vm319 = vcmp.eq.s32.totalorder %v303, 15
        %vm320 = vcmp.eq.s32.totalorder %v304, 15
        %vm321 = vcmp.eq.s32.totalorder %v305, 15
        %vm322 = vcmp.eq.s32.totalorder %v306, 15
        %vm323 = vcmp.eq.s32.totalorder %v307, 15
        %vm324 = vcmp.eq.s32.totalorder %v308, 15
        %vm325 = vcmp.eq.s32.totalorder %v309, 15
        %vm326 = vcmp.eq.s32.totalorder %v302, 16
        %vm327 = vcmp.eq.s32.totalorder %v303, 16
        %vm328 = vcmp.eq.s32.totalorder %v304, 16
        %vm329 = vcmp.eq.s32.totalorder %v305, 16
        %vm330 = vcmp.eq.s32.totalorder %v306, 16
        %vm331 = vcmp.eq.s32.totalorder %v307, 16
        %vm332 = vcmp.eq.s32.totalorder %v308, 16
        %vm333 = vcmp.eq.s32.totalorder %v309, 16
        %vm334 = vmor %vm310, %vm326
        %vm335 = vmor %vm311, %vm327
        %vm336 = vmor %vm312, %vm328
        %vm337 = vmor %vm313, %vm329
        %vm338 = vmor %vm314, %vm330
        %vm339 = vmor %vm315, %vm331
        %vm340 = vmor %vm316, %vm332
        %vm341 = vmor %vm317, %vm333
        %vm342 = vcmp.eq.s32.totalorder %v302, 31
        %vm343 = vcmp.eq.s32.totalorder %v303, 31
        %vm344 = vcmp.eq.s32.totalorder %v304, 31
        %vm345 = vcmp.eq.s32.totalorder %v305, 31
        %vm346 = vcmp.eq.s32.totalorder %v306, 31
        %vm347 = vcmp.eq.s32.totalorder %v307, 31
        %vm348 = vcmp.eq.s32.totalorder %v308, 31
        %vm349 = vcmp.eq.s32.totalorder %v309, 31
        %vm350 = vmor %vm318, %vm342
        %vm351 = vmor %vm319, %vm343
        %vm352 = vmor %vm320, %vm344
        %vm353 = vmor %vm321, %vm345
        %vm354 = vmor %vm322, %vm346
        %vm355 = vmor %vm323, %vm347
        %vm356 = vmor %vm324, %vm348
        %vm357 = vmor %vm325, %vm349
        %vm358 = vcmp.eq.s32.totalorder %v302, 32
        %vm359 = vcmp.eq.s32.totalorder %v303, 32
        %vm360 = vcmp.eq.s32.totalorder %v304, 32
        %vm361 = vcmp.eq.s32.totalorder %v305, 32
        %vm362 = vcmp.eq.s32.totalorder %v306, 32
        %vm363 = vcmp.eq.s32.totalorder %v307, 32
        %vm364 = vcmp.eq.s32.totalorder %v308, 32
        %vm365 = vcmp.eq.s32.totalorder %v309, 32
        %vm366 = vmor %vm334, %vm358
        %vm367 = vmor %vm335, %vm359
        %vm368 = vmor %vm336, %vm360
        %vm369 = vmor %vm337, %vm361
        %vm370 = vmor %vm338, %vm362
        %vm371 = vmor %vm339, %vm363
        %vm372 = vmor %vm340, %vm364
        %vm373 = vmor %vm341, %vm365
        %vm374 = vcmp.eq.s32.totalorder %v302, 47
        %vm375 = vcmp.eq.s32.totalorder %v303, 47
        %vm376 = vcmp.eq.s32.totalorder %v304, 47
        %vm377 = vcmp.eq.s32.totalorder %v305, 47
        %vm378 = vcmp.eq.s32.totalorder %v306, 47
        %vm379 = vcmp.eq.s32.totalorder %v307, 47
        %vm380 = vcmp.eq.s32.totalorder %v308, 47
        %vm381 = vcmp.eq.s32.totalorder %v309, 47
        %vm382 = vmor %vm350, %vm374
        %vm383 = vmor %vm351, %vm375
        %vm384 = vmor %vm352, %vm376
        %vm385 = vmor %vm353, %vm377
        %vm386 = vmor %vm354, %vm378
        %vm387 = vmor %vm355, %vm379
        %vm388 = vmor %vm356, %vm380
        %vm389 = vmor %vm357, %vm381
        %vm390 = vcmp.eq.s32.totalorder %v302, 48
        %vm391 = vcmp.eq.s32.totalorder %v303, 48
        %vm392 = vcmp.eq.s32.totalorder %v304, 48
        %vm393 = vcmp.eq.s32.totalorder %v305, 48
        %vm394 = vcmp.eq.s32.totalorder %v306, 48
        %vm395 = vcmp.eq.s32.totalorder %v307, 48
        %vm396 = vcmp.eq.s32.totalorder %v308, 48
        %vm397 = vcmp.eq.s32.totalorder %v309, 48
        %vm398 = vmor %vm366, %vm390
        %vm399 = vmor %vm367, %vm391
        %vm400 = vmor %vm368, %vm392
        %vm401 = vmor %vm369, %vm393
        %vm402 = vmor %vm370, %vm394
        %vm403 = vmor %vm371, %vm395
        %vm404 = vmor %vm372, %vm396
        %vm405 = vmor %vm373, %vm397
        %vm406 = vcmp.eq.s32.totalorder %v302, 63
        %vm407 = vcmp.eq.s32.totalorder %v303, 63
        %vm408 = vcmp.eq.s32.totalorder %v304, 63
        %vm409 = vcmp.eq.s32.totalorder %v305, 63
        %vm410 = vcmp.eq.s32.totalorder %v306, 63
        %vm411 = vcmp.eq.s32.totalorder %v307, 63
        %vm412 = vcmp.eq.s32.totalorder %v308, 63
        %vm413 = vcmp.eq.s32.totalorder %v309, 63
        %vm414 = vmor %vm382, %vm406
        %vm415 = vmor %vm383, %vm407
        %vm416 = vmor %vm384, %vm408
        %vm417 = vmor %vm385, %vm409
        %vm418 = vmor %vm386, %vm410
        %vm419 = vmor %vm387, %vm411
        %vm420 = vmor %vm388, %vm412
        %vm421 = vmor %vm389, %vm413
        %v422 = vld [vmem:[#allocation5] sm:$0xf]
        %v423 = vld [vmem:[#allocation5 + $0x4] sm:$0xf]
        %v424 = vld [vmem:[#allocation5 + $0x8] sm:$0xf]
        %v425 = vld [vmem:[#allocation5 + $0xc] sm:$0xf]
        %v434 = vunpack.c.l.b16 %v263
        %v435 = vunpack.c.l.b16 %v264
        %v436 = vunpack.c.l.b16 %v265
        %v437 = vunpack.c.l.b16 %v266
        %v438 = vunpack.c.l.b16 %v267
        %v439 = vunpack.c.l.b16 %v268
        %v440 = vunpack.c.l.b16 %v269
        %v441 = vunpack.c.l.b16 %v270
        %v442 = vpack.c.b16 %v435, %v434
        %v443 = vpack.c.b16 %v437, %v436
        %v444 = vpack.c.b16 %v439, %v438
        %v445 = vpack.c.b16 %v441, %v440
        %v450 = vunpack.c.l.b16 %v422
        %v451 = vunpack.c.l.b16 %v423
        %v452 = vunpack.c.l.b16 %v424
        %v453 = vunpack.c.l.b16 %v425
        %v454 = vpack.c.b16 %v451, %v450
        %v455 = vpack.c.b16 %v453, %v452
        %vm458 = vcmask 261120
        %v460 = vsel %vm458, %v442, 0
        %v463 = vsel %vm458, %v443, 0
        %v466 = vsel %vm458, %v444, 0
        %v469 = vsel %vm458, %v445, 0
        %471 = vmatprep.subr.bf16.mxu0 0
        %472 = vmatpush1.bf16.msra.mxu0 0
        %473 = vmatprep.subr.bf16.mxu0 0
        %474 = vmatpush1.bf16.msra.mxu0 0
        %475 = vmatprep.subr.bf16.mxu0 0
        %476 = vmatpush1.bf16.msra.mxu0 0
        %477 = vmatprep.subr.bf16.mxu0 0
        %478 = vmatpush1.bf16.msra.mxu0 0
        %479 = vmatprep.subr.bf16.mxu0 0
        %480 = vmatpush1.bf16.msra.mxu0 0
        %481 = vmatprep.subr.bf16.mxu0 0
        %482 = vmatpush1.bf16.msra.mxu0 0
        %483 = vmatprep.subr.bf16.mxu0 0
        %484 = vmatpush1.bf16.msra.mxu0 %v455
        %485 = vmatprep.subr.bf16.mxu0 0
        %486 = vmatpush1.bf16.msra.mxu0 %v454
        %487 = vmatprep.subr.bf16.mxu0 0
        %488 = vmatpush2.bf16.msra.mxu0 0
        %489 = vmatprep.subr.bf16.mxu0 0
        %490 = vmatpush2.bf16.msra.mxu0 0
        %491 = vmatprep.subr.bf16.mxu0 0
        %492 = vmatpush2.bf16.msra.mxu0 0
        %493 = vmatprep.subr.bf16.mxu0 0
        %494 = vmatpush2.bf16.msra.mxu0 0
        %495 = vmatprep.subr.bf16.mxu0 0
        %496 = vmatpush2.bf16.msra.mxu0 0
        %497 = vmatprep.subr.bf16.mxu0 0
        %498 = vmatpush2.bf16.msra.mxu0 0
        %499 = vmatprep.subr.bf16.mxu0 0
        %500 = vmatpush2.bf16.msra.mxu0 0
        %501 = vmatprep.subr.bf16.mxu0 0
        %502 = vmatpush2.bf16.msra.mxu0 0
        %503 = vmatprep.mubr.bf16.mxu0 0
        %504 = vmatmul.mubr.bf16.gmra.mxu0 %v460
        %v505 = vpop.f32.mrf.mxu0
        %v506 = vadd.f32 0.0, %v505
        %v507 = vpop.f32.mrf.mxu0
        %v508 = vpop.f32.mrf.mxu0
        %v509 = vadd.f32 0.0, %v508
        %v510 = vpop.f32.mrf.mxu0
        %511 = vmatprep.mubr.bf16.mxu0 0
        %512 = vmatmul.mubr.bf16.gmra.mxu0 %v463
        %v513 = vpop.f32.mrf.mxu0
        %v514 = vadd.f32 0.0, %v513
        %v515 = vpop.f32.mrf.mxu0
        %v516 = vpop.f32.mrf.mxu0
        %v517 = vadd.f32 0.0, %v516
        %v518 = vpop.f32.mrf.mxu0
        %519 = vmatprep.mubr.bf16.mxu0 0
        %520 = vmatmul.mubr.bf16.gmra.mxu0 %v466
        %v521 = vpop.f32.mrf.mxu0
        %v522 = vadd.f32 0.0, %v521
        %v523 = vpop.f32.mrf.mxu0
        %v524 = vpop.f32.mrf.mxu0
        %v525 = vadd.f32 0.0, %v524
        %v526 = vpop.f32.mrf.mxu0
        %527 = vmatprep.mubr.bf16.mxu0 0
        %528 = vmatmul.mubr.bf16.gmra.mxu0 %v469
        %v529 = vpop.f32.mrf.mxu0
        %v530 = vadd.f32 0.0, %v529
        %v531 = vpop.f32.mrf.mxu0
        %v532 = vpop.f32.mrf.mxu0
        %v533 = vadd.f32 0.0, %v532
        %v534 = vpop.f32.mrf.mxu0
        %535 = vdwg.mxu0
        %v536 = vlaneseq
        %v537 = vshrl.u32 %v536, 7
        %v538 = vsub.s32 0, %v537
        %v539 = vrot.slane %v288, %v538
        %541 = vrot.lane.b32.xlu0 %v539, 32
        %v542 = vpop.permute.xlu0 %541
        %v544 = vadd.f32 %v506, %v542
        %v545 = vadd.f32 %v509, %v542
        %v546 = vadd.f32 %v514, %v542
        %v547 = vadd.f32 %v517, %v542
        %v548 = vadd.f32 %v522, %v542
        %v549 = vadd.f32 %v525, %v542
        %v550 = vadd.f32 %v530, %v542
        %v551 = vadd.f32 %v533, %v542
        %v552 = vrot.slane %v506, 7
        %v553 = vrot.slane %v509, 7
        %v554 = vrot.slane %v514, 7
        %v555 = vrot.slane %v517, 7
        %v556 = vrot.slane %v522, 7
        %v557 = vrot.slane %v525, 7
        %v558 = vrot.slane %v530, 7
        %v559 = vrot.slane %v533, 7
        %vm560 = vcmp.lt.s32.totalorder %v302, 1
        %v561 = vsel %vm560, %v558, %v559
        %v562 = vsel %vm560, %v557, %v558
        %v563 = vsel %vm560, %v556, %v557
        %v564 = vsel %vm560, %v555, %v556
        %v565 = vsel %vm560, %v554, %v555
        %v566 = vsel %vm560, %v553, %v554
        %v567 = vsel %vm560, %v552, %v553
        %v568 = vsel %vm560, %v559, %v552
        %v569 = vsel %vm398, 1, 0
        %v570 = vsel %vm399, 1, 0
        %v571 = vsel %vm400, 1, 0
        %v572 = vsel %vm401, 1, 0
        %v573 = vsel %vm402, 1, 0
        %v574 = vsel %vm403, 1, 0
        %v575 = vsel %vm404, 1, 0
        %v576 = vsel %vm405, 1, 0
        %vm577 = vcmp.eq.s32.totalorder %v569, 1
        %vm578 = vcmp.eq.s32.totalorder %v570, 1
        %vm579 = vcmp.eq.s32.totalorder %v571, 1
        %vm580 = vcmp.eq.s32.totalorder %v572, 1
        %vm581 = vcmp.eq.s32.totalorder %v573, 1
        %vm582 = vcmp.eq.s32.totalorder %v574, 1
        %vm583 = vcmp.eq.s32.totalorder %v575, 1
        %vm584 = vcmp.eq.s32.totalorder %v576, 1
        %v585 = vsel %vm577, 0.0, %v568
        %v586 = vsel %vm578, 0.0, %v567
        %v587 = vsel %vm579, 0.0, %v566
        %v588 = vsel %vm580, 0.0, %v565
        %v589 = vsel %vm581, 0.0, %v564
        %v590 = vsel %vm582, 0.0, %v563
        %v591 = vsel %vm583, 0.0, %v562
        %v592 = vsel %vm584, 0.0, %v561
        %601 = vrot.lane.b32.xlu0 %v585, 32
        %v602 = vpop.permute.xlu0 %601
        %603 = vrot.lane.b32.xlu0 %v586, 32
        %v604 = vpop.permute.xlu0 %603
        %605 = vrot.lane.b32.xlu0 %v587, 32
        %v606 = vpop.permute.xlu0 %605
        %607 = vrot.lane.b32.xlu0 %v588, 32
        %v608 = vpop.permute.xlu0 %607
        %609 = vrot.lane.b32.xlu0 %v589, 32
        %v610 = vpop.permute.xlu0 %609
        %611 = vrot.lane.b32.xlu0 %v590, 32
        %v612 = vpop.permute.xlu0 %611
        %613 = vrot.lane.b32.xlu0 %v591, 32
        %v614 = vpop.permute.xlu0 %613
        %615 = vrot.lane.b32.xlu0 %v592, 32
        %v616 = vpop.permute.xlu0 %615
        %v625 = vadd.f32 %v544, %v602
        %v626 = vadd.f32 %v545, %v604
        %v627 = vadd.f32 %v546, %v606
        %v628 = vadd.f32 %v547, %v608
        %v629 = vadd.f32 %v548, %v610
        %v630 = vadd.f32 %v549, %v612
        %v631 = vadd.f32 %v550, %v614
        %v632 = vadd.f32 %v551, %v616
        %641 = vrot.lane.b32.xlu0 %v506, 64
        %v642 = vpop.permute.xlu0 %641
        %643 = vrot.lane.b32.xlu0 %v509, 64
        %v644 = vpop.permute.xlu0 %643
        %645 = vrot.lane.b32.xlu0 %v514, 64
        %v646 = vpop.permute.xlu0 %645
        %647 = vrot.lane.b32.xlu0 %v517, 64
        %v648 = vpop.permute.xlu0 %647
        %649 = vrot.lane.b32.xlu0 %v522, 64
        %v650 = vpop.permute.xlu0 %649
        %651 = vrot.lane.b32.xlu0 %v525, 64
        %v652 = vpop.permute.xlu0 %651
        %653 = vrot.lane.b32.xlu0 %v530, 64
        %v654 = vpop.permute.xlu0 %653
        %655 = vrot.lane.b32.xlu0 %v533, 64
        %v656 = vpop.permute.xlu0 %655
        %v665 = vrot.slane %v642, 1
        %v666 = vrot.slane %v644, 1
        %v667 = vrot.slane %v646, 1
        %v668 = vrot.slane %v648, 1
        %v669 = vrot.slane %v650, 1
        %v670 = vrot.slane %v652, 1
        %v671 = vrot.slane %v654, 1
        %v672 = vrot.slane %v656, 1
        %vm673 = vcmp.lt.s32.totalorder %v302, 7
        %v674 = vsel %vm673, %v671, %v672
        %v675 = vsel %vm673, %v670, %v671
        %v676 = vsel %vm673, %v669, %v670
        %v677 = vsel %vm673, %v668, %v669
        %v678 = vsel %vm673, %v667, %v668
        %v679 = vsel %vm673, %v666, %v667
        %v680 = vsel %vm673, %v665, %v666
        %v681 = vsel %vm673, %v672, %v665
        %v682 = vsel %vm414, 1, 0
        %v683 = vsel %vm415, 1, 0
        %v684 = vsel %vm416, 1, 0
        %v685 = vsel %vm417, 1, 0
        %v686 = vsel %vm418, 1, 0
        %v687 = vsel %vm419, 1, 0
        %v688 = vsel %vm420, 1, 0
        %v689 = vsel %vm421, 1, 0
        %vm690 = vcmp.eq.s32.totalorder %v682, 1
        %vm691 = vcmp.eq.s32.totalorder %v683, 1
        %vm692 = vcmp.eq.s32.totalorder %v684, 1
        %vm693 = vcmp.eq.s32.totalorder %v685, 1
        %vm694 = vcmp.eq.s32.totalorder %v686, 1
        %vm695 = vcmp.eq.s32.totalorder %v687, 1
        %vm696 = vcmp.eq.s32.totalorder %v688, 1
        %vm697 = vcmp.eq.s32.totalorder %v689, 1
        %v698 = vsel %vm690, 0.0, %v680
        %v699 = vsel %vm691, 0.0, %v679
        %v700 = vsel %vm692, 0.0, %v678
        %v701 = vsel %vm693, 0.0, %v677
        %v702 = vsel %vm694, 0.0, %v676
        %v703 = vsel %vm695, 0.0, %v675
        %v704 = vsel %vm696, 0.0, %v674
        %v705 = vsel %vm697, 0.0, %v681
        %714 = vrot.lane.b32.xlu0 %v698, 32
        %v715 = vpop.permute.xlu0 %714
        %716 = vrot.lane.b32.xlu0 %v699, 32
        %v717 = vpop.permute.xlu0 %716
        %718 = vrot.lane.b32.xlu0 %v700, 32
        %v719 = vpop.permute.xlu0 %718
        %720 = vrot.lane.b32.xlu0 %v701, 32
        %v721 = vpop.permute.xlu0 %720
        %722 = vrot.lane.b32.xlu0 %v702, 32
        %v723 = vpop.permute.xlu0 %722
        %724 = vrot.lane.b32.xlu0 %v703, 32
        %v725 = vpop.permute.xlu0 %724
        %726 = vrot.lane.b32.xlu0 %v704, 32
        %v727 = vpop.permute.xlu0 %726
        %728 = vrot.lane.b32.xlu0 %v705, 32
        %v729 = vpop.permute.xlu0 %728
        %v738 = vadd.f32 %v625, %v715
        %v739 = vadd.f32 %v626, %v717
        %v740 = vadd.f32 %v627, %v719
        %v741 = vadd.f32 %v628, %v721
        %v742 = vadd.f32 %v629, %v723
        %v743 = vadd.f32 %v630, %v725
        %v744 = vadd.f32 %v631, %v727
        %v745 = vadd.f32 %v632, %v729
        %v746 = vmax.f32 %v738, 0.0
        %v747 = vmax.f32 %v739, 0.0
        %v748 = vmax.f32 %v740, 0.0
        %v749 = vmax.f32 %v741, 0.0
        %v750 = vmax.f32 %v742, 0.0
        %v751 = vmax.f32 %v743, 0.0
        %v752 = vmax.f32 %v744, 0.0
        %v753 = vmax.f32 %v745, 0.0
        %762 = vrot.lane.b32.xlu0 %v746, 96
        %v763 = vpop.permute.xlu0 %762
        %764 = vrot.lane.b32.xlu0 %v747, 96
        %v765 = vpop.permute.xlu0 %764
        %766 = vrot.lane.b32.xlu0 %v748, 96
        %v767 = vpop.permute.xlu0 %766
        %768 = vrot.lane.b32.xlu0 %v749, 96
        %v769 = vpop.permute.xlu0 %768
        %770 = vrot.lane.b32.xlu0 %v750, 96
        %v771 = vpop.permute.xlu0 %770
        %772 = vrot.lane.b32.xlu0 %v751, 96
        %v773 = vpop.permute.xlu0 %772
        %774 = vrot.lane.b32.xlu0 %v752, 96
        %v775 = vpop.permute.xlu0 %774
        %776 = vrot.lane.b32.xlu0 %v753, 96
        %v777 = vpop.permute.xlu0 %776
        %v786 = vsel %vm458, %v763, 0.0
        %787 = vadd.xlane.f32.xlu0 %v786
        %v788 = vpop.xlane.xlu0 %787
        %v789 = vsel %vm458, %v765, 0.0
        %790 = vadd.xlane.f32.xlu0 %v789
        %v791 = vpop.xlane.xlu0 %790
        %v792 = vsel %vm458, %v767, 0.0
        %793 = vadd.xlane.f32.xlu0 %v792
        %v794 = vpop.xlane.xlu0 %793
        %v795 = vsel %vm458, %v769, 0.0
        %796 = vadd.xlane.f32.xlu0 %v795
        %v797 = vpop.xlane.xlu0 %796
        %v798 = vsel %vm458, %v771, 0.0
        %799 = vadd.xlane.f32.xlu0 %v798
        %v800 = vpop.xlane.xlu0 %799
        %v801 = vsel %vm458, %v773, 0.0
        %802 = vadd.xlane.f32.xlu0 %v801
        %v803 = vpop.xlane.xlu0 %802
        %v804 = vsel %vm458, %v775, 0.0
        %805 = vadd.xlane.f32.xlu0 %v804
        %v806 = vpop.xlane.xlu0 %805
        %v807 = vsel %vm458, %v777, 0.0
        %808 = vadd.xlane.f32.xlu0 %v807
        %v809 = vpop.xlane.xlu0 %808
        %v810 = vrcp.pop 32.0
        %v811 = vmul.f32 %v788, %v810
        %v812 = vmul.f32 %v791, %v810
        %v813 = vmul.f32 %v794, %v810
        %v814 = vmul.f32 %v797, %v810
        %v815 = vmul.f32 %v800, %v810
        %v816 = vmul.f32 %v803, %v810
        %v817 = vmul.f32 %v806, %v810
        %v818 = vmul.f32 %v809, %v810
        %v819 = vsub.f32 %v746, %v811
        %v820 = vsub.f32 %v747, %v812
        %v821 = vsub.f32 %v748, %v813
        %v822 = vsub.f32 %v749, %v814
        %v823 = vsub.f32 %v750, %v815
        %v824 = vsub.f32 %v751, %v816
        %v825 = vsub.f32 %v752, %v817
        %v826 = vsub.f32 %v753, %v818
        %v827 = vmul.f32 %v819, %v819
        %v828 = vmul.f32 %v820, %v820
        %v829 = vmul.f32 %v821, %v821
        %v830 = vmul.f32 %v822, %v822
        %v831 = vmul.f32 %v823, %v823
        %v832 = vmul.f32 %v824, %v824
        %v833 = vmul.f32 %v825, %v825
        %v834 = vmul.f32 %v826, %v826
        %843 = vrot.lane.b32.xlu0 %v827, 96
        %v844 = vpop.permute.xlu0 %843
        %845 = vrot.lane.b32.xlu0 %v828, 96
        %v846 = vpop.permute.xlu0 %845
        %847 = vrot.lane.b32.xlu0 %v829, 96
        %v848 = vpop.permute.xlu0 %847
        %849 = vrot.lane.b32.xlu0 %v830, 96
        %v850 = vpop.permute.xlu0 %849
        %851 = vrot.lane.b32.xlu0 %v831, 96
        %v852 = vpop.permute.xlu0 %851
        %853 = vrot.lane.b32.xlu0 %v832, 96
        %v854 = vpop.permute.xlu0 %853
        %855 = vrot.lane.b32.xlu0 %v833, 96
        %v856 = vpop.permute.xlu0 %855
        %857 = vrot.lane.b32.xlu0 %v834, 96
        %v858 = vpop.permute.xlu0 %857
        %v867 = vsel %vm458, %v844, 0.0
        %868 = vadd.xlane.f32.xlu0 %v867
        %v869 = vpop.xlane.xlu0 %868
        %v870 = vsel %vm458, %v846, 0.0
        %871 = vadd.xlane.f32.xlu0 %v870
        %v872 = vpop.xlane.xlu0 %871
        %v873 = vsel %vm458, %v848, 0.0
        %874 = vadd.xlane.f32.xlu0 %v873
        %v875 = vpop.xlane.xlu0 %874
        %v876 = vsel %vm458, %v850, 0.0
        %877 = vadd.xlane.f32.xlu0 %v876
        %v878 = vpop.xlane.xlu0 %877
        %v879 = vsel %vm458, %v852, 0.0
        %880 = vadd.xlane.f32.xlu0 %v879
        %v881 = vpop.xlane.xlu0 %880
        %v882 = vsel %vm458, %v854, 0.0
        %883 = vadd.xlane.f32.xlu0 %v882
        %v884 = vpop.xlane.xlu0 %883
        %v885 = vsel %vm458, %v856, 0.0
        %886 = vadd.xlane.f32.xlu0 %v885
        %v887 = vpop.xlane.xlu0 %886
        %v888 = vsel %vm458, %v858, 0.0
        %889 = vadd.xlane.f32.xlu0 %v888
        %v890 = vpop.xlane.xlu0 %889
        %v891 = vmul.f32 %v869, %v810
        %v892 = vmul.f32 %v872, %v810
        %v893 = vmul.f32 %v875, %v810
        %v894 = vmul.f32 %v878, %v810
        %v895 = vmul.f32 %v881, %v810
        %v896 = vmul.f32 %v884, %v810
        %v897 = vmul.f32 %v887, %v810
        %v898 = vmul.f32 %v890, %v810
        %v899 = vadd.f32 %v891, 1e-05
        %v900 = vadd.f32 %v892, 1e-05
        %v901 = vadd.f32 %v893, 1e-05
        %v902 = vadd.f32 %v894, 1e-05
        %v903 = vadd.f32 %v895, 1e-05
        %v904 = vadd.f32 %v896, 1e-05
        %v905 = vadd.f32 %v897, 1e-05
        %v906 = vadd.f32 %v898, 1e-05
        %v907 = vrsqrt.pop %v899
        %v908 = vrsqrt.pop %v900
        %v909 = vrsqrt.pop %v901
        %v910 = vrsqrt.pop %v902
        %v911 = vrsqrt.pop %v903
        %v912 = vrsqrt.pop %v904
        %v913 = vrsqrt.pop %v905
        %v914 = vrsqrt.pop %v906
        %v915 = vmul.f32 %v819, %v907
        %v916 = vmul.f32 %v820, %v908
        %v917 = vmul.f32 %v821, %v909
        %v918 = vmul.f32 %v822, %v910
        %v919 = vmul.f32 %v823, %v911
        %v920 = vmul.f32 %v824, %v912
        %v921 = vmul.f32 %v825, %v913
        %v922 = vmul.f32 %v826, %v914
        %v923 = vlaneseq
        %v924 = vshrl.u32 %v923, 7
        %v925 = vsub.s32 0, %v924
        %v926 = vrot.slane %v289, %v925
        %928 = vrot.lane.b32.xlu0 %v926, 32
        %v929 = vpop.permute.xlu0 %928
        %v931 = vmul.f32 %v915, %v929
        %v932 = vmul.f32 %v916, %v929
        %v933 = vmul.f32 %v917, %v929
        %v934 = vmul.f32 %v918, %v929
        %v935 = vmul.f32 %v919, %v929
        %v936 = vmul.f32 %v920, %v929
        %v937 = vmul.f32 %v921, %v929
        %v938 = vmul.f32 %v922, %v929
        %v939 = vlaneseq
        %v940 = vshrl.u32 %v939, 7
        %v941 = vsub.s32 0, %v940
        %v942 = vrot.slane %v290, %v941
        %944 = vrot.lane.b32.xlu0 %v942, 32
        %v945 = vpop.permute.xlu0 %944
        %v947 = vadd.f32 %v931, %v945
        %v948 = vadd.f32 %v932, %v945
        %v949 = vadd.f32 %v933, %v945
        %v950 = vadd.f32 %v934, %v945
        %v951 = vadd.f32 %v935, %v945
        %v952 = vadd.f32 %v936, %v945
        %v953 = vadd.f32 %v937, %v945
        %v954 = vadd.f32 %v938, %v945
        %s955 = scalar_lea.vmem [#allocation5], 16
        %v956 = vld [vmem:[%s955] sm:$0xf]
        %v957 = vld [vmem:[%s955 + $0x4] sm:$0xf]
        %v958 = vld [vmem:[%s955 + $0x8] sm:$0xf]
        %v959 = vld [vmem:[%s955 + $0xc] sm:$0xf]
        %v960 = vpack.c.bf16 %v948, %v947
        %v961 = vpack.c.bf16 %v950, %v949
        %v962 = vpack.c.bf16 %v952, %v951
        %v963 = vpack.c.bf16 %v954, %v953
        %968 = vrot.lane.b32.xlu0 %v960, 96
        %v969 = vpop.permute.xlu0 %968
        %970 = vrot.lane.b32.xlu0 %v961, 96
        %v971 = vpop.permute.xlu0 %970
        %972 = vrot.lane.b32.xlu0 %v962, 96
        %v973 = vpop.permute.xlu0 %972
        %974 = vrot.lane.b32.xlu0 %v963, 96
        %v975 = vpop.permute.xlu0 %974
        %v980 = vunpack.c.l.b16 %v956
        %v981 = vunpack.c.l.b16 %v957
        %v982 = vunpack.c.l.b16 %v958
        %v983 = vunpack.c.l.b16 %v959
        %v984 = vpack.c.b16 %v981, %v980
        %v985 = vpack.c.b16 %v983, %v982
        %v989 = vsel %vm458, %v969, 0
        %v992 = vsel %vm458, %v971, 0
        %v995 = vsel %vm458, %v973, 0
        %v998 = vsel %vm458, %v975, 0
        %1000 = vmatprep.subr.bf16.mxu0 0
        %1001 = vmatpush1.bf16.msra.mxu0 0
        %1002 = vmatprep.subr.bf16.mxu0 0
        %1003 = vmatpush1.bf16.msra.mxu0 0
        %1004 = vmatprep.subr.bf16.mxu0 0
        %1005 = vmatpush1.bf16.msra.mxu0 0
        %1006 = vmatprep.subr.bf16.mxu0 0
        %1007 = vmatpush1.bf16.msra.mxu0 0
        %1008 = vmatprep.subr.bf16.mxu0 0
        %1009 = vmatpush1.bf16.msra.mxu0 0
        %1010 = vmatprep.subr.bf16.mxu0 0
        %1011 = vmatpush1.bf16.msra.mxu0 0
        %1012 = vmatprep.subr.bf16.mxu0 0
        %1013 = vmatpush1.bf16.msra.mxu0 %v985
        %1014 = vmatprep.subr.bf16.mxu0 0
        %1015 = vmatpush1.bf16.msra.mxu0 %v984
        %1016 = vmatprep.subr.bf16.mxu0 0
        %1017 = vmatpush2.bf16.msra.mxu0 0
        %1018 = vmatprep.subr.bf16.mxu0 0
        %1019 = vmatpush2.bf16.msra.mxu0 0
        %1020 = vmatprep.subr.bf16.mxu0 0
        %1021 = vmatpush2.bf16.msra.mxu0 0
        %1022 = vmatprep.subr.bf16.mxu0 0
        %1023 = vmatpush2.bf16.msra.mxu0 0
        %1024 = vmatprep.subr.bf16.mxu0 0
        %1025 = vmatpush2.bf16.msra.mxu0 0
        %1026 = vmatprep.subr.bf16.mxu0 0
        %1027 = vmatpush2.bf16.msra.mxu0 0
        %1028 = vmatprep.subr.bf16.mxu0 0
        %1029 = vmatpush2.bf16.msra.mxu0 0
        %1030 = vmatprep.subr.bf16.mxu0 0
        %1031 = vmatpush2.bf16.msra.mxu0 0
        %1032 = vmatprep.mubr.bf16.mxu0 0
        %1033 = vmatmul.mubr.bf16.gmra.mxu0 %v989
        %v1034 = vpop.f32.mrf.mxu0
        %v1035 = vadd.f32 0.0, %v1034
        %v1036 = vpop.f32.mrf.mxu0
        %v1037 = vpop.f32.mrf.mxu0
        %v1038 = vadd.f32 0.0, %v1037
        %v1039 = vpop.f32.mrf.mxu0
        %1040 = vmatprep.mubr.bf16.mxu0 0
        %1041 = vmatmul.mubr.bf16.gmra.mxu0 %v992
        %v1042 = vpop.f32.mrf.mxu0
        %v1043 = vadd.f32 0.0, %v1042
        %v1044 = vpop.f32.mrf.mxu0
        %v1045 = vpop.f32.mrf.mxu0
        %v1046 = vadd.f32 0.0, %v1045
        %v1047 = vpop.f32.mrf.mxu0
        %1048 = vmatprep.mubr.bf16.mxu0 0
        %1049 = vmatmul.mubr.bf16.gmra.mxu0 %v995
        %v1050 = vpop.f32.mrf.mxu0
        %v1051 = vadd.f32 0.0, %v1050
        %v1052 = vpop.f32.mrf.mxu0
        %v1053 = vpop.f32.mrf.mxu0
        %v1054 = vadd.f32 0.0, %v1053
        %v1055 = vpop.f32.mrf.mxu0
        %1056 = vmatprep.mubr.bf16.mxu0 0
        %1057 = vmatmul.mubr.bf16.gmra.mxu0 %v998
        %v1058 = vpop.f32.mrf.mxu0
        %v1059 = vadd.f32 0.0, %v1058
        %v1060 = vpop.f32.mrf.mxu0
        %v1061 = vpop.f32.mrf.mxu0
        %v1062 = vadd.f32 0.0, %v1061
        %v1063 = vpop.f32.mrf.mxu0
        %1064 = vdwg.mxu0
        %v1065 = vlaneseq
        %v1066 = vshrl.u32 %v1065, 7
        %v1067 = vsub.s32 0, %v1066
        %v1068 = vrot.slane %v291, %v1067
        %1070 = vrot.lane.b32.xlu0 %v1068, 32
        %v1071 = vpop.permute.xlu0 %1070
        %v1073 = vadd.f32 %v1035, %v1071
        %v1074 = vadd.f32 %v1038, %v1071
        %v1075 = vadd.f32 %v1043, %v1071
        %v1076 = vadd.f32 %v1046, %v1071
        %v1077 = vadd.f32 %v1051, %v1071
        %v1078 = vadd.f32 %v1054, %v1071
        %v1079 = vadd.f32 %v1059, %v1071
        %v1080 = vadd.f32 %v1062, %v1071
        %v1081 = vrot.slane %v1035, 7
        %v1082 = vrot.slane %v1038, 7
        %v1083 = vrot.slane %v1043, 7
        %v1084 = vrot.slane %v1046, 7
        %v1085 = vrot.slane %v1051, 7
        %v1086 = vrot.slane %v1054, 7
        %v1087 = vrot.slane %v1059, 7
        %v1088 = vrot.slane %v1062, 7
        %v1089 = vsel %vm560, %v1087, %v1088
        %v1090 = vsel %vm560, %v1086, %v1087
        %v1091 = vsel %vm560, %v1085, %v1086
        %v1092 = vsel %vm560, %v1084, %v1085
        %v1093 = vsel %vm560, %v1083, %v1084
        %v1094 = vsel %vm560, %v1082, %v1083
        %v1095 = vsel %vm560, %v1081, %v1082
        %v1096 = vsel %vm560, %v1088, %v1081
        %v1097 = vsel %vm577, 0.0, %v1096
        %v1098 = vsel %vm578, 0.0, %v1095
        %v1099 = vsel %vm579, 0.0, %v1094
        %v1100 = vsel %vm580, 0.0, %v1093
        %v1101 = vsel %vm581, 0.0, %v1092
        %v1102 = vsel %vm582, 0.0, %v1091
        %v1103 = vsel %vm583, 0.0, %v1090
        %v1104 = vsel %vm584, 0.0, %v1089
        %1113 = vrot.lane.b32.xlu0 %v1097, 32
        %v1114 = vpop.permute.xlu0 %1113
        %1115 = vrot.lane.b32.xlu0 %v1098, 32
        %v1116 = vpop.permute.xlu0 %1115
        %1117 = vrot.lane.b32.xlu0 %v1099, 32
        %v1118 = vpop.permute.xlu0 %1117
        %1119 = vrot.lane.b32.xlu0 %v1100, 32
        %v1120 = vpop.permute.xlu0 %1119
        %1121 = vrot.lane.b32.xlu0 %v1101, 32
        %v1122 = vpop.permute.xlu0 %1121
        %1123 = vrot.lane.b32.xlu0 %v1102, 32
        %v1124 = vpop.permute.xlu0 %1123
        %1125 = vrot.lane.b32.xlu0 %v1103, 32
        %v1126 = vpop.permute.xlu0 %1125
        %1127 = vrot.lane.b32.xlu0 %v1104, 32
        %v1128 = vpop.permute.xlu0 %1127
        %v1137 = vadd.f32 %v1073, %v1114
        %v1138 = vadd.f32 %v1074, %v1116
        %v1139 = vadd.f32 %v1075, %v1118
        %v1140 = vadd.f32 %v1076, %v1120
        %v1141 = vadd.f32 %v1077, %v1122
        %v1142 = vadd.f32 %v1078, %v1124
        %v1143 = vadd.f32 %v1079, %v1126
        %v1144 = vadd.f32 %v1080, %v1128
        %1153 = vrot.lane.b32.xlu0 %v1035, 64
        %v1154 = vpop.permute.xlu0 %1153
        %1155 = vrot.lane.b32.xlu0 %v1038, 64
        %v1156 = vpop.permute.xlu0 %1155
        %1157 = vrot.lane.b32.xlu0 %v1043, 64
        %v1158 = vpop.permute.xlu0 %1157
        %1159 = vrot.lane.b32.xlu0 %v1046, 64
        %v1160 = vpop.permute.xlu0 %1159
        %1161 = vrot.lane.b32.xlu0 %v1051, 64
        %v1162 = vpop.permute.xlu0 %1161
        %1163 = vrot.lane.b32.xlu0 %v1054, 64
        %v1164 = vpop.permute.xlu0 %1163
        %1165 = vrot.lane.b32.xlu0 %v1059, 64
        %v1166 = vpop.permute.xlu0 %1165
        %1167 = vrot.lane.b32.xlu0 %v1062, 64
        %v1168 = vpop.permute.xlu0 %1167
        %v1177 = vrot.slane %v1154, 1
        %v1178 = vrot.slane %v1156, 1
        %v1179 = vrot.slane %v1158, 1
        %v1180 = vrot.slane %v1160, 1
        %v1181 = vrot.slane %v1162, 1
        %v1182 = vrot.slane %v1164, 1
        %v1183 = vrot.slane %v1166, 1
        %v1184 = vrot.slane %v1168, 1
        %v1185 = vsel %vm673, %v1183, %v1184
        %v1186 = vsel %vm673, %v1182, %v1183
        %v1187 = vsel %vm673, %v1181, %v1182
        %v1188 = vsel %vm673, %v1180, %v1181
        %v1189 = vsel %vm673, %v1179, %v1180
        %v1190 = vsel %vm673, %v1178, %v1179
        %v1191 = vsel %vm673, %v1177, %v1178
        %v1192 = vsel %vm673, %v1184, %v1177
        %v1193 = vsel %vm690, 0.0, %v1191
        %v1194 = vsel %vm691, 0.0, %v1190
        %v1195 = vsel %vm692, 0.0, %v1189
        %v1196 = vsel %vm693, 0.0, %v1188
        %v1197 = vsel %vm694, 0.0, %v1187
        %v1198 = vsel %vm695, 0.0, %v1186
        %v1199 = vsel %vm696, 0.0, %v1185
        %v1200 = vsel %vm697, 0.0, %v1192
        %1209 = vrot.lane.b32.xlu0 %v1193, 32
        %v1210 = vpop.permute.xlu0 %1209
        %1211 = vrot.lane.b32.xlu0 %v1194, 32
        %v1212 = vpop.permute.xlu0 %1211
        %1213 = vrot.lane.b32.xlu0 %v1195, 32
        %v1214 = vpop.permute.xlu0 %1213
        %1215 = vrot.lane.b32.xlu0 %v1196, 32
        %v1216 = vpop.permute.xlu0 %1215
        %1217 = vrot.lane.b32.xlu0 %v1197, 32
        %v1218 = vpop.permute.xlu0 %1217
        %1219 = vrot.lane.b32.xlu0 %v1198, 32
        %v1220 = vpop.permute.xlu0 %1219
        %1221 = vrot.lane.b32.xlu0 %v1199, 32
        %v1222 = vpop.permute.xlu0 %1221
        %1223 = vrot.lane.b32.xlu0 %v1200, 32
        %v1224 = vpop.permute.xlu0 %1223
        %v1233 = vadd.f32 %v1137, %v1210
        %v1234 = vadd.f32 %v1138, %v1212
        %v1235 = vadd.f32 %v1139, %v1214
        %v1236 = vadd.f32 %v1140, %v1216
        %v1237 = vadd.f32 %v1141, %v1218
        %v1238 = vadd.f32 %v1142, %v1220
        %v1239 = vadd.f32 %v1143, %v1222
        %v1240 = vadd.f32 %v1144, %v1224
        %v1241 = vmax.f32 %v1233, 0.0
        %v1242 = vmax.f32 %v1234, 0.0
        %v1243 = vmax.f32 %v1235, 0.0
        %v1244 = vmax.f32 %v1236, 0.0
        %v1245 = vmax.f32 %v1237, 0.0
        %v1246 = vmax.f32 %v1238, 0.0
        %v1247 = vmax.f32 %v1239, 0.0
        %v1248 = vmax.f32 %v1240, 0.0
        %1257 = vrot.lane.b32.xlu0 %v1241, 96
        %v1258 = vpop.permute.xlu0 %1257
        %1259 = vrot.lane.b32.xlu0 %v1242, 96
        %v1260 = vpop.permute.xlu0 %1259
        %1261 = vrot.lane.b32.xlu0 %v1243, 96
        %v1262 = vpop.permute.xlu0 %1261
        %1263 = vrot.lane.b32.xlu0 %v1244, 96
        %v1264 = vpop.permute.xlu0 %1263
        %1265 = vrot.lane.b32.xlu0 %v1245, 96
        %v1266 = vpop.permute.xlu0 %1265
        %1267 = vrot.lane.b32.xlu0 %v1246, 96
        %v1268 = vpop.permute.xlu0 %1267
        %1269 = vrot.lane.b32.xlu0 %v1247, 96
        %v1270 = vpop.permute.xlu0 %1269
        %1271 = vrot.lane.b32.xlu0 %v1248, 96
        %v1272 = vpop.permute.xlu0 %1271
        %v1281 = vsel %vm458, %v1258, 0.0
        %1282 = vadd.xlane.f32.xlu0 %v1281
        %v1283 = vpop.xlane.xlu0 %1282
        %v1284 = vsel %vm458, %v1260, 0.0
        %1285 = vadd.xlane.f32.xlu0 %v1284
        %v1286 = vpop.xlane.xlu0 %1285
        %v1287 = vsel %vm458, %v1262, 0.0
        %1288 = vadd.xlane.f32.xlu0 %v1287
        %v1289 = vpop.xlane.xlu0 %1288
        %v1290 = vsel %vm458, %v1264, 0.0
        %1291 = vadd.xlane.f32.xlu0 %v1290
        %v1292 = vpop.xlane.xlu0 %1291
        %v1293 = vsel %vm458, %v1266, 0.0
        %1294 = vadd.xlane.f32.xlu0 %v1293
        %v1295 = vpop.xlane.xlu0 %1294
        %v1296 = vsel %vm458, %v1268, 0.0
        %1297 = vadd.xlane.f32.xlu0 %v1296
        %v1298 = vpop.xlane.xlu0 %1297
        %v1299 = vsel %vm458, %v1270, 0.0
        %1300 = vadd.xlane.f32.xlu0 %v1299
        %v1301 = vpop.xlane.xlu0 %1300
        %v1302 = vsel %vm458, %v1272, 0.0
        %1303 = vadd.xlane.f32.xlu0 %v1302
        %v1304 = vpop.xlane.xlu0 %1303
        %v1305 = vmul.f32 %v1283, %v810
        %v1306 = vmul.f32 %v1286, %v810
        %v1307 = vmul.f32 %v1289, %v810
        %v1308 = vmul.f32 %v1292, %v810
        %v1309 = vmul.f32 %v1295, %v810
        %v1310 = vmul.f32 %v1298, %v810
        %v1311 = vmul.f32 %v1301, %v810
        %v1312 = vmul.f32 %v1304, %v810
        %v1313 = vsub.f32 %v1241, %v1305
        %v1314 = vsub.f32 %v1242, %v1306
        %v1315 = vsub.f32 %v1243, %v1307
        %v1316 = vsub.f32 %v1244, %v1308
        %v1317 = vsub.f32 %v1245, %v1309
        %v1318 = vsub.f32 %v1246, %v1310
        %v1319 = vsub.f32 %v1247, %v1311
        %v1320 = vsub.f32 %v1248, %v1312
        %v1321 = vmul.f32 %v1313, %v1313
        %v1322 = vmul.f32 %v1314, %v1314
        %v1323 = vmul.f32 %v1315, %v1315
        %v1324 = vmul.f32 %v1316, %v1316
        %v1325 = vmul.f32 %v1317, %v1317
        %v1326 = vmul.f32 %v1318, %v1318
        %v1327 = vmul.f32 %v1319, %v1319
        %v1328 = vmul.f32 %v1320, %v1320
        %1337 = vrot.lane.b32.xlu0 %v1321, 96
        %v1338 = vpop.permute.xlu0 %1337
        %1339 = vrot.lane.b32.xlu0 %v1322, 96
        %v1340 = vpop.permute.xlu0 %1339
        %1341 = vrot.lane.b32.xlu0 %v1323, 96
        %v1342 = vpop.permute.xlu0 %1341
        %1343 = vrot.lane.b32.xlu0 %v1324, 96
        %v1344 = vpop.permute.xlu0 %1343
        %1345 = vrot.lane.b32.xlu0 %v1325, 96
        %v1346 = vpop.permute.xlu0 %1345
        %1347 = vrot.lane.b32.xlu0 %v1326, 96
        %v1348 = vpop.permute.xlu0 %1347
        %1349 = vrot.lane.b32.xlu0 %v1327, 96
        %v1350 = vpop.permute.xlu0 %1349
        %1351 = vrot.lane.b32.xlu0 %v1328, 96
        %v1352 = vpop.permute.xlu0 %1351
        %v1361 = vsel %vm458, %v1338, 0.0
        %1362 = vadd.xlane.f32.xlu0 %v1361
        %v1363 = vpop.xlane.xlu0 %1362
        %v1364 = vsel %vm458, %v1340, 0.0
        %1365 = vadd.xlane.f32.xlu0 %v1364
        %v1366 = vpop.xlane.xlu0 %1365
        %v1367 = vsel %vm458, %v1342, 0.0
        %1368 = vadd.xlane.f32.xlu0 %v1367
        %v1369 = vpop.xlane.xlu0 %1368
        %v1370 = vsel %vm458, %v1344, 0.0
        %1371 = vadd.xlane.f32.xlu0 %v1370
        %v1372 = vpop.xlane.xlu0 %1371
        %v1373 = vsel %vm458, %v1346, 0.0
        %1374 = vadd.xlane.f32.xlu0 %v1373
        %v1375 = vpop.xlane.xlu0 %1374
        %v1376 = vsel %vm458, %v1348, 0.0
        %1377 = vadd.xlane.f32.xlu0 %v1376
        %v1378 = vpop.xlane.xlu0 %1377
        %v1379 = vsel %vm458, %v1350, 0.0
        %1380 = vadd.xlane.f32.xlu0 %v1379
        %v1381 = vpop.xlane.xlu0 %1380
        %v1382 = vsel %vm458, %v1352, 0.0
        %1383 = vadd.xlane.f32.xlu0 %v1382
        %v1384 = vpop.xlane.xlu0 %1383
        %v1385 = vmul.f32 %v1363, %v810
        %v1386 = vmul.f32 %v1366, %v810
        %v1387 = vmul.f32 %v1369, %v810
        %v1388 = vmul.f32 %v1372, %v810
        %v1389 = vmul.f32 %v1375, %v810
        %v1390 = vmul.f32 %v1378, %v810
        %v1391 = vmul.f32 %v1381, %v810
        %v1392 = vmul.f32 %v1384, %v810
        %v1393 = vadd.f32 %v1385, 1e-05
        %v1394 = vadd.f32 %v1386, 1e-05
        %v1395 = vadd.f32 %v1387, 1e-05
        %v1396 = vadd.f32 %v1388, 1e-05
        %v1397 = vadd.f32 %v1389, 1e-05
        %v1398 = vadd.f32 %v1390, 1e-05
        %v1399 = vadd.f32 %v1391, 1e-05
        %v1400 = vadd.f32 %v1392, 1e-05
        %v1401 = vrsqrt.pop %v1393
        %v1402 = vrsqrt.pop %v1394
        %v1403 = vrsqrt.pop %v1395
        %v1404 = vrsqrt.pop %v1396
        %v1405 = vrsqrt.pop %v1397
        %v1406 = vrsqrt.pop %v1398
        %v1407 = vrsqrt.pop %v1399
        %v1408 = vrsqrt.pop %v1400
        %v1409 = vmul.f32 %v1313, %v1401
        %v1410 = vmul.f32 %v1314, %v1402
        %v1411 = vmul.f32 %v1315, %v1403
        %v1412 = vmul.f32 %v1316, %v1404
        %v1413 = vmul.f32 %v1317, %v1405
        %v1414 = vmul.f32 %v1318, %v1406
        %v1415 = vmul.f32 %v1319, %v1407
        %v1416 = vmul.f32 %v1320, %v1408
        %v1417 = vlaneseq
        %v1418 = vshrl.u32 %v1417, 7
        %v1419 = vsub.s32 0, %v1418
        %v1420 = vrot.slane %v292, %v1419
        %1422 = vrot.lane.b32.xlu0 %v1420, 32
        %v1423 = vpop.permute.xlu0 %1422
        %v1425 = vmul.f32 %v1409, %v1423
        %v1426 = vmul.f32 %v1410, %v1423
        %v1427 = vmul.f32 %v1411, %v1423
        %v1428 = vmul.f32 %v1412, %v1423
        %v1429 = vmul.f32 %v1413, %v1423
        %v1430 = vmul.f32 %v1414, %v1423
        %v1431 = vmul.f32 %v1415, %v1423
        %v1432 = vmul.f32 %v1416, %v1423
        %v1433 = vlaneseq
        %v1434 = vshrl.u32 %v1433, 7
        %v1435 = vsub.s32 0, %v1434
        %v1436 = vrot.slane %v293, %v1435
        %1438 = vrot.lane.b32.xlu0 %v1436, 32
        %v1439 = vpop.permute.xlu0 %1438
        %v1441 = vadd.f32 %v1425, %v1439
        %v1442 = vadd.f32 %v1426, %v1439
        %v1443 = vadd.f32 %v1427, %v1439
        %v1444 = vadd.f32 %v1428, %v1439
        %v1445 = vadd.f32 %v1429, %v1439
        %v1446 = vadd.f32 %v1430, %v1439
        %v1447 = vadd.f32 %v1431, %v1439
        %v1448 = vadd.f32 %v1432, %v1439
        %1457 = vrot.lane.b32.xlu0 %v271, 32
        %v1458 = vpop.permute.xlu0 %1457
        %1459 = vrot.lane.b32.xlu0 %v272, 32
        %v1460 = vpop.permute.xlu0 %1459
        %1461 = vrot.lane.b32.xlu0 %v273, 32
        %v1462 = vpop.permute.xlu0 %1461
        %1463 = vrot.lane.b32.xlu0 %v274, 32
        %v1464 = vpop.permute.xlu0 %1463
        %1465 = vrot.lane.b32.xlu0 %v275, 32
        %v1466 = vpop.permute.xlu0 %1465
        %1467 = vrot.lane.b32.xlu0 %v276, 32
        %v1468 = vpop.permute.xlu0 %1467
        %1469 = vrot.lane.b32.xlu0 %v277, 32
        %v1470 = vpop.permute.xlu0 %1469
        %1471 = vrot.lane.b32.xlu0 %v278, 32
        %v1472 = vpop.permute.xlu0 %1471
        %v1481 = vadd.f32 %v1441, %v1458
        %v1482 = vadd.f32 %v1442, %v1460
        %v1483 = vadd.f32 %v1443, %v1462
        %v1484 = vadd.f32 %v1444, %v1464
        %v1485 = vadd.f32 %v1445, %v1466
        %v1486 = vadd.f32 %v1446, %v1468
        %v1487 = vadd.f32 %v1447, %v1470
        %v1488 = vadd.f32 %v1448, %v1472
        %v1489 = vld [vmem:[#allocation7] sm:$0xf]
        %v1490 = vld [vmem:[#allocation7 + $0x4] sm:$0xf]
        %v1491 = vld [vmem:[#allocation7 + $0x8] sm:$0xf]
        %v1492 = vld [vmem:[#allocation7 + $0xc] sm:$0xf]
        %v1493 = vld [vmem:[#allocation7 + $0x10] sm:$0xf]
        %v1494 = vld [vmem:[#allocation7 + $0x14] sm:$0xf]
        %v1495 = vld [vmem:[#allocation7 + $0x18] sm:$0xf]
        %v1496 = vld [vmem:[#allocation7 + $0x1c] sm:$0xf]
        %v1497 = vpack.c.bf16 %v1482, %v1481
        %v1498 = vpack.c.bf16 %v1484, %v1483
        %v1499 = vpack.c.bf16 %v1486, %v1485
        %v1500 = vpack.c.bf16 %v1488, %v1487
        %v1501 = vlaneseq
        %v1502 = vshrl.u32 %v1501, 7
        %v1503 = vsub.s32 0, %v1502
        %v1504 = vrot.slane %v287, %v1503
        %1509 = vrot.lane.b32.xlu0 %v1497, 96
        %v1510 = vpop.permute.xlu0 %1509
        %1511 = vrot.lane.b32.xlu0 %v1498, 96
        %v1512 = vpop.permute.xlu0 %1511
        %1513 = vrot.lane.b32.xlu0 %v1499, 96
        %v1514 = vpop.permute.xlu0 %1513
        %1515 = vrot.lane.b32.xlu0 %v1500, 96
        %v1516 = vpop.permute.xlu0 %1515
        %v1521 = vunpack.c.l.b16 %v1489
        %v1522 = vunpack.c.l.b16 %v1490
        %v1523 = vunpack.c.l.b16 %v1491
        %v1524 = vunpack.c.l.b16 %v1492
        %v1525 = vpack.c.b16 %v1522, %v1521
        %v1526 = vpack.c.b16 %v1524, %v1523
        %v1530 = vsel %vm458, %v1510, 0
        %v1533 = vsel %vm458, %v1512, 0
        %v1536 = vsel %vm458, %v1514, 0
        %v1539 = vsel %vm458, %v1516, 0
        %1541 = vmatprep.subr.bf16.mxu0 0
        %1542 = vmatpush1.bf16.msra.mxu0 0
        %1543 = vmatprep.subr.bf16.mxu0 0
        %1544 = vmatpush1.bf16.msra.mxu0 0
        %1545 = vmatprep.subr.bf16.mxu0 0
        %1546 = vmatpush1.bf16.msra.mxu0 0
        %1547 = vmatprep.subr.bf16.mxu0 0
        %1548 = vmatpush1.bf16.msra.mxu0 0
        %1549 = vmatprep.subr.bf16.mxu0 0
        %1550 = vmatpush1.bf16.msra.mxu0 0
        %1551 = vmatprep.subr.bf16.mxu0 0
        %1552 = vmatpush1.bf16.msra.mxu0 0
        %1553 = vmatprep.subr.bf16.mxu0 0
        %1554 = vmatpush1.bf16.msra.mxu0 %v1526
        %1555 = vmatprep.subr.bf16.mxu0 0
        %1556 = vmatpush1.bf16.msra.mxu0 %v1525
        %1557 = vmatprep.subr.bf16.mxu0 0
        %1558 = vmatpush2.bf16.msra.mxu0 0
        %1559 = vmatprep.subr.bf16.mxu0 0
        %1560 = vmatpush2.bf16.msra.mxu0 0
        %1561 = vmatprep.subr.bf16.mxu0 0
        %1562 = vmatpush2.bf16.msra.mxu0 0
        %1563 = vmatprep.subr.bf16.mxu0 0
        %1564 = vmatpush2.bf16.msra.mxu0 0
        %1565 = vmatprep.subr.bf16.mxu0 0
        %1566 = vmatpush2.bf16.msra.mxu0 0
        %1567 = vmatprep.subr.bf16.mxu0 0
        %1568 = vmatpush2.bf16.msra.mxu0 0
        %1569 = vmatprep.subr.bf16.mxu0 0
        %1570 = vmatpush2.bf16.msra.mxu0 0
        %1571 = vmatprep.subr.bf16.mxu0 0
        %1572 = vmatpush2.bf16.msra.mxu0 0
        %1573 = vmatprep.mubr.bf16.mxu0 0
        %1574 = vmatmul.mubr.bf16.gmra.mxu0 %v1530
        %v1575 = vpop.f32.mrf.mxu0
        %v1576 = vadd.f32 %v1504, %v1575
        %v1577 = vpop.f32.mrf.mxu0
        %v1578 = vpop.f32.mrf.mxu0
        %v1579 = vadd.f32 %v1504, %v1578
        %v1580 = vpop.f32.mrf.mxu0
        %1581 = vmatprep.mubr.bf16.mxu0 0
        %1582 = vmatmul.mubr.bf16.gmra.mxu0 %v1533
        %v1583 = vpop.f32.mrf.mxu0
        %v1584 = vadd.f32 %v1504, %v1583
        %v1585 = vpop.f32.mrf.mxu0
        %v1586 = vpop.f32.mrf.mxu0
        %v1587 = vadd.f32 %v1504, %v1586
        %v1588 = vpop.f32.mrf.mxu0
        %1589 = vmatprep.mubr.bf16.mxu0 0
        %1590 = vmatmul.mubr.bf16.gmra.mxu0 %v1536
        %v1591 = vpop.f32.mrf.mxu0
        %v1592 = vadd.f32 %v1504, %v1591
        %v1593 = vpop.f32.mrf.mxu0
        %v1594 = vpop.f32.mrf.mxu0
        %v1595 = vadd.f32 %v1504, %v1594
        %v1596 = vpop.f32.mrf.mxu0
        %1597 = vmatprep.mubr.bf16.mxu0 0
        %1598 = vmatmul.mubr.bf16.gmra.mxu0 %v1539
        %v1599 = vpop.f32.mrf.mxu0
        %v1600 = vadd.f32 %v1504, %v1599
        %v1601 = vpop.f32.mrf.mxu0
        %v1602 = vpop.f32.mrf.mxu0
        %v1603 = vadd.f32 %v1504, %v1602
        %v1604 = vpop.f32.mrf.mxu0
        %1605 = vdwg.mxu0
        %v1606 = vpack.c.bf16 %v1579, %v1576
        %v1607 = vpack.c.bf16 %v1587, %v1584
        %v1608 = vpack.c.bf16 %v1595, %v1592
        %v1609 = vpack.c.bf16 %v1603, %v1600
        %1614 = vrot.lane.b32.xlu0 %v1606, 96
        %v1615 = vpop.permute.xlu0 %1614
        %1616 = vrot.lane.b32.xlu0 %v1607, 96
        %v1617 = vpop.permute.xlu0 %1616
        %1618 = vrot.lane.b32.xlu0 %v1608, 96
        %v1619 = vpop.permute.xlu0 %1618
        %1620 = vrot.lane.b32.xlu0 %v1609, 96
        %v1621 = vpop.permute.xlu0 %1620
        %vm1622 = vcmask 64512
        %v1624 = vsel %vm1622, %v1606, 0
        %v1627 = vsel %vm1622, %v1607, 0
        %v1630 = vsel %vm1622, %v1608, 0
        %v1633 = vsel %vm1622, %v1609, 0
        %v1636 = vsel %vm1622, %v1615, 0
        %v1639 = vsel %vm1622, %v1617, 0
        %v1642 = vsel %vm1622, %v1619, 0
        %v1645 = vsel %vm1622, %v1621, 0
        %1647 = vmatprep.subr.bf16.mxu0 0
        %1648 = vmatpush1.bf16.xpose.msra.mxu0 0
        %1649 = vmatprep.subr.bf16.mxu0 0
        %1650 = vmatpush1.bf16.xpose.msra.mxu0 0
        %1651 = vmatprep.subr.bf16.mxu0 0
        %1652 = vmatpush1.bf16.xpose.msra.mxu0 0
        %1653 = vmatprep.subr.bf16.mxu0 0
        %1654 = vmatpush1.bf16.xpose.msra.mxu0 0
        %1655 = vmatprep.subr.bf16.mxu0 0
        %1656 = vmatpush1.bf16.xpose.msra.mxu0 %v1645
        %1657 = vmatprep.subr.bf16.mxu0 0
        %1658 = vmatpush1.bf16.xpose.msra.mxu0 %v1642
        %1659 = vmatprep.subr.bf16.mxu0 0
        %1660 = vmatpush1.bf16.xpose.msra.mxu0 %v1639
        %1661 = vmatprep.subr.bf16.mxu0 0
        %1662 = vmatpush1.bf16.xpose.msra.mxu0 %v1636
        %1663 = vmatprep.subr.bf16.mxu0 0
        %1664 = vmatpush2.bf16.xpose.msra.mxu0 0
        %1665 = vmatprep.subr.bf16.mxu0 0
        %1666 = vmatpush2.bf16.xpose.msra.mxu0 0
        %1667 = vmatprep.subr.bf16.mxu0 0
        %1668 = vmatpush2.bf16.xpose.msra.mxu0 0
        %1669 = vmatprep.subr.bf16.mxu0 0
        %1670 = vmatpush2.bf16.xpose.msra.mxu0 0
        %1671 = vmatprep.subr.bf16.mxu0 0
        %1672 = vmatpush2.bf16.xpose.msra.mxu0 0
        %1673 = vmatprep.subr.bf16.mxu0 0
        %1674 = vmatpush2.bf16.xpose.msra.mxu0 0
        %1675 = vmatprep.subr.bf16.mxu0 0
        %1676 = vmatpush2.bf16.xpose.msra.mxu0 0
        %1677 = vmatprep.subr.bf16.mxu0 0
        %1678 = vmatpush2.bf16.xpose.msra.mxu0 0
        %1679 = vmatprep.mubr.bf16.mxu0 0
        %1680 = vmatmul.mubr.bf16.gmra.mxu0 %v1624
        %v1681 = vpop.f32.mrf.mxu0
        %v1682 = vadd.f32 %v279, %v1681
        %v1683 = vpop.f32.mrf.mxu0
        %v1684 = vpop.f32.mrf.mxu0
        %v1685 = vadd.f32 %v280, %v1684
        %v1686 = vpop.f32.mrf.mxu0
        %1687 = vmatprep.mubr.bf16.mxu0 0
        %1688 = vmatmul.mubr.bf16.gmra.mxu0 %v1627
        %v1689 = vpop.f32.mrf.mxu0
        %v1690 = vadd.f32 %v281, %v1689
        %v1691 = vpop.f32.mrf.mxu0
        %v1692 = vpop.f32.mrf.mxu0
        %v1693 = vadd.f32 %v282, %v1692
        %v1694 = vpop.f32.mrf.mxu0
        %1695 = vmatprep.mubr.bf16.mxu0 0
        %1696 = vmatmul.mubr.bf16.gmra.mxu0 %v1630
        %v1697 = vpop.f32.mrf.mxu0
        %v1698 = vadd.f32 %v283, %v1697
        %v1699 = vpop.f32.mrf.mxu0
        %v1700 = vpop.f32.mrf.mxu0
        %v1701 = vadd.f32 %v284, %v1700
        %v1702 = vpop.f32.mrf.mxu0
        %1703 = vmatprep.mubr.bf16.mxu0 0
        %1704 = vmatmul.mubr.bf16.gmra.mxu0 %v1633
        %v1705 = vpop.f32.mrf.mxu0
        %v1706 = vadd.f32 %v285, %v1705
        %v1707 = vpop.f32.mrf.mxu0
        %v1708 = vpop.f32.mrf.mxu0
        %v1709 = vadd.f32 %v286, %v1708
        %v1710 = vpop.f32.mrf.mxu0
        %1711 = vdwg.mxu0
        %vm1712 = vcmask 523264
        %v1713 = vsel %vm1712, %v1682, -inf
        %1714 = vmax.xlane.f32.xlu0 %v1713
        %v1715 = vpop.xlane.xlu0 %1714
        %v1716 = vsel %vm1712, %v1685, -inf
        %1717 = vmax.xlane.f32.xlu0 %v1716
        %v1718 = vpop.xlane.xlu0 %1717
        %v1719 = vsel %vm1712, %v1690, -inf
        %1720 = vmax.xlane.f32.xlu0 %v1719
        %v1721 = vpop.xlane.xlu0 %1720
        %v1722 = vsel %vm1712, %v1693, -inf
        %1723 = vmax.xlane.f32.xlu0 %v1722
        %v1724 = vpop.xlane.xlu0 %1723
        %v1725 = vsel %vm1712, %v1698, -inf
        %1726 = vmax.xlane.f32.xlu0 %v1725
        %v1727 = vpop.xlane.xlu0 %1726
        %v1728 = vsel %vm1712, %v1701, -inf
        %1729 = vmax.xlane.f32.xlu0 %v1728
        %v1730 = vpop.xlane.xlu0 %1729
        %v1731 = vsel %vm1712, %v1706, -inf
        %1732 = vmax.xlane.f32.xlu0 %v1731
        %v1733 = vpop.xlane.xlu0 %1732
        %v1734 = vsel %vm1712, %v1709, -inf
        %1735 = vmax.xlane.f32.xlu0 %v1734
        %v1736 = vpop.xlane.xlu0 %1735
        %v1737 = vsub.f32 %v1682, %v1715
        %v1738 = vsub.f32 %v1685, %v1718
        %v1739 = vsub.f32 %v1690, %v1721
        %v1740 = vsub.f32 %v1693, %v1724
        %v1741 = vsub.f32 %v1698, %v1727
        %v1742 = vsub.f32 %v1701, %v1730
        %v1743 = vsub.f32 %v1706, %v1733
        %v1744 = vsub.f32 %v1709, %v1736
        %v1745 = vmul.f32 %v1737, 1.442695
        %v1746 = vpow.pop %v1745
        %v1747 = vmul.f32 %v1738, 1.442695
        %v1748 = vpow.pop %v1747
        %v1749 = vmul.f32 %v1739, 1.442695
        %v1750 = vpow.pop %v1749
        %v1751 = vmul.f32 %v1740, 1.442695
        %v1752 = vpow.pop %v1751
        %v1753 = vmul.f32 %v1741, 1.442695
        %v1754 = vpow.pop %v1753
        %v1755 = vmul.f32 %v1742, 1.442695
        %v1756 = vpow.pop %v1755
        %v1757 = vmul.f32 %v1743, 1.442695
        %v1758 = vpow.pop %v1757
        %v1759 = vmul.f32 %v1744, 1.442695
        %v1760 = vpow.pop %v1759
        %v1761 = vsel %vm1712, %v1746, 0.0
        %1762 = vadd.xlane.f32.xlu0 %v1761
        %v1763 = vpop.xlane.xlu0 %1762
        %v1764 = vsel %vm1712, %v1748, 0.0
        %1765 = vadd.xlane.f32.xlu0 %v1764
        %v1766 = vpop.xlane.xlu0 %1765
        %v1767 = vsel %vm1712, %v1750, 0.0
        %1768 = vadd.xlane.f32.xlu0 %v1767
        %v1769 = vpop.xlane.xlu0 %1768
        %v1770 = vsel %vm1712, %v1752, 0.0
        %1771 = vadd.xlane.f32.xlu0 %v1770
        %v1772 = vpop.xlane.xlu0 %1771
        %v1773 = vsel %vm1712, %v1754, 0.0
        %1774 = vadd.xlane.f32.xlu0 %v1773
        %v1775 = vpop.xlane.xlu0 %1774
        %v1776 = vsel %vm1712, %v1756, 0.0
        %1777 = vadd.xlane.f32.xlu0 %v1776
        %v1778 = vpop.xlane.xlu0 %1777
        %v1779 = vsel %vm1712, %v1758, 0.0
        %1780 = vadd.xlane.f32.xlu0 %v1779
        %v1781 = vpop.xlane.xlu0 %1780
        %v1782 = vsel %vm1712, %v1760, 0.0
        %1783 = vadd.xlane.f32.xlu0 %v1782
        %v1784 = vpop.xlane.xlu0 %1783
        %v1785 = vrcp.pop %v1763
        %v1786 = vrcp.pop %v1766
        %v1787 = vrcp.pop %v1769
        %v1788 = vrcp.pop %v1772
        %v1789 = vrcp.pop %v1775
        %v1790 = vrcp.pop %v1778
        %v1791 = vrcp.pop %v1781
        %v1792 = vrcp.pop %v1784
        %v1793 = vmul.f32 %v1746, %v1785
        %v1794 = vmul.f32 %v1748, %v1786
        %v1795 = vmul.f32 %v1750, %v1787
        %v1796 = vmul.f32 %v1752, %v1788
        %v1797 = vmul.f32 %v1754, %v1789
        %v1798 = vmul.f32 %v1756, %v1790
        %v1799 = vmul.f32 %v1758, %v1791
        %v1800 = vmul.f32 %v1760, %v1792
        %v1801 = vpack.c.bf16 %v1794, %v1793
        %v1802 = vpack.c.bf16 %v1796, %v1795
        %v1803 = vpack.c.bf16 %v1798, %v1797
        %v1804 = vpack.c.bf16 %v1800, %v1799
        %1805 = vrot.lane.b32.xlu0 %v1606, 64
        %v1806 = vpop.permute.xlu0 %1805
        %1807 = vrot.lane.b32.xlu0 %v1607, 64
        %v1808 = vpop.permute.xlu0 %1807
        %1809 = vrot.lane.b32.xlu0 %v1608, 64
        %v1810 = vpop.permute.xlu0 %1809
        %1811 = vrot.lane.b32.xlu0 %v1609, 64
        %v1812 = vpop.permute.xlu0 %1811
        %v1818 = vsel %vm1712, %v1801, 0
        %v1821 = vsel %vm1712, %v1802, 0
        %v1824 = vsel %vm1712, %v1803, 0
        %v1827 = vsel %vm1712, %v1804, 0
        %1829 = vmatprep.subr.bf16.mxu0 0
        %1830 = vmatpush1.bf16.msra.mxu0 0
        %1831 = vmatprep.subr.bf16.mxu0 0
        %1832 = vmatpush1.bf16.msra.mxu0 0
        %1833 = vmatprep.subr.bf16.mxu0 0
        %1834 = vmatpush1.bf16.msra.mxu0 0
        %1835 = vmatprep.subr.bf16.mxu0 0
        %1836 = vmatpush1.bf16.msra.mxu0 0
        %1837 = vmatprep.subr.bf16.mxu0 0
        %1838 = vmatpush1.bf16.msra.mxu0 %v1812
        %1839 = vmatprep.subr.bf16.mxu0 0
        %1840 = vmatpush1.bf16.msra.mxu0 %v1810
        %1841 = vmatprep.subr.bf16.mxu0 0
        %1842 = vmatpush1.bf16.msra.mxu0 %v1808
        %1843 = vmatprep.subr.bf16.mxu0 0
        %1844 = vmatpush1.bf16.msra.mxu0 %v1806
        %1845 = vmatprep.subr.bf16.mxu0 0
        %1846 = vmatpush2.bf16.msra.mxu0 0
        %1847 = vmatprep.subr.bf16.mxu0 0
        %1848 = vmatpush2.bf16.msra.mxu0 0
        %1849 = vmatprep.subr.bf16.mxu0 0
        %1850 = vmatpush2.bf16.msra.mxu0 0
        %1851 = vmatprep.subr.bf16.mxu0 0
        %1852 = vmatpush2.bf16.msra.mxu0 0
        %1853 = vmatprep.subr.bf16.mxu0 0
        %1854 = vmatpush2.bf16.msra.mxu0 0
        %1855 = vmatprep.subr.bf16.mxu0 0
        %1856 = vmatpush2.bf16.msra.mxu0 0
        %1857 = vmatprep.subr.bf16.mxu0 0
        %1858 = vmatpush2.bf16.msra.mxu0 0
        %1859 = vmatprep.subr.bf16.mxu0 0
        %1860 = vmatpush2.bf16.msra.mxu0 0
        %1861 = vmatprep.mubr.bf16.mxu0 0
        %1862 = vmatmul.mubr.bf16.gmra.mxu0 %v1818
        %v1863 = vpop.f32.mrf.mxu0
        %v1864 = vadd.f32 0.0, %v1863
        %v1865 = vpop.f32.mrf.mxu0
        %v1866 = vpop.f32.mrf.mxu0
        %v1867 = vadd.f32 0.0, %v1866
        %v1868 = vpop.f32.mrf.mxu0
        %1869 = vmatprep.mubr.bf16.mxu0 0
        %1870 = vmatmul.mubr.bf16.gmra.mxu0 %v1821
        %v1871 = vpop.f32.mrf.mxu0
        %v1872 = vadd.f32 0.0, %v1871
        %v1873 = vpop.f32.mrf.mxu0
        %v1874 = vpop.f32.mrf.mxu0
        %v1875 = vadd.f32 0.0, %v1874
        %v1876 = vpop.f32.mrf.mxu0
        %1877 = vmatprep.mubr.bf16.mxu0 0
        %1878 = vmatmul.mubr.bf16.gmra.mxu0 %v1824
        %v1879 = vpop.f32.mrf.mxu0
        %v1880 = vadd.f32 0.0, %v1879
        %v1881 = vpop.f32.mrf.mxu0
        %v1882 = vpop.f32.mrf.mxu0
        %v1883 = vadd.f32 0.0, %v1882
        %v1884 = vpop.f32.mrf.mxu0
        %1885 = vmatprep.mubr.bf16.mxu0 0
        %1886 = vmatmul.mubr.bf16.gmra.mxu0 %v1827
        %v1887 = vpop.f32.mrf.mxu0
        %v1888 = vadd.f32 0.0, %v1887
        %v1889 = vpop.f32.mrf.mxu0
        %v1890 = vpop.f32.mrf.mxu0
        %v1891 = vadd.f32 0.0, %v1890
        %v1892 = vpop.f32.mrf.mxu0
        %1893 = vdwg.mxu0
        %1894 = vrot.lane.b32.xlu0 %v1606, 120
        %v1895 = vpop.permute.xlu0 %1894
        %1896 = vrot.lane.b32.xlu0 %v1607, 120
        %v1897 = vpop.permute.xlu0 %1896
        %1898 = vrot.lane.b32.xlu0 %v1608, 120
        %v1899 = vpop.permute.xlu0 %1898
        %1900 = vrot.lane.b32.xlu0 %v1609, 120
        %v1901 = vpop.permute.xlu0 %1900
        %1902 = vrot.lane.b32.xlu0 %v1606, 88
        %v1903 = vpop.permute.xlu0 %1902
        %1904 = vrot.lane.b32.xlu0 %v1607, 88
        %v1905 = vpop.permute.xlu0 %1904
        %1906 = vrot.lane.b32.xlu0 %v1608, 88
        %v1907 = vpop.permute.xlu0 %1906
        %1908 = vrot.lane.b32.xlu0 %v1609, 88
        %v1909 = vpop.permute.xlu0 %1908
        %v1911 = vsel %vm1622, %v1895, 0
        %v1914 = vsel %vm1622, %v1897, 0
        %v1917 = vsel %vm1622, %v1899, 0
        %v1920 = vsel %vm1622, %v1901, 0
        %v1923 = vsel %vm1622, %v1903, 0
        %v1926 = vsel %vm1622, %v1905, 0
        %v1929 = vsel %vm1622, %v1907, 0
        %v1932 = vsel %vm1622, %v1909, 0
        %1934 = vmatprep.subr.bf16.mxu0 0
        %1935 = vmatpush1.bf16.xpose.msra.mxu0 0
        %1936 = vmatprep.subr.bf16.mxu0 0
        %1937 = vmatpush1.bf16.xpose.msra.mxu0 0
        %1938 = vmatprep.subr.bf16.mxu0 0
        %1939 = vmatpush1.bf16.xpose.msra.mxu0 0
        %1940 = vmatprep.subr.bf16.mxu0 0
        %1941 = vmatpush1.bf16.xpose.msra.mxu0 0
        %1942 = vmatprep.subr.bf16.mxu0 0
        %1943 = vmatpush1.bf16.xpose.msra.mxu0 %v1932
        %1944 = vmatprep.subr.bf16.mxu0 0
        %1945 = vmatpush1.bf16.xpose.msra.mxu0 %v1929
        %1946 = vmatprep.subr.bf16.mxu0 0
        %1947 = vmatpush1.bf16.xpose.msra.mxu0 %v1926
        %1948 = vmatprep.subr.bf16.mxu0 0
        %1949 = vmatpush1.bf16.xpose.msra.mxu0 %v1923
        %1950 = vmatprep.subr.bf16.mxu0 0
        %1951 = vmatpush2.bf16.xpose.msra.mxu0 0
        %1952 = vmatprep.subr.bf16.mxu0 0
        %1953 = vmatpush2.bf16.xpose.msra.mxu0 0
        %1954 = vmatprep.subr.bf16.mxu0 0
        %1955 = vmatpush2.bf16.xpose.msra.mxu0 0
        %1956 = vmatprep.subr.bf16.mxu0 0
        %1957 = vmatpush2.bf16.xpose.msra.mxu0 0
        %1958 = vmatprep.subr.bf16.mxu0 0
        %1959 = vmatpush2.bf16.xpose.msra.mxu0 0
        %1960 = vmatprep.subr.bf16.mxu0 0
        %1961 = vmatpush2.bf16.xpose.msra.mxu0 0
        %1962 = vmatprep.subr.bf16.mxu0 0
        %1963 = vmatpush2.bf16.xpose.msra.mxu0 0
        %1964 = vmatprep.subr.bf16.mxu0 0
        %1965 = vmatpush2.bf16.xpose.msra.mxu0 0
        %1966 = vmatprep.mubr.bf16.mxu0 0
        %1967 = vmatmul.mubr.bf16.gmra.mxu0 %v1911
        %v1968 = vpop.f32.mrf.mxu0
        %v1969 = vadd.f32 %v279, %v1968
        %v1970 = vpop.f32.mrf.mxu0
        %v1971 = vpop.f32.mrf.mxu0
        %v1972 = vadd.f32 %v280, %v1971
        %v1973 = vpop.f32.mrf.mxu0
        %1974 = vmatprep.mubr.bf16.mxu0 0
        %1975 = vmatmul.mubr.bf16.gmra.mxu0 %v1914
        %v1976 = vpop.f32.mrf.mxu0
        %v1977 = vadd.f32 %v281, %v1976
        %v1978 = vpop.f32.mrf.mxu0
        %v1979 = vpop.f32.mrf.mxu0
        %v1980 = vadd.f32 %v282, %v1979
        %v1981 = vpop.f32.mrf.mxu0
        %1982 = vmatprep.mubr.bf16.mxu0 0
        %1983 = vmatmul.mubr.bf16.gmra.mxu0 %v1917
        %v1984 = vpop.f32.mrf.mxu0
        %v1985 = vadd.f32 %v283, %v1984
        %v1986 = vpop.f32.mrf.mxu0
        %v1987 = vpop.f32.mrf.mxu0
        %v1988 = vadd.f32 %v284, %v1987
        %v1989 = vpop.f32.mrf.mxu0
        %1990 = vmatprep.mubr.bf16.mxu0 0
        %1991 = vmatmul.mubr.bf16.gmra.mxu0 %v1920
        %v1992 = vpop.f32.mrf.mxu0
        %v1993 = vadd.f32 %v285, %v1992
        %v1994 = vpop.f32.mrf.mxu0
        %v1995 = vpop.f32.mrf.mxu0
        %v1996 = vadd.f32 %v286, %v1995
        %v1997 = vpop.f32.mrf.mxu0
        %1998 = vdwg.mxu0
        %v1999 = vsel %vm1712, %v1969, -inf
        %2000 = vmax.xlane.f32.xlu0 %v1999
        %v2001 = vpop.xlane.xlu0 %2000
        %v2002 = vsel %vm1712, %v1972, -inf
        %2003 = vmax.xlane.f32.xlu0 %v2002
        %v2004 = vpop.xlane.xlu0 %2003
        %v2005 = vsel %vm1712, %v1977, -inf
        %2006 = vmax.xlane.f32.xlu0 %v2005
        %v2007 = vpop.xlane.xlu0 %2006
        %v2008 = vsel %vm1712, %v1980, -inf
        %2009 = vmax.xlane.f32.xlu0 %v2008
        %v2010 = vpop.xlane.xlu0 %2009
        %v2011 = vsel %vm1712, %v1985, -inf
        %2012 = vmax.xlane.f32.xlu0 %v2011
        %v2013 = vpop.xlane.xlu0 %2012
        %v2014 = vsel %vm1712, %v1988, -inf
        %2015 = vmax.xlane.f32.xlu0 %v2014
        %v2016 = vpop.xlane.xlu0 %2015
        %v2017 = vsel %vm1712, %v1993, -inf
        %2018 = vmax.xlane.f32.xlu0 %v2017
        %v2019 = vpop.xlane.xlu0 %2018
        %v2020 = vsel %vm1712, %v1996, -inf
        %2021 = vmax.xlane.f32.xlu0 %v2020
        %v2022 = vpop.xlane.xlu0 %2021
        %v2023 = vsub.f32 %v1969, %v2001
        %v2024 = vsub.f32 %v1972, %v2004
        %v2025 = vsub.f32 %v1977, %v2007
        %v2026 = vsub.f32 %v1980, %v2010
        %v2027 = vsub.f32 %v1985, %v2013
        %v2028 = vsub.f32 %v1988, %v2016
        %v2029 = vsub.f32 %v1993, %v2019
        %v2030 = vsub.f32 %v1996, %v2022
        %v2031 = vmul.f32 %v2023, 1.442695
        %v2032 = vpow.pop %v2031
        %v2033 = vmul.f32 %v2024, 1.442695
        %v2034 = vpow.pop %v2033
        %v2035 = vmul.f32 %v2025, 1.442695
        %v2036 = vpow.pop %v2035
        %v2037 = vmul.f32 %v2026, 1.442695
        %v2038 = vpow.pop %v2037
        %v2039 = vmul.f32 %v2027, 1.442695
        %v2040 = vpow.pop %v2039
        %v2041 = vmul.f32 %v2028, 1.442695
        %v2042 = vpow.pop %v2041
        %v2043 = vmul.f32 %v2029, 1.442695
        %v2044 = vpow.pop %v2043
        %v2045 = vmul.f32 %v2030, 1.442695
        %v2046 = vpow.pop %v2045
        %v2047 = vsel %vm1712, %v2032, 0.0
        %2048 = vadd.xlane.f32.xlu0 %v2047
        %v2049 = vpop.xlane.xlu0 %2048
        %v2050 = vsel %vm1712, %v2034, 0.0
        %2051 = vadd.xlane.f32.xlu0 %v2050
        %v2052 = vpop.xlane.xlu0 %2051
        %v2053 = vsel %vm1712, %v2036, 0.0
        %2054 = vadd.xlane.f32.xlu0 %v2053
        %v2055 = vpop.xlane.xlu0 %2054
        %v2056 = vsel %vm1712, %v2038, 0.0
        %2057 = vadd.xlane.f32.xlu0 %v2056
        %v2058 = vpop.xlane.xlu0 %2057
        %v2059 = vsel %vm1712, %v2040, 0.0
        %2060 = vadd.xlane.f32.xlu0 %v2059
        %v2061 = vpop.xlane.xlu0 %2060
        %v2062 = vsel %vm1712, %v2042, 0.0
        %2063 = vadd.xlane.f32.xlu0 %v2062
        %v2064 = vpop.xlane.xlu0 %2063
        %v2065 = vsel %vm1712, %v2044, 0.0
        %2066 = vadd.xlane.f32.xlu0 %v2065
        %v2067 = vpop.xlane.xlu0 %2066
        %v2068 = vsel %vm1712, %v2046, 0.0
        %2069 = vadd.xlane.f32.xlu0 %v2068
        %v2070 = vpop.xlane.xlu0 %2069
        %v2071 = vrcp.pop %v2049
        %v2072 = vrcp.pop %v2052
        %v2073 = vrcp.pop %v2055
        %v2074 = vrcp.pop %v2058
        %v2075 = vrcp.pop %v2061
        %v2076 = vrcp.pop %v2064
        %v2077 = vrcp.pop %v2067
        %v2078 = vrcp.pop %v2070
        %v2079 = vmul.f32 %v2032, %v2071
        %v2080 = vmul.f32 %v2034, %v2072
        %v2081 = vmul.f32 %v2036, %v2073
        %v2082 = vmul.f32 %v2038, %v2074
        %v2083 = vmul.f32 %v2040, %v2075
        %v2084 = vmul.f32 %v2042, %v2076
        %v2085 = vmul.f32 %v2044, %v2077
        %v2086 = vmul.f32 %v2046, %v2078
        %v2087 = vpack.c.bf16 %v2080, %v2079
        %v2088 = vpack.c.bf16 %v2082, %v2081
        %v2089 = vpack.c.bf16 %v2084, %v2083
        %v2090 = vpack.c.bf16 %v2086, %v2085
        %2091 = vrot.lane.b32.xlu0 %v1606, 56
        %v2092 = vpop.permute.xlu0 %2091
        %2093 = vrot.lane.b32.xlu0 %v1607, 56
        %v2094 = vpop.permute.xlu0 %2093
        %2095 = vrot.lane.b32.xlu0 %v1608, 56
        %v2096 = vpop.permute.xlu0 %2095
        %2097 = vrot.lane.b32.xlu0 %v1609, 56
        %v2098 = vpop.permute.xlu0 %2097
        %v2104 = vsel %vm1712, %v2087, 0
        %v2107 = vsel %vm1712, %v2088, 0
        %v2110 = vsel %vm1712, %v2089, 0
        %v2113 = vsel %vm1712, %v2090, 0
        %2115 = vmatprep.subr.bf16.mxu0 0
        %2116 = vmatpush1.bf16.msra.mxu0 0
        %2117 = vmatprep.subr.bf16.mxu0 0
        %2118 = vmatpush1.bf16.msra.mxu0 0
        %2119 = vmatprep.subr.bf16.mxu0 0
        %2120 = vmatpush1.bf16.msra.mxu0 0
        %2121 = vmatprep.subr.bf16.mxu0 0
        %2122 = vmatpush1.bf16.msra.mxu0 0
        %2123 = vmatprep.subr.bf16.mxu0 0
        %2124 = vmatpush1.bf16.msra.mxu0 %v2098
        %2125 = vmatprep.subr.bf16.mxu0 0
        %2126 = vmatpush1.bf16.msra.mxu0 %v2096
        %2127 = vmatprep.subr.bf16.mxu0 0
        %2128 = vmatpush1.bf16.msra.mxu0 %v2094
        %2129 = vmatprep.subr.bf16.mxu0 0
        %2130 = vmatpush1.bf16.msra.mxu0 %v2092
        %2131 = vmatprep.subr.bf16.mxu0 0
        %2132 = vmatpush2.bf16.msra.mxu0 0
        %2133 = vmatprep.subr.bf16.mxu0 0
        %2134 = vmatpush2.bf16.msra.mxu0 0
        %2135 = vmatprep.subr.bf16.mxu0 0
        %2136 = vmatpush2.bf16.msra.mxu0 0
        %2137 = vmatprep.subr.bf16.mxu0 0
        %2138 = vmatpush2.bf16.msra.mxu0 0
        %2139 = vmatprep.subr.bf16.mxu0 0
        %2140 = vmatpush2.bf16.msra.mxu0 0
        %2141 = vmatprep.subr.bf16.mxu0 0
        %2142 = vmatpush2.bf16.msra.mxu0 0
        %2143 = vmatprep.subr.bf16.mxu0 0
        %2144 = vmatpush2.bf16.msra.mxu0 0
        %2145 = vmatprep.subr.bf16.mxu0 0
        %2146 = vmatpush2.bf16.msra.mxu0 0
        %2147 = vmatprep.mubr.bf16.mxu0 0
        %2148 = vmatmul.mubr.bf16.gmra.mxu0 %v2104
        %v2149 = vpop.f32.mrf.mxu0
        %v2150 = vadd.f32 0.0, %v2149
        %v2151 = vpop.f32.mrf.mxu0
        %v2152 = vpop.f32.mrf.mxu0
        %v2153 = vadd.f32 0.0, %v2152
        %v2154 = vpop.f32.mrf.mxu0
        %2155 = vmatprep.mubr.bf16.mxu0 0
        %2156 = vmatmul.mubr.bf16.gmra.mxu0 %v2107
        %v2157 = vpop.f32.mrf.mxu0
        %v2158 = vadd.f32 0.0, %v2157
        %v2159 = vpop.f32.mrf.mxu0
        %v2160 = vpop.f32.mrf.mxu0
        %v2161 = vadd.f32 0.0, %v2160
        %v2162 = vpop.f32.mrf.mxu0
        %2163 = vmatprep.mubr.bf16.mxu0 0
        %2164 = vmatmul.mubr.bf16.gmra.mxu0 %v2110
        %v2165 = vpop.f32.mrf.mxu0
        %v2166 = vadd.f32 0.0, %v2165
        %v2167 = vpop.f32.mrf.mxu0
        %v2168 = vpop.f32.mrf.mxu0
        %v2169 = vadd.f32 0.0, %v2168
        %v2170 = vpop.f32.mrf.mxu0
        %2171 = vmatprep.mubr.bf16.mxu0 0
        %2172 = vmatmul.mubr.bf16.gmra.mxu0 %v2113
        %v2173 = vpop.f32.mrf.mxu0
        %v2174 = vadd.f32 0.0, %v2173
        %v2175 = vpop.f32.mrf.mxu0
        %v2176 = vpop.f32.mrf.mxu0
        %v2177 = vadd.f32 0.0, %v2176
        %v2178 = vpop.f32.mrf.mxu0
        %2179 = vdwg.mxu0
        %2180 = vrot.lane.b32.xlu0 %v1606, 112
        %v2181 = vpop.permute.xlu0 %2180
        %2182 = vrot.lane.b32.xlu0 %v1607, 112
        %v2183 = vpop.permute.xlu0 %2182
        %2184 = vrot.lane.b32.xlu0 %v1608, 112
        %v2185 = vpop.permute.xlu0 %2184
        %2186 = vrot.lane.b32.xlu0 %v1609, 112
        %v2187 = vpop.permute.xlu0 %2186
        %2188 = vrot.lane.b32.xlu0 %v1606, 80
        %v2189 = vpop.permute.xlu0 %2188
        %2190 = vrot.lane.b32.xlu0 %v1607, 80
        %v2191 = vpop.permute.xlu0 %2190
        %2192 = vrot.lane.b32.xlu0 %v1608, 80
        %v2193 = vpop.permute.xlu0 %2192
        %2194 = vrot.lane.b32.xlu0 %v1609, 80
        %v2195 = vpop.permute.xlu0 %2194
        %v2197 = vsel %vm1622, %v2181, 0
        %v2200 = vsel %vm1622, %v2183, 0
        %v2203 = vsel %vm1622, %v2185, 0
        %v2206 = vsel %vm1622, %v2187, 0
        %v2209 = vsel %vm1622, %v2189, 0
        %v2212 = vsel %vm1622, %v2191, 0
        %v2215 = vsel %vm1622, %v2193, 0
        %v2218 = vsel %vm1622, %v2195, 0
        %2220 = vmatprep.subr.bf16.mxu0 0
        %2221 = vmatpush1.bf16.xpose.msra.mxu0 0
        %2222 = vmatprep.subr.bf16.mxu0 0
        %2223 = vmatpush1.bf16.xpose.msra.mxu0 0
        %2224 = vmatprep.subr.bf16.mxu0 0
        %2225 = vmatpush1.bf16.xpose.msra.mxu0 0
        %2226 = vmatprep.subr.bf16.mxu0 0
        %2227 = vmatpush1.bf16.xpose.msra.mxu0 0
        %2228 = vmatprep.subr.bf16.mxu0 0
        %2229 = vmatpush1.bf16.xpose.msra.mxu0 %v2218
        %2230 = vmatprep.subr.bf16.mxu0 0
        %2231 = vmatpush1.bf16.xpose.msra.mxu0 %v2215
        %2232 = vmatprep.subr.bf16.mxu0 0
        %2233 = vmatpush1.bf16.xpose.msra.mxu0 %v2212
        %2234 = vmatprep.subr.bf16.mxu0 0
        %2235 = vmatpush1.bf16.xpose.msra.mxu0 %v2209
        %2236 = vmatprep.subr.bf16.mxu0 0
        %2237 = vmatpush2.bf16.xpose.msra.mxu0 0
        %2238 = vmatprep.subr.bf16.mxu0 0
        %2239 = vmatpush2.bf16.xpose.msra.mxu0 0
        %2240 = vmatprep.subr.bf16.mxu0 0
        %2241 = vmatpush2.bf16.xpose.msra.mxu0 0
        %2242 = vmatprep.subr.bf16.mxu0 0
        %2243 = vmatpush2.bf16.xpose.msra.mxu0 0
        %2244 = vmatprep.subr.bf16.mxu0 0
        %2245 = vmatpush2.bf16.xpose.msra.mxu0 0
        %2246 = vmatprep.subr.bf16.mxu0 0
        %2247 = vmatpush2.bf16.xpose.msra.mxu0 0
        %2248 = vmatprep.subr.bf16.mxu0 0
        %2249 = vmatpush2.bf16.xpose.msra.mxu0 0
        %2250 = vmatprep.subr.bf16.mxu0 0
        %2251 = vmatpush2.bf16.xpose.msra.mxu0 0
        %2252 = vmatprep.mubr.bf16.mxu0 0
        %2253 = vmatmul.mubr.bf16.gmra.mxu0 %v2197
        %v2254 = vpop.f32.mrf.mxu0
        %v2255 = vadd.f32 %v279, %v2254
        %v2256 = vpop.f32.mrf.mxu0
        %v2257 = vpop.f32.mrf.mxu0
        %v2258 = vadd.f32 %v280, %v2257
        %v2259 = vpop.f32.mrf.mxu0
        %2260 = vmatprep.mubr.bf16.mxu0 0
        %2261 = vmatmul.mubr.bf16.gmra.mxu0 %v2200
        %v2262 = vpop.f32.mrf.mxu0
        %v2263 = vadd.f32 %v281, %v2262
        %v2264 = vpop.f32.mrf.mxu0
        %v2265 = vpop.f32.mrf.mxu0
        %v2266 = vadd.f32 %v282, %v2265
        %v2267 = vpop.f32.mrf.mxu0
        %2268 = vmatprep.mubr.bf16.mxu0 0
        %2269 = vmatmul.mubr.bf16.gmra.mxu0 %v2203
        %v2270 = vpop.f32.mrf.mxu0
        %v2271 = vadd.f32 %v283, %v2270
        %v2272 = vpop.f32.mrf.mxu0
        %v2273 = vpop.f32.mrf.mxu0
        %v2274 = vadd.f32 %v284, %v2273
        %v2275 = vpop.f32.mrf.mxu0
        %2276 = vmatprep.mubr.bf16.mxu0 0
        %2277 = vmatmul.mubr.bf16.gmra.mxu0 %v2206
        %v2278 = vpop.f32.mrf.mxu0
        %v2279 = vadd.f32 %v285, %v2278
        %v2280 = vpop.f32.mrf.mxu0
        %v2281 = vpop.f32.mrf.mxu0
        %v2282 = vadd.f32 %v286, %v2281
        %v2283 = vpop.f32.mrf.mxu0
        %2284 = vdwg.mxu0
        %v2285 = vsel %vm1712, %v2255, -inf
        %2286 = vmax.xlane.f32.xlu0 %v2285
        %v2287 = vpop.xlane.xlu0 %2286
        %v2288 = vsel %vm1712, %v2258, -inf
        %2289 = vmax.xlane.f32.xlu0 %v2288
        %v2290 = vpop.xlane.xlu0 %2289
        %v2291 = vsel %vm1712, %v2263, -inf
        %2292 = vmax.xlane.f32.xlu0 %v2291
        %v2293 = vpop.xlane.xlu0 %2292
        %v2294 = vsel %vm1712, %v2266, -inf
        %2295 = vmax.xlane.f32.xlu0 %v2294
        %v2296 = vpop.xlane.xlu0 %2295
        %v2297 = vsel %vm1712, %v2271, -inf
        %2298 = vmax.xlane.f32.xlu0 %v2297
        %v2299 = vpop.xlane.xlu0 %2298
        %v2300 = vsel %vm1712, %v2274, -inf
        %2301 = vmax.xlane.f32.xlu0 %v2300
        %v2302 = vpop.xlane.xlu0 %2301
        %v2303 = vsel %vm1712, %v2279, -inf
        %2304 = vmax.xlane.f32.xlu0 %v2303
        %v2305 = vpop.xlane.xlu0 %2304
        %v2306 = vsel %vm1712, %v2282, -inf
        %2307 = vmax.xlane.f32.xlu0 %v2306
        %v2308 = vpop.xlane.xlu0 %2307
        %v2309 = vsub.f32 %v2255, %v2287
        %v2310 = vsub.f32 %v2258, %v2290
        %v2311 = vsub.f32 %v2263, %v2293
        %v2312 = vsub.f32 %v2266, %v2296
        %v2313 = vsub.f32 %v2271, %v2299
        %v2314 = vsub.f32 %v2274, %v2302
        %v2315 = vsub.f32 %v2279, %v2305
        %v2316 = vsub.f32 %v2282, %v2308
        %v2317 = vmul.f32 %v2309, 1.442695
        %v2318 = vpow.pop %v2317
        %v2319 = vmul.f32 %v2310, 1.442695
        %v2320 = vpow.pop %v2319
        %v2321 = vmul.f32 %v2311, 1.442695
        %v2322 = vpow.pop %v2321
        %v2323 = vmul.f32 %v2312, 1.442695
        %v2324 = vpow.pop %v2323
        %v2325 = vmul.f32 %v2313, 1.442695
        %v2326 = vpow.pop %v2325
        %v2327 = vmul.f32 %v2314, 1.442695
        %v2328 = vpow.pop %v2327
        %v2329 = vmul.f32 %v2315, 1.442695
        %v2330 = vpow.pop %v2329
        %v2331 = vmul.f32 %v2316, 1.442695
        %v2332 = vpow.pop %v2331
        %v2333 = vsel %vm1712, %v2318, 0.0
        %2334 = vadd.xlane.f32.xlu0 %v2333
        %v2335 = vpop.xlane.xlu0 %2334
        %v2336 = vsel %vm1712, %v2320, 0.0
        %2337 = vadd.xlane.f32.xlu0 %v2336
        %v2338 = vpop.xlane.xlu0 %2337
        %v2339 = vsel %vm1712, %v2322, 0.0
        %2340 = vadd.xlane.f32.xlu0 %v2339
        %v2341 = vpop.xlane.xlu0 %2340
        %v2342 = vsel %vm1712, %v2324, 0.0
        %2343 = vadd.xlane.f32.xlu0 %v2342
        %v2344 = vpop.xlane.xlu0 %2343
        %v2345 = vsel %vm1712, %v2326, 0.0
        %2346 = vadd.xlane.f32.xlu0 %v2345
        %v2347 = vpop.xlane.xlu0 %2346
        %v2348 = vsel %vm1712, %v2328, 0.0
        %2349 = vadd.xlane.f32.xlu0 %v2348
        %v2350 = vpop.xlane.xlu0 %2349
        %v2351 = vsel %vm1712, %v2330, 0.0
        %2352 = vadd.xlane.f32.xlu0 %v2351
        %v2353 = vpop.xlane.xlu0 %2352
        %v2354 = vsel %vm1712, %v2332, 0.0
        %2355 = vadd.xlane.f32.xlu0 %v2354
        %v2356 = vpop.xlane.xlu0 %2355
        %v2357 = vrcp.pop %v2335
        %v2358 = vrcp.pop %v2338
        %v2359 = vrcp.pop %v2341
        %v2360 = vrcp.pop %v2344
        %v2361 = vrcp.pop %v2347
        %v2362 = vrcp.pop %v2350
        %v2363 = vrcp.pop %v2353
        %v2364 = vrcp.pop %v2356
        %v2365 = vmul.f32 %v2318, %v2357
        %v2366 = vmul.f32 %v2320, %v2358
        %v2367 = vmul.f32 %v2322, %v2359
        %v2368 = vmul.f32 %v2324, %v2360
        %v2369 = vmul.f32 %v2326, %v2361
        %v2370 = vmul.f32 %v2328, %v2362
        %v2371 = vmul.f32 %v2330, %v2363
        %v2372 = vmul.f32 %v2332, %v2364
        %v2373 = vpack.c.bf16 %v2366, %v2365
        %v2374 = vpack.c.bf16 %v2368, %v2367
        %v2375 = vpack.c.bf16 %v2370, %v2369
        %v2376 = vpack.c.bf16 %v2372, %v2371
        %2377 = vrot.lane.b32.xlu0 %v1606, 48
        %v2378 = vpop.permute.xlu0 %2377
        %2379 = vrot.lane.b32.xlu0 %v1607, 48
        %v2380 = vpop.permute.xlu0 %2379
        %2381 = vrot.lane.b32.xlu0 %v1608, 48
        %v2382 = vpop.permute.xlu0 %2381
        %2383 = vrot.lane.b32.xlu0 %v1609, 48
        %v2384 = vpop.permute.xlu0 %2383
        %v2390 = vsel %vm1712, %v2373, 0
        %v2393 = vsel %vm1712, %v2374, 0
        %v2396 = vsel %vm1712, %v2375, 0
        %v2399 = vsel %vm1712, %v2376, 0
        %2401 = vmatprep.subr.bf16.mxu0 0
        %2402 = vmatpush1.bf16.msra.mxu0 0
        %2403 = vmatprep.subr.bf16.mxu0 0
        %2404 = vmatpush1.bf16.msra.mxu0 0
        %2405 = vmatprep.subr.bf16.mxu0 0
        %2406 = vmatpush1.bf16.msra.mxu0 0
        %2407 = vmatprep.subr.bf16.mxu0 0
        %2408 = vmatpush1.bf16.msra.mxu0 0
        %2409 = vmatprep.subr.bf16.mxu0 0
        %2410 = vmatpush1.bf16.msra.mxu0 %v2384
        %2411 = vmatprep.subr.bf16.mxu0 0
        %2412 = vmatpush1.bf16.msra.mxu0 %v2382
        %2413 = vmatprep.subr.bf16.mxu0 0
        %2414 = vmatpush1.bf16.msra.mxu0 %v2380
        %2415 = vmatprep.subr.bf16.mxu0 0
        %2416 = vmatpush1.bf16.msra.mxu0 %v2378
        %2417 = vmatprep.subr.bf16.mxu0 0
        %2418 = vmatpush2.bf16.msra.mxu0 0
        %2419 = vmatprep.subr.bf16.mxu0 0
        %2420 = vmatpush2.bf16.msra.mxu0 0
        %2421 = vmatprep.subr.bf16.mxu0 0
        %2422 = vmatpush2.bf16.msra.mxu0 0
        %2423 = vmatprep.subr.bf16.mxu0 0
        %2424 = vmatpush2.bf16.msra.mxu0 0
        %2425 = vmatprep.subr.bf16.mxu0 0
        %2426 = vmatpush2.bf16.msra.mxu0 0
        %2427 = vmatprep.subr.bf16.mxu0 0
        %2428 = vmatpush2.bf16.msra.mxu0 0
        %2429 = vmatprep.subr.bf16.mxu0 0
        %2430 = vmatpush2.bf16.msra.mxu0 0
        %2431 = vmatprep.subr.bf16.mxu0 0
        %2432 = vmatpush2.bf16.msra.mxu0 0
        %2433 = vmatprep.mubr.bf16.mxu0 0
        %2434 = vmatmul.mubr.bf16.gmra.mxu0 %v2390
        %v2435 = vpop.f32.mrf.mxu0
        %v2436 = vadd.f32 0.0, %v2435
        %v2437 = vpop.f32.mrf.mxu0
        %v2438 = vpop.f32.mrf.mxu0
        %v2439 = vadd.f32 0.0, %v2438
        %v2440 = vpop.f32.mrf.mxu0
        %2441 = vmatprep.mubr.bf16.mxu0 0
        %2442 = vmatmul.mubr.bf16.gmra.mxu0 %v2393
        %v2443 = vpop.f32.mrf.mxu0
        %v2444 = vadd.f32 0.0, %v2443
        %v2445 = vpop.f32.mrf.mxu0
        %v2446 = vpop.f32.mrf.mxu0
        %v2447 = vadd.f32 0.0, %v2446
        %v2448 = vpop.f32.mrf.mxu0
        %2449 = vmatprep.mubr.bf16.mxu0 0
        %2450 = vmatmul.mubr.bf16.gmra.mxu0 %v2396
        %v2451 = vpop.f32.mrf.mxu0
        %v2452 = vadd.f32 0.0, %v2451
        %v2453 = vpop.f32.mrf.mxu0
        %v2454 = vpop.f32.mrf.mxu0
        %v2455 = vadd.f32 0.0, %v2454
        %v2456 = vpop.f32.mrf.mxu0
        %2457 = vmatprep.mubr.bf16.mxu0 0
        %2458 = vmatmul.mubr.bf16.gmra.mxu0 %v2399
        %v2459 = vpop.f32.mrf.mxu0
        %v2460 = vadd.f32 0.0, %v2459
        %v2461 = vpop.f32.mrf.mxu0
        %v2462 = vpop.f32.mrf.mxu0
        %v2463 = vadd.f32 0.0, %v2462
        %v2464 = vpop.f32.mrf.mxu0
        %2465 = vdwg.mxu0
        %2466 = vrot.lane.b32.xlu0 %v1606, 104
        %v2467 = vpop.permute.xlu0 %2466
        %2468 = vrot.lane.b32.xlu0 %v1607, 104
        %v2469 = vpop.permute.xlu0 %2468
        %2470 = vrot.lane.b32.xlu0 %v1608, 104
        %v2471 = vpop.permute.xlu0 %2470
        %2472 = vrot.lane.b32.xlu0 %v1609, 104
        %v2473 = vpop.permute.xlu0 %2472
        %2474 = vrot.lane.b32.xlu0 %v1606, 72
        %v2475 = vpop.permute.xlu0 %2474
        %2476 = vrot.lane.b32.xlu0 %v1607, 72
        %v2477 = vpop.permute.xlu0 %2476
        %2478 = vrot.lane.b32.xlu0 %v1608, 72
        %v2479 = vpop.permute.xlu0 %2478
        %2480 = vrot.lane.b32.xlu0 %v1609, 72
        %v2481 = vpop.permute.xlu0 %2480
        %v2483 = vsel %vm1622, %v2467, 0
        %v2486 = vsel %vm1622, %v2469, 0
        %v2489 = vsel %vm1622, %v2471, 0
        %v2492 = vsel %vm1622, %v2473, 0
        %v2495 = vsel %vm1622, %v2475, 0
        %v2498 = vsel %vm1622, %v2477, 0
        %v2501 = vsel %vm1622, %v2479, 0
        %v2504 = vsel %vm1622, %v2481, 0
        %2506 = vmatprep.subr.bf16.mxu0 0
        %2507 = vmatpush1.bf16.xpose.msra.mxu0 0
        %2508 = vmatprep.subr.bf16.mxu0 0
        %2509 = vmatpush1.bf16.xpose.msra.mxu0 0
        %2510 = vmatprep.subr.bf16.mxu0 0
        %2511 = vmatpush1.bf16.xpose.msra.mxu0 0
        %2512 = vmatprep.subr.bf16.mxu0 0
        %2513 = vmatpush1.bf16.xpose.msra.mxu0 0
        %2514 = vmatprep.subr.bf16.mxu0 0
        %2515 = vmatpush1.bf16.xpose.msra.mxu0 %v2504
        %2516 = vmatprep.subr.bf16.mxu0 0
        %2517 = vmatpush1.bf16.xpose.msra.mxu0 %v2501
        %2518 = vmatprep.subr.bf16.mxu0 0
        %2519 = vmatpush1.bf16.xpose.msra.mxu0 %v2498
        %2520 = vmatprep.subr.bf16.mxu0 0
        %2521 = vmatpush1.bf16.xpose.msra.mxu0 %v2495
        %2522 = vmatprep.subr.bf16.mxu0 0
        %2523 = vmatpush2.bf16.xpose.msra.mxu0 0
        %2524 = vmatprep.subr.bf16.mxu0 0
        %2525 = vmatpush2.bf16.xpose.msra.mxu0 0
        %2526 = vmatprep.subr.bf16.mxu0 0
        %2527 = vmatpush2.bf16.xpose.msra.mxu0 0
        %2528 = vmatprep.subr.bf16.mxu0 0
        %2529 = vmatpush2.bf16.xpose.msra.mxu0 0
        %2530 = vmatprep.subr.bf16.mxu0 0
        %2531 = vmatpush2.bf16.xpose.msra.mxu0 0
        %2532 = vmatprep.subr.bf16.mxu0 0
        %2533 = vmatpush2.bf16.xpose.msra.mxu0 0
        %2534 = vmatprep.subr.bf16.mxu0 0
        %2535 = vmatpush2.bf16.xpose.msra.mxu0 0
        %2536 = vmatprep.subr.bf16.mxu0 0
        %2537 = vmatpush2.bf16.xpose.msra.mxu0 0
        %2538 = vmatprep.mubr.bf16.mxu0 0
        %2539 = vmatmul.mubr.bf16.gmra.mxu0 %v2483
        %v2540 = vpop.f32.mrf.mxu0
        %v2541 = vadd.f32 %v279, %v2540
        %v2542 = vpop.f32.mrf.mxu0
        %v2543 = vpop.f32.mrf.mxu0
        %v2544 = vadd.f32 %v280, %v2543
        %v2545 = vpop.f32.mrf.mxu0
        %2546 = vmatprep.mubr.bf16.mxu0 0
        %2547 = vmatmul.mubr.bf16.gmra.mxu0 %v2486
        %v2548 = vpop.f32.mrf.mxu0
        %v2549 = vadd.f32 %v281, %v2548
        %v2550 = vpop.f32.mrf.mxu0
        %v2551 = vpop.f32.mrf.mxu0
        %v2552 = vadd.f32 %v282, %v2551
        %v2553 = vpop.f32.mrf.mxu0
        %2554 = vmatprep.mubr.bf16.mxu0 0
        %2555 = vmatmul.mubr.bf16.gmra.mxu0 %v2489
        %v2556 = vpop.f32.mrf.mxu0
        %v2557 = vadd.f32 %v283, %v2556
        %v2558 = vpop.f32.mrf.mxu0
        %v2559 = vpop.f32.mrf.mxu0
        %v2560 = vadd.f32 %v284, %v2559
        %v2561 = vpop.f32.mrf.mxu0
        %2562 = vmatprep.mubr.bf16.mxu0 0
        %2563 = vmatmul.mubr.bf16.gmra.mxu0 %v2492
        %v2564 = vpop.f32.mrf.mxu0
        %v2565 = vadd.f32 %v285, %v2564
        %v2566 = vpop.f32.mrf.mxu0
        %v2567 = vpop.f32.mrf.mxu0
        %v2568 = vadd.f32 %v286, %v2567
        %v2569 = vpop.f32.mrf.mxu0
        %2570 = vdwg.mxu0
        %v2571 = vsel %vm1712, %v2541, -inf
        %2572 = vmax.xlane.f32.xlu0 %v2571
        %v2573 = vpop.xlane.xlu0 %2572
        %v2574 = vsel %vm1712, %v2544, -inf
        %2575 = vmax.xlane.f32.xlu0 %v2574
        %v2576 = vpop.xlane.xlu0 %2575
        %v2577 = vsel %vm1712, %v2549, -inf
        %2578 = vmax.xlane.f32.xlu0 %v2577
        %v2579 = vpop.xlane.xlu0 %2578
        %v2580 = vsel %vm1712, %v2552, -inf
        %2581 = vmax.xlane.f32.xlu0 %v2580
        %v2582 = vpop.xlane.xlu0 %2581
        %v2583 = vsel %vm1712, %v2557, -inf
        %2584 = vmax.xlane.f32.xlu0 %v2583
        %v2585 = vpop.xlane.xlu0 %2584
        %v2586 = vsel %vm1712, %v2560, -inf
        %2587 = vmax.xlane.f32.xlu0 %v2586
        %v2588 = vpop.xlane.xlu0 %2587
        %v2589 = vsel %vm1712, %v2565, -inf
        %2590 = vmax.xlane.f32.xlu0 %v2589
        %v2591 = vpop.xlane.xlu0 %2590
        %v2592 = vsel %vm1712, %v2568, -inf
        %2593 = vmax.xlane.f32.xlu0 %v2592
        %v2594 = vpop.xlane.xlu0 %2593
        %v2595 = vsub.f32 %v2541, %v2573
        %v2596 = vsub.f32 %v2544, %v2576
        %v2597 = vsub.f32 %v2549, %v2579
        %v2598 = vsub.f32 %v2552, %v2582
        %v2599 = vsub.f32 %v2557, %v2585
        %v2600 = vsub.f32 %v2560, %v2588
        %v2601 = vsub.f32 %v2565, %v2591
        %v2602 = vsub.f32 %v2568, %v2594
        %v2603 = vmul.f32 %v2595, 1.442695
        %v2604 = vpow.pop %v2603
        %v2605 = vmul.f32 %v2596, 1.442695
        %v2606 = vpow.pop %v2605
        %v2607 = vmul.f32 %v2597, 1.442695
        %v2608 = vpow.pop %v2607
        %v2609 = vmul.f32 %v2598, 1.442695
        %v2610 = vpow.pop %v2609
        %v2611 = vmul.f32 %v2599, 1.442695
        %v2612 = vpow.pop %v2611
        %v2613 = vmul.f32 %v2600, 1.442695
        %v2614 = vpow.pop %v2613
        %v2615 = vmul.f32 %v2601, 1.442695
        %v2616 = vpow.pop %v2615
        %v2617 = vmul.f32 %v2602, 1.442695
        %v2618 = vpow.pop %v2617
        %v2619 = vsel %vm1712, %v2604, 0.0
        %2620 = vadd.xlane.f32.xlu0 %v2619
        %v2621 = vpop.xlane.xlu0 %2620
        %v2622 = vsel %vm1712, %v2606, 0.0
        %2623 = vadd.xlane.f32.xlu0 %v2622
        %v2624 = vpop.xlane.xlu0 %2623
        %v2625 = vsel %vm1712, %v2608, 0.0
        %2626 = vadd.xlane.f32.xlu0 %v2625
        %v2627 = vpop.xlane.xlu0 %2626
        %v2628 = vsel %vm1712, %v2610, 0.0
        %2629 = vadd.xlane.f32.xlu0 %v2628
        %v2630 = vpop.xlane.xlu0 %2629
        %v2631 = vsel %vm1712, %v2612, 0.0
        %2632 = vadd.xlane.f32.xlu0 %v2631
        %v2633 = vpop.xlane.xlu0 %2632
        %v2634 = vsel %vm1712, %v2614, 0.0
        %2635 = vadd.xlane.f32.xlu0 %v2634
        %v2636 = vpop.xlane.xlu0 %2635
        %v2637 = vsel %vm1712, %v2616, 0.0
        %2638 = vadd.xlane.f32.xlu0 %v2637
        %v2639 = vpop.xlane.xlu0 %2638
        %v2640 = vsel %vm1712, %v2618, 0.0
        %2641 = vadd.xlane.f32.xlu0 %v2640
        %v2642 = vpop.xlane.xlu0 %2641
        %v2643 = vrcp.pop %v2621
        %v2644 = vrcp.pop %v2624
        %v2645 = vrcp.pop %v2627
        %v2646 = vrcp.pop %v2630
        %v2647 = vrcp.pop %v2633
        %v2648 = vrcp.pop %v2636
        %v2649 = vrcp.pop %v2639
        %v2650 = vrcp.pop %v2642
        %v2651 = vmul.f32 %v2604, %v2643
        %v2652 = vmul.f32 %v2606, %v2644
        %v2653 = vmul.f32 %v2608, %v2645
        %v2654 = vmul.f32 %v2610, %v2646
        %v2655 = vmul.f32 %v2612, %v2647
        %v2656 = vmul.f32 %v2614, %v2648
        %v2657 = vmul.f32 %v2616, %v2649
        %v2658 = vmul.f32 %v2618, %v2650
        %v2659 = vpack.c.bf16 %v2652, %v2651
        %v2660 = vpack.c.bf16 %v2654, %v2653
        %v2661 = vpack.c.bf16 %v2656, %v2655
        %v2662 = vpack.c.bf16 %v2658, %v2657
        %2663 = vrot.lane.b32.xlu0 %v1606, 40
        %v2664 = vpop.permute.xlu0 %2663
        %2665 = vrot.lane.b32.xlu0 %v1607, 40
        %v2666 = vpop.permute.xlu0 %2665
        %2667 = vrot.lane.b32.xlu0 %v1608, 40
        %v2668 = vpop.permute.xlu0 %2667
        %2669 = vrot.lane.b32.xlu0 %v1609, 40
        %v2670 = vpop.permute.xlu0 %2669
        %v2676 = vsel %vm1712, %v2659, 0
        %v2679 = vsel %vm1712, %v2660, 0
        %v2682 = vsel %vm1712, %v2661, 0
        %v2685 = vsel %vm1712, %v2662, 0
        %2687 = vmatprep.subr.bf16.mxu0 0
        %2688 = vmatpush1.bf16.msra.mxu0 0
        %2689 = vmatprep.subr.bf16.mxu0 0
        %2690 = vmatpush1.bf16.msra.mxu0 0
        %2691 = vmatprep.subr.bf16.mxu0 0
        %2692 = vmatpush1.bf16.msra.mxu0 0
        %2693 = vmatprep.subr.bf16.mxu0 0
        %2694 = vmatpush1.bf16.msra.mxu0 0
        %2695 = vmatprep.subr.bf16.mxu0 0
        %2696 = vmatpush1.bf16.msra.mxu0 %v2670
        %2697 = vmatprep.subr.bf16.mxu0 0
        %2698 = vmatpush1.bf16.msra.mxu0 %v2668
        %2699 = vmatprep.subr.bf16.mxu0 0
        %2700 = vmatpush1.bf16.msra.mxu0 %v2666
        %2701 = vmatprep.subr.bf16.mxu0 0
        %2702 = vmatpush1.bf16.msra.mxu0 %v2664
        %2703 = vmatprep.subr.bf16.mxu0 0
        %2704 = vmatpush2.bf16.msra.mxu0 0
        %2705 = vmatprep.subr.bf16.mxu0 0
        %2706 = vmatpush2.bf16.msra.mxu0 0
        %2707 = vmatprep.subr.bf16.mxu0 0
        %2708 = vmatpush2.bf16.msra.mxu0 0
        %2709 = vmatprep.subr.bf16.mxu0 0
        %2710 = vmatpush2.bf16.msra.mxu0 0
        %2711 = vmatprep.subr.bf16.mxu0 0
        %2712 = vmatpush2.bf16.msra.mxu0 0
        %2713 = vmatprep.subr.bf16.mxu0 0
        %2714 = vmatpush2.bf16.msra.mxu0 0
        %2715 = vmatprep.subr.bf16.mxu0 0
        %2716 = vmatpush2.bf16.msra.mxu0 0
        %2717 = vmatprep.subr.bf16.mxu0 0
        %2718 = vmatpush2.bf16.msra.mxu0 0
        %2719 = vmatprep.mubr.bf16.mxu0 0
        %2720 = vmatmul.mubr.bf16.gmra.mxu0 %v2676
        %v2721 = vpop.f32.mrf.mxu0
        %v2722 = vadd.f32 0.0, %v2721
        %v2723 = vpop.f32.mrf.mxu0
        %v2724 = vpop.f32.mrf.mxu0
        %v2725 = vadd.f32 0.0, %v2724
        %v2726 = vpop.f32.mrf.mxu0
        %2727 = vmatprep.mubr.bf16.mxu0 0
        %2728 = vmatmul.mubr.bf16.gmra.mxu0 %v2679
        %v2729 = vpop.f32.mrf.mxu0
        %v2730 = vadd.f32 0.0, %v2729
        %v2731 = vpop.f32.mrf.mxu0
        %v2732 = vpop.f32.mrf.mxu0
        %v2733 = vadd.f32 0.0, %v2732
        %v2734 = vpop.f32.mrf.mxu0
        %2735 = vmatprep.mubr.bf16.mxu0 0
        %2736 = vmatmul.mubr.bf16.gmra.mxu0 %v2682
        %v2737 = vpop.f32.mrf.mxu0
        %v2738 = vadd.f32 0.0, %v2737
        %v2739 = vpop.f32.mrf.mxu0
        %v2740 = vpop.f32.mrf.mxu0
        %v2741 = vadd.f32 0.0, %v2740
        %v2742 = vpop.f32.mrf.mxu0
        %2743 = vmatprep.mubr.bf16.mxu0 0
        %2744 = vmatmul.mubr.bf16.gmra.mxu0 %v2685
        %v2745 = vpop.f32.mrf.mxu0
        %v2746 = vadd.f32 0.0, %v2745
        %v2747 = vpop.f32.mrf.mxu0
        %v2748 = vpop.f32.mrf.mxu0
        %v2749 = vadd.f32 0.0, %v2748
        %v2750 = vpop.f32.mrf.mxu0
        %2751 = vdwg.mxu0
        %2760 = vrot.lane.b32.xlu0 %v2150, 8
        %v2761 = vpop.permute.xlu0 %2760
        %2762 = vrot.lane.b32.xlu0 %v2153, 8
        %v2763 = vpop.permute.xlu0 %2762
        %2764 = vrot.lane.b32.xlu0 %v2158, 8
        %v2765 = vpop.permute.xlu0 %2764
        %2766 = vrot.lane.b32.xlu0 %v2161, 8
        %v2767 = vpop.permute.xlu0 %2766
        %2768 = vrot.lane.b32.xlu0 %v2166, 8
        %v2769 = vpop.permute.xlu0 %2768
        %2770 = vrot.lane.b32.xlu0 %v2169, 8
        %v2771 = vpop.permute.xlu0 %2770
        %2772 = vrot.lane.b32.xlu0 %v2174, 8
        %v2773 = vpop.permute.xlu0 %2772
        %2774 = vrot.lane.b32.xlu0 %v2177, 8
        %v2775 = vpop.permute.xlu0 %2774
        %2792 = vrot.lane.b32.xlu0 %v2436, 16
        %v2793 = vpop.permute.xlu0 %2792
        %2794 = vrot.lane.b32.xlu0 %v2439, 16
        %v2795 = vpop.permute.xlu0 %2794
        %2796 = vrot.lane.b32.xlu0 %v2444, 16
        %v2797 = vpop.permute.xlu0 %2796
        %2798 = vrot.lane.b32.xlu0 %v2447, 16
        %v2799 = vpop.permute.xlu0 %2798
        %2800 = vrot.lane.b32.xlu0 %v2452, 16
        %v2801 = vpop.permute.xlu0 %2800
        %2802 = vrot.lane.b32.xlu0 %v2455, 16
        %v2803 = vpop.permute.xlu0 %2802
        %2804 = vrot.lane.b32.xlu0 %v2460, 16
        %v2805 = vpop.permute.xlu0 %2804
        %2806 = vrot.lane.b32.xlu0 %v2463, 16
        %v2807 = vpop.permute.xlu0 %2806
        %2824 = vrot.lane.b32.xlu0 %v2722, 24
        %v2825 = vpop.permute.xlu0 %2824
        %2826 = vrot.lane.b32.xlu0 %v2725, 24
        %v2827 = vpop.permute.xlu0 %2826
        %2828 = vrot.lane.b32.xlu0 %v2730, 24
        %v2829 = vpop.permute.xlu0 %2828
        %2830 = vrot.lane.b32.xlu0 %v2733, 24
        %v2831 = vpop.permute.xlu0 %2830
        %2832 = vrot.lane.b32.xlu0 %v2738, 24
        %v2833 = vpop.permute.xlu0 %2832
        %2834 = vrot.lane.b32.xlu0 %v2741, 24
        %v2835 = vpop.permute.xlu0 %2834
        %2836 = vrot.lane.b32.xlu0 %v2746, 24
        %v2837 = vpop.permute.xlu0 %2836
        %2838 = vrot.lane.b32.xlu0 %v2749, 24
        %v2839 = vpop.permute.xlu0 %2838
        %v2848 = vsel %vm1622, %v1864, %v2761
        %v2849 = vsel %vm1622, %v1867, %v2763
        %v2850 = vsel %vm1622, %v1872, %v2765
        %v2851 = vsel %vm1622, %v1875, %v2767
        %v2852 = vsel %vm1622, %v1880, %v2769
        %v2853 = vsel %vm1622, %v1883, %v2771
        %v2854 = vsel %vm1622, %v1888, %v2773
        %v2855 = vsel %vm1622, %v1891, %v2775
        %vm2856 = vcmask 130048
        %v2857 = vsel %vm2856, %v2848, %v2793
        %v2858 = vsel %vm2856, %v2849, %v2795
        %v2859 = vsel %vm2856, %v2850, %v2797
        %v2860 = vsel %vm2856, %v2851, %v2799
        %v2861 = vsel %vm2856, %v2852, %v2801
        %v2862 = vsel %vm2856, %v2853, %v2803
        %v2863 = vsel %vm2856, %v2854, %v2805
        %v2864 = vsel %vm2856, %v2855, %v2807
        %vm2865 = vcmask 195584
        %v2866 = vsel %vm2865, %v2857, %v2825
        %v2867 = vsel %vm2865, %v2858, %v2827
        %v2868 = vsel %vm2865, %v2859, %v2829
        %v2869 = vsel %vm2865, %v2860, %v2831
        %v2870 = vsel %vm2865, %v2861, %v2833
        %v2871 = vsel %vm2865, %v2862, %v2835
        %v2872 = vsel %vm2865, %v2863, %v2837
        %v2873 = vsel %vm2865, %v2864, %v2839
        %v2874 = vpack.c.bf16 %v2867, %v2866
        %v2875 = vpack.c.bf16 %v2869, %v2868
        %v2876 = vpack.c.bf16 %v2871, %v2870
        %v2877 = vpack.c.bf16 %v2873, %v2872
        %v2878 = vlaneseq
        %v2879 = vshrl.u32 %v2878, 7
        %v2880 = vsub.s32 0, %v2879
        %v2881 = vrot.slane %v294, %v2880
        %v2886 = vunpack.c.l.b16 %v1493
        %v2887 = vunpack.c.l.b16 %v1494
        %v2888 = vunpack.c.l.b16 %v1495
        %v2889 = vunpack.c.l.b16 %v1496
        %v2890 = vpack.c.b16 %v2887, %v2886
        %v2891 = vpack.c.b16 %v2889, %v2888
        %v2895 = vsel %vm458, %v2874, 0
        %v2898 = vsel %vm458, %v2875, 0
        %v2901 = vsel %vm458, %v2876, 0
        %v2904 = vsel %vm458, %v2877, 0
        %2906 = vmatprep.subr.bf16.mxu0 0
        %2907 = vmatpush1.bf16.msra.mxu0 0
        %2908 = vmatprep.subr.bf16.mxu0 0
        %2909 = vmatpush1.bf16.msra.mxu0 0
        %2910 = vmatprep.subr.bf16.mxu0 0
        %2911 = vmatpush1.bf16.msra.mxu0 0
        %2912 = vmatprep.subr.bf16.mxu0 0
        %2913 = vmatpush1.bf16.msra.mxu0 0
        %2914 = vmatprep.subr.bf16.mxu0 0
        %2915 = vmatpush1.bf16.msra.mxu0 0
        %2916 = vmatprep.subr.bf16.mxu0 0
        %2917 = vmatpush1.bf16.msra.mxu0 0
        %2918 = vmatprep.subr.bf16.mxu0 0
        %2919 = vmatpush1.bf16.msra.mxu0 %v2891
        %2920 = vmatprep.subr.bf16.mxu0 0
        %2921 = vmatpush1.bf16.msra.mxu0 %v2890
        %2922 = vmatprep.subr.bf16.mxu0 0
        %2923 = vmatpush2.bf16.msra.mxu0 0
        %2924 = vmatprep.subr.bf16.mxu0 0
        %2925 = vmatpush2.bf16.msra.mxu0 0
        %2926 = vmatprep.subr.bf16.mxu0 0
        %2927 = vmatpush2.bf16.msra.mxu0 0
        %2928 = vmatprep.subr.bf16.mxu0 0
        %2929 = vmatpush2.bf16.msra.mxu0 0
        %2930 = vmatprep.subr.bf16.mxu0 0
        %2931 = vmatpush2.bf16.msra.mxu0 0
        %2932 = vmatprep.subr.bf16.mxu0 0
        %2933 = vmatpush2.bf16.msra.mxu0 0
        %2934 = vmatprep.subr.bf16.mxu0 0
        %2935 = vmatpush2.bf16.msra.mxu0 0
        %2936 = vmatprep.subr.bf16.mxu0 0
        %2937 = vmatpush2.bf16.msra.mxu0 0
        %2938 = vmatprep.mubr.bf16.mxu0 0
        %2939 = vmatmul.mubr.bf16.gmra.mxu0 %v2895
        %v2940 = vpop.f32.mrf.mxu0
        %v2941 = vadd.f32 %v2881, %v2940
        %v2942 = vpop.f32.mrf.mxu0
        %v2943 = vpop.f32.mrf.mxu0
        %v2944 = vadd.f32 %v2881, %v2943
        %v2945 = vpop.f32.mrf.mxu0
        %2946 = vmatprep.mubr.bf16.mxu0 0
        %2947 = vmatmul.mubr.bf16.gmra.mxu0 %v2898
        %v2948 = vpop.f32.mrf.mxu0
        %v2949 = vadd.f32 %v2881, %v2948
        %v2950 = vpop.f32.mrf.mxu0
        %v2951 = vpop.f32.mrf.mxu0
        %v2952 = vadd.f32 %v2881, %v2951
        %v2953 = vpop.f32.mrf.mxu0
        %2954 = vmatprep.mubr.bf16.mxu0 0
        %2955 = vmatmul.mubr.bf16.gmra.mxu0 %v2901
        %v2956 = vpop.f32.mrf.mxu0
        %v2957 = vadd.f32 %v2881, %v2956
        %v2958 = vpop.f32.mrf.mxu0
        %v2959 = vpop.f32.mrf.mxu0
        %v2960 = vadd.f32 %v2881, %v2959
        %v2961 = vpop.f32.mrf.mxu0
        %2962 = vmatprep.mubr.bf16.mxu0 0
        %2963 = vmatmul.mubr.bf16.gmra.mxu0 %v2904
        %v2964 = vpop.f32.mrf.mxu0
        %v2965 = vadd.f32 %v2881, %v2964
        %v2966 = vpop.f32.mrf.mxu0
        %v2967 = vpop.f32.mrf.mxu0
        %v2968 = vadd.f32 %v2881, %v2967
        %v2969 = vpop.f32.mrf.mxu0
        %2970 = vdwg.mxu0
        %2979 = vrot.lane.b32.xlu0 %v1481, 96
        %v2980 = vpop.permute.xlu0 %2979
        %2981 = vrot.lane.b32.xlu0 %v1482, 96
        %v2982 = vpop.permute.xlu0 %2981
        %2983 = vrot.lane.b32.xlu0 %v1483, 96
        %v2984 = vpop.permute.xlu0 %2983
        %2985 = vrot.lane.b32.xlu0 %v1484, 96
        %v2986 = vpop.permute.xlu0 %2985
        %2987 = vrot.lane.b32.xlu0 %v1485, 96
        %v2988 = vpop.permute.xlu0 %2987
        %2989 = vrot.lane.b32.xlu0 %v1486, 96
        %v2990 = vpop.permute.xlu0 %2989
        %2991 = vrot.lane.b32.xlu0 %v1487, 96
        %v2992 = vpop.permute.xlu0 %2991
        %2993 = vrot.lane.b32.xlu0 %v1488, 96
        %v2994 = vpop.permute.xlu0 %2993
        %v3003 = vadd.f32 %v2941, %v2980
        %v3004 = vadd.f32 %v2944, %v2982
        %v3005 = vadd.f32 %v2949, %v2984
        %v3006 = vadd.f32 %v2952, %v2986
        %v3007 = vadd.f32 %v2957, %v2988
        %v3008 = vadd.f32 %v2960, %v2990
        %v3009 = vadd.f32 %v2965, %v2992
        %v3010 = vadd.f32 %v2968, %v2994
        %v3011 = vsel %vm458, %v3003, 0.0
        %3012 = vadd.xlane.f32.xlu0 %v3011
        %v3013 = vpop.xlane.xlu0 %3012
        %v3014 = vsel %vm458, %v3004, 0.0
        %3015 = vadd.xlane.f32.xlu0 %v3014
        %v3016 = vpop.xlane.xlu0 %3015
        %v3017 = vsel %vm458, %v3005, 0.0
        %3018 = vadd.xlane.f32.xlu0 %v3017
        %v3019 = vpop.xlane.xlu0 %3018
        %v3020 = vsel %vm458, %v3006, 0.0
        %3021 = vadd.xlane.f32.xlu0 %v3020
        %v3022 = vpop.xlane.xlu0 %3021
        %v3023 = vsel %vm458, %v3007, 0.0
        %3024 = vadd.xlane.f32.xlu0 %v3023
        %v3025 = vpop.xlane.xlu0 %3024
        %v3026 = vsel %vm458, %v3008, 0.0
        %3027 = vadd.xlane.f32.xlu0 %v3026
        %v3028 = vpop.xlane.xlu0 %3027
        %v3029 = vsel %vm458, %v3009, 0.0
        %3030 = vadd.xlane.f32.xlu0 %v3029
        %v3031 = vpop.xlane.xlu0 %3030
        %v3032 = vsel %vm458, %v3010, 0.0
        %3033 = vadd.xlane.f32.xlu0 %v3032
        %v3034 = vpop.xlane.xlu0 %3033
        %v3035 = vmul.f32 %v3013, %v810
        %v3036 = vmul.f32 %v3016, %v810
        %v3037 = vmul.f32 %v3019, %v810
        %v3038 = vmul.f32 %v3022, %v810
        %v3039 = vmul.f32 %v3025, %v810
        %v3040 = vmul.f32 %v3028, %v810
        %v3041 = vmul.f32 %v3031, %v810
        %v3042 = vmul.f32 %v3034, %v810
        %v3043 = vsub.f32 %v3003, %v3035
        %v3044 = vsub.f32 %v3004, %v3036
        %v3045 = vsub.f32 %v3005, %v3037
        %v3046 = vsub.f32 %v3006, %v3038
        %v3047 = vsub.f32 %v3007, %v3039
        %v3048 = vsub.f32 %v3008, %v3040
        %v3049 = vsub.f32 %v3009, %v3041
        %v3050 = vsub.f32 %v3010, %v3042
        %v3051 = vmul.f32 %v3043, %v3043
        %v3052 = vmul.f32 %v3044, %v3044
        %v3053 = vmul.f32 %v3045, %v3045
        %v3054 = vmul.f32 %v3046, %v3046
        %v3055 = vmul.f32 %v3047, %v3047
        %v3056 = vmul.f32 %v3048, %v3048
        %v3057 = vmul.f32 %v3049, %v3049
        %v3058 = vmul.f32 %v3050, %v3050
        %v3059 = vsel %vm458, %v3051, 0.0
        %3060 = vadd.xlane.f32.xlu0 %v3059
        %v3061 = vpop.xlane.xlu0 %3060
        %v3062 = vsel %vm458, %v3052, 0.0
        %3063 = vadd.xlane.f32.xlu0 %v3062
        %v3064 = vpop.xlane.xlu0 %3063
        %v3065 = vsel %vm458, %v3053, 0.0
        %3066 = vadd.xlane.f32.xlu0 %v3065
        %v3067 = vpop.xlane.xlu0 %3066
        %v3068 = vsel %vm458, %v3054, 0.0
        %3069 = vadd.xlane.f32.xlu0 %v3068
        %v3070 = vpop.xlane.xlu0 %3069
        %v3071 = vsel %vm458, %v3055, 0.0
        %3072 = vadd.xlane.f32.xlu0 %v3071
        %v3073 = vpop.xlane.xlu0 %3072
        %v3074 = vsel %vm458, %v3056, 0.0
        %3075 = vadd.xlane.f32.xlu0 %v3074
        %v3076 = vpop.xlane.xlu0 %3075
        %v3077 = vsel %vm458, %v3057, 0.0
        %3078 = vadd.xlane.f32.xlu0 %v3077
        %v3079 = vpop.xlane.xlu0 %3078
        %v3080 = vsel %vm458, %v3058, 0.0
        %3081 = vadd.xlane.f32.xlu0 %v3080
        %v3082 = vpop.xlane.xlu0 %3081
        %v3083 = vmul.f32 %v3061, %v810
        %v3084 = vmul.f32 %v3064, %v810
        %v3085 = vmul.f32 %v3067, %v810
        %v3086 = vmul.f32 %v3070, %v810
        %v3087 = vmul.f32 %v3073, %v810
        %v3088 = vmul.f32 %v3076, %v810
        %v3089 = vmul.f32 %v3079, %v810
        %v3090 = vmul.f32 %v3082, %v810
        %v3091 = vadd.f32 %v3083, 1e-05
        %v3092 = vadd.f32 %v3084, 1e-05
        %v3093 = vadd.f32 %v3085, 1e-05
        %v3094 = vadd.f32 %v3086, 1e-05
        %v3095 = vadd.f32 %v3087, 1e-05
        %v3096 = vadd.f32 %v3088, 1e-05
        %v3097 = vadd.f32 %v3089, 1e-05
        %v3098 = vadd.f32 %v3090, 1e-05
        %v3099 = vrsqrt.pop %v3091
        %v3100 = vrsqrt.pop %v3092
        %v3101 = vrsqrt.pop %v3093
        %v3102 = vrsqrt.pop %v3094
        %v3103 = vrsqrt.pop %v3095
        %v3104 = vrsqrt.pop %v3096
        %v3105 = vrsqrt.pop %v3097
        %v3106 = vrsqrt.pop %v3098
        %v3107 = vmul.f32 %v3043, %v3099
        %v3108 = vmul.f32 %v3044, %v3100
        %v3109 = vmul.f32 %v3045, %v3101
        %v3110 = vmul.f32 %v3046, %v3102
        %v3111 = vmul.f32 %v3047, %v3103
        %v3112 = vmul.f32 %v3048, %v3104
        %v3113 = vmul.f32 %v3049, %v3105
        %v3114 = vmul.f32 %v3050, %v3106
        %v3115 = vlaneseq
        %v3116 = vshrl.u32 %v3115, 7
        %v3117 = vsub.s32 0, %v3116
        %v3118 = vrot.slane %v295, %v3117
        %v3119 = vmul.f32 %v3107, %v3118
        %v3120 = vmul.f32 %v3108, %v3118
        %v3121 = vmul.f32 %v3109, %v3118
        %v3122 = vmul.f32 %v3110, %v3118
        %v3123 = vmul.f32 %v3111, %v3118
        %v3124 = vmul.f32 %v3112, %v3118
        %v3125 = vmul.f32 %v3113, %v3118
        %v3126 = vmul.f32 %v3114, %v3118
        %v3127 = vlaneseq
        %v3128 = vshrl.u32 %v3127, 7
        %v3129 = vsub.s32 0, %v3128
        %v3130 = vrot.slane %v296, %v3129
        %v3131 = vadd.f32 %v3119, %v3130
        %v3132 = vadd.f32 %v3120, %v3130
        %v3133 = vadd.f32 %v3121, %v3130
        %v3134 = vadd.f32 %v3122, %v3130
        %v3135 = vadd.f32 %v3123, %v3130
        %v3136 = vadd.f32 %v3124, %v3130
        %v3137 = vadd.f32 %v3125, %v3130
        %v3138 = vadd.f32 %v3126, %v3130
        %s3139 = scalar_lea.vmem [#allocation5], 32
        %v3140 = vld [vmem:[%s3139] sm:$0xf]
        %v3141 = vld [vmem:[%s3139 + $0x4] sm:$0xf]
        %v3142 = vld [vmem:[%s3139 + $0x8] sm:$0xf]
        %v3143 = vld [vmem:[%s3139 + $0xc] sm:$0xf]
        %v3144 = vpack.c.bf16 %v3132, %v3131
        %v3145 = vpack.c.bf16 %v3134, %v3133
        %v3146 = vpack.c.bf16 %v3136, %v3135
        %v3147 = vpack.c.bf16 %v3138, %v3137
        %v3152 = vunpack.c.l.b16 %v3140
        %v3153 = vunpack.c.l.b16 %v3141
        %v3154 = vunpack.c.l.b16 %v3142
        %v3155 = vunpack.c.l.b16 %v3143
        %v3156 = vpack.c.b16 %v3153, %v3152
        %v3157 = vpack.c.b16 %v3155, %v3154
        %v3161 = vsel %vm458, %v3144, 0
        %v3164 = vsel %vm458, %v3145, 0
        %v3167 = vsel %vm458, %v3146, 0
        %v3170 = vsel %vm458, %v3147, 0
        %3172 = vmatprep.subr.bf16.mxu0 0
        %3173 = vmatpush1.bf16.msra.mxu0 0
        %3174 = vmatprep.subr.bf16.mxu0 0
        %3175 = vmatpush1.bf16.msra.mxu0 0
        %3176 = vmatprep.subr.bf16.mxu0 0
        %3177 = vmatpush1.bf16.msra.mxu0 0
        %3178 = vmatprep.subr.bf16.mxu0 0
        %3179 = vmatpush1.bf16.msra.mxu0 0
        %3180 = vmatprep.subr.bf16.mxu0 0
        %3181 = vmatpush1.bf16.msra.mxu0 0
        %3182 = vmatprep.subr.bf16.mxu0 0
        %3183 = vmatpush1.bf16.msra.mxu0 0
        %3184 = vmatprep.subr.bf16.mxu0 0
        %3185 = vmatpush1.bf16.msra.mxu0 %v3157
        %3186 = vmatprep.subr.bf16.mxu0 0
        %3187 = vmatpush1.bf16.msra.mxu0 %v3156
        %3188 = vmatprep.subr.bf16.mxu0 0
        %3189 = vmatpush2.bf16.msra.mxu0 0
        %3190 = vmatprep.subr.bf16.mxu0 0
        %3191 = vmatpush2.bf16.msra.mxu0 0
        %3192 = vmatprep.subr.bf16.mxu0 0
        %3193 = vmatpush2.bf16.msra.mxu0 0
        %3194 = vmatprep.subr.bf16.mxu0 0
        %3195 = vmatpush2.bf16.msra.mxu0 0
        %3196 = vmatprep.subr.bf16.mxu0 0
        %3197 = vmatpush2.bf16.msra.mxu0 0
        %3198 = vmatprep.subr.bf16.mxu0 0
        %3199 = vmatpush2.bf16.msra.mxu0 0
        %3200 = vmatprep.subr.bf16.mxu0 0
        %3201 = vmatpush2.bf16.msra.mxu0 0
        %3202 = vmatprep.subr.bf16.mxu0 0
        %3203 = vmatpush2.bf16.msra.mxu0 0
        %3204 = vmatprep.mubr.bf16.mxu0 0
        %3205 = vmatmul.mubr.bf16.gmra.mxu0 %v3161
        %v3206 = vpop.f32.mrf.mxu0
        %v3207 = vadd.f32 0.0, %v3206
        %v3208 = vpop.f32.mrf.mxu0
        %v3209 = vpop.f32.mrf.mxu0
        %v3210 = vadd.f32 0.0, %v3209
        %v3211 = vpop.f32.mrf.mxu0
        %3212 = vmatprep.mubr.bf16.mxu0 0
        %3213 = vmatmul.mubr.bf16.gmra.mxu0 %v3164
        %v3214 = vpop.f32.mrf.mxu0
        %v3215 = vadd.f32 0.0, %v3214
        %v3216 = vpop.f32.mrf.mxu0
        %v3217 = vpop.f32.mrf.mxu0
        %v3218 = vadd.f32 0.0, %v3217
        %v3219 = vpop.f32.mrf.mxu0
        %3220 = vmatprep.mubr.bf16.mxu0 0
        %3221 = vmatmul.mubr.bf16.gmra.mxu0 %v3167
        %v3222 = vpop.f32.mrf.mxu0
        %v3223 = vadd.f32 0.0, %v3222
        %v3224 = vpop.f32.mrf.mxu0
        %v3225 = vpop.f32.mrf.mxu0
        %v3226 = vadd.f32 0.0, %v3225
        %v3227 = vpop.f32.mrf.mxu0
        %3228 = vmatprep.mubr.bf16.mxu0 0
        %3229 = vmatmul.mubr.bf16.gmra.mxu0 %v3170
        %v3230 = vpop.f32.mrf.mxu0
        %v3231 = vadd.f32 0.0, %v3230
        %v3232 = vpop.f32.mrf.mxu0
        %v3233 = vpop.f32.mrf.mxu0
        %v3234 = vadd.f32 0.0, %v3233
        %v3235 = vpop.f32.mrf.mxu0
        %3236 = vdwg.mxu0
        %v3237 = vlaneseq
        %v3238 = vshrl.u32 %v3237, 7
        %v3239 = vsub.s32 0, %v3238
        %v3240 = vrot.slane %v297, %v3239
        %3242 = vrot.lane.b32.xlu0 %v3240, 32
        %v3243 = vpop.permute.xlu0 %3242
        %v3245 = vadd.f32 %v3207, %v3243
        %v3246 = vadd.f32 %v3210, %v3243
        %v3247 = vadd.f32 %v3215, %v3243
        %v3248 = vadd.f32 %v3218, %v3243
        %v3249 = vadd.f32 %v3223, %v3243
        %v3250 = vadd.f32 %v3226, %v3243
        %v3251 = vadd.f32 %v3231, %v3243
        %v3252 = vadd.f32 %v3234, %v3243
        %v3253 = vrot.slane %v3207, 7
        %v3254 = vrot.slane %v3210, 7
        %v3255 = vrot.slane %v3215, 7
        %v3256 = vrot.slane %v3218, 7
        %v3257 = vrot.slane %v3223, 7
        %v3258 = vrot.slane %v3226, 7
        %v3259 = vrot.slane %v3231, 7
        %v3260 = vrot.slane %v3234, 7
        %v3261 = vsel %vm560, %v3259, %v3260
        %v3262 = vsel %vm560, %v3258, %v3259
        %v3263 = vsel %vm560, %v3257, %v3258
        %v3264 = vsel %vm560, %v3256, %v3257
        %v3265 = vsel %vm560, %v3255, %v3256
        %v3266 = vsel %vm560, %v3254, %v3255
        %v3267 = vsel %vm560, %v3253, %v3254
        %v3268 = vsel %vm560, %v3260, %v3253
        %v3269 = vsel %vm577, 0.0, %v3268
        %v3270 = vsel %vm578, 0.0, %v3267
        %v3271 = vsel %vm579, 0.0, %v3266
        %v3272 = vsel %vm580, 0.0, %v3265
        %v3273 = vsel %vm581, 0.0, %v3264
        %v3274 = vsel %vm582, 0.0, %v3263
        %v3275 = vsel %vm583, 0.0, %v3262
        %v3276 = vsel %vm584, 0.0, %v3261
        %3285 = vrot.lane.b32.xlu0 %v3269, 32
        %v3286 = vpop.permute.xlu0 %3285
        %3287 = vrot.lane.b32.xlu0 %v3270, 32
        %v3288 = vpop.permute.xlu0 %3287
        %3289 = vrot.lane.b32.xlu0 %v3271, 32
        %v3290 = vpop.permute.xlu0 %3289
        %3291 = vrot.lane.b32.xlu0 %v3272, 32
        %v3292 = vpop.permute.xlu0 %3291
        %3293 = vrot.lane.b32.xlu0 %v3273, 32
        %v3294 = vpop.permute.xlu0 %3293
        %3295 = vrot.lane.b32.xlu0 %v3274, 32
        %v3296 = vpop.permute.xlu0 %3295
        %3297 = vrot.lane.b32.xlu0 %v3275, 32
        %v3298 = vpop.permute.xlu0 %3297
        %3299 = vrot.lane.b32.xlu0 %v3276, 32
        %v3300 = vpop.permute.xlu0 %3299
        %v3309 = vadd.f32 %v3245, %v3286
        %v3310 = vadd.f32 %v3246, %v3288
        %v3311 = vadd.f32 %v3247, %v3290
        %v3312 = vadd.f32 %v3248, %v3292
        %v3313 = vadd.f32 %v3249, %v3294
        %v3314 = vadd.f32 %v3250, %v3296
        %v3315 = vadd.f32 %v3251, %v3298
        %v3316 = vadd.f32 %v3252, %v3300
        %3325 = vrot.lane.b32.xlu0 %v3207, 64
        %v3326 = vpop.permute.xlu0 %3325
        %3327 = vrot.lane.b32.xlu0 %v3210, 64
        %v3328 = vpop.permute.xlu0 %3327
        %3329 = vrot.lane.b32.xlu0 %v3215, 64
        %v3330 = vpop.permute.xlu0 %3329
        %3331 = vrot.lane.b32.xlu0 %v3218, 64
        %v3332 = vpop.permute.xlu0 %3331
        %3333 = vrot.lane.b32.xlu0 %v3223, 64
        %v3334 = vpop.permute.xlu0 %3333
        %3335 = vrot.lane.b32.xlu0 %v3226, 64
        %v3336 = vpop.permute.xlu0 %3335
        %3337 = vrot.lane.b32.xlu0 %v3231, 64
        %v3338 = vpop.permute.xlu0 %3337
        %3339 = vrot.lane.b32.xlu0 %v3234, 64
        %v3340 = vpop.permute.xlu0 %3339
        %v3349 = vrot.slane %v3326, 1
        %v3350 = vrot.slane %v3328, 1
        %v3351 = vrot.slane %v3330, 1
        %v3352 = vrot.slane %v3332, 1
        %v3353 = vrot.slane %v3334, 1
        %v3354 = vrot.slane %v3336, 1
        %v3355 = vrot.slane %v3338, 1
        %v3356 = vrot.slane %v3340, 1
        %v3357 = vsel %vm673, %v3355, %v3356
        %v3358 = vsel %vm673, %v3354, %v3355
        %v3359 = vsel %vm673, %v3353, %v3354
        %v3360 = vsel %vm673, %v3352, %v3353
        %v3361 = vsel %vm673, %v3351, %v3352
        %v3362 = vsel %vm673, %v3350, %v3351
        %v3363 = vsel %vm673, %v3349, %v3350
        %v3364 = vsel %vm673, %v3356, %v3349
        %v3365 = vsel %vm690, 0.0, %v3363
        %v3366 = vsel %vm691, 0.0, %v3362
        %v3367 = vsel %vm692, 0.0, %v3361
        %v3368 = vsel %vm693, 0.0, %v3360
        %v3369 = vsel %vm694, 0.0, %v3359
        %v3370 = vsel %vm695, 0.0, %v3358
        %v3371 = vsel %vm696, 0.0, %v3357
        %v3372 = vsel %vm697, 0.0, %v3364
        %3381 = vrot.lane.b32.xlu0 %v3365, 32
        %v3382 = vpop.permute.xlu0 %3381
        %3383 = vrot.lane.b32.xlu0 %v3366, 32
        %v3384 = vpop.permute.xlu0 %3383
        %3385 = vrot.lane.b32.xlu0 %v3367, 32
        %v3386 = vpop.permute.xlu0 %3385
        %3387 = vrot.lane.b32.xlu0 %v3368, 32
        %v3388 = vpop.permute.xlu0 %3387
        %3389 = vrot.lane.b32.xlu0 %v3369, 32
        %v3390 = vpop.permute.xlu0 %3389
        %3391 = vrot.lane.b32.xlu0 %v3370, 32
        %v3392 = vpop.permute.xlu0 %3391
        %3393 = vrot.lane.b32.xlu0 %v3371, 32
        %v3394 = vpop.permute.xlu0 %3393
        %3395 = vrot.lane.b32.xlu0 %v3372, 32
        %v3396 = vpop.permute.xlu0 %3395
        %v3405 = vadd.f32 %v3309, %v3382
        %v3406 = vadd.f32 %v3310, %v3384
        %v3407 = vadd.f32 %v3311, %v3386
        %v3408 = vadd.f32 %v3312, %v3388
        %v3409 = vadd.f32 %v3313, %v3390
        %v3410 = vadd.f32 %v3314, %v3392
        %v3411 = vadd.f32 %v3315, %v3394
        %v3412 = vadd.f32 %v3316, %v3396
        %v3413 = vmax.f32 %v3405, 0.0
        %v3414 = vmax.f32 %v3406, 0.0
        %v3415 = vmax.f32 %v3407, 0.0
        %v3416 = vmax.f32 %v3408, 0.0
        %v3417 = vmax.f32 %v3409, 0.0
        %v3418 = vmax.f32 %v3410, 0.0
        %v3419 = vmax.f32 %v3411, 0.0
        %v3420 = vmax.f32 %v3412, 0.0
        %s3421 = scalar_lea.vmem [#allocation5], 48
        %v3422 = vld [vmem:[%s3421] sm:$0xf]
        %v3423 = vld [vmem:[%s3421 + $0x4] sm:$0xf]
        %v3424 = vld [vmem:[%s3421 + $0x8] sm:$0xf]
        %v3425 = vld [vmem:[%s3421 + $0xc] sm:$0xf]
        %v3426 = vpack.c.bf16 %v3414, %v3413
        %v3427 = vpack.c.bf16 %v3416, %v3415
        %v3428 = vpack.c.bf16 %v3418, %v3417
        %v3429 = vpack.c.bf16 %v3420, %v3419
        %3434 = vrot.lane.b32.xlu0 %v3426, 96
        %v3435 = vpop.permute.xlu0 %3434
        %3436 = vrot.lane.b32.xlu0 %v3427, 96
        %v3437 = vpop.permute.xlu0 %3436
        %3438 = vrot.lane.b32.xlu0 %v3428, 96
        %v3439 = vpop.permute.xlu0 %3438
        %3440 = vrot.lane.b32.xlu0 %v3429, 96
        %v3441 = vpop.permute.xlu0 %3440
        %v3446 = vunpack.c.l.b16 %v3422
        %v3447 = vunpack.c.l.b16 %v3423
        %v3448 = vunpack.c.l.b16 %v3424
        %v3449 = vunpack.c.l.b16 %v3425
        %v3450 = vpack.c.b16 %v3447, %v3446
        %v3451 = vpack.c.b16 %v3449, %v3448
        %v3455 = vsel %vm458, %v3435, 0
        %v3458 = vsel %vm458, %v3437, 0
        %v3461 = vsel %vm458, %v3439, 0
        %v3464 = vsel %vm458, %v3441, 0
        %3466 = vmatprep.subr.bf16.mxu0 0
        %3467 = vmatpush1.bf16.msra.mxu0 0
        %3468 = vmatprep.subr.bf16.mxu0 0
        %3469 = vmatpush1.bf16.msra.mxu0 0
        %3470 = vmatprep.subr.bf16.mxu0 0
        %3471 = vmatpush1.bf16.msra.mxu0 0
        %3472 = vmatprep.subr.bf16.mxu0 0
        %3473 = vmatpush1.bf16.msra.mxu0 0
        %3474 = vmatprep.subr.bf16.mxu0 0
        %3475 = vmatpush1.bf16.msra.mxu0 0
        %3476 = vmatprep.subr.bf16.mxu0 0
        %3477 = vmatpush1.bf16.msra.mxu0 0
        %3478 = vmatprep.subr.bf16.mxu0 0
        %3479 = vmatpush1.bf16.msra.mxu0 %v3451
        %3480 = vmatprep.subr.bf16.mxu0 0
        %3481 = vmatpush1.bf16.msra.mxu0 %v3450
        %3482 = vmatprep.subr.bf16.mxu0 0
        %3483 = vmatpush2.bf16.msra.mxu0 0
        %3484 = vmatprep.subr.bf16.mxu0 0
        %3485 = vmatpush2.bf16.msra.mxu0 0
        %3486 = vmatprep.subr.bf16.mxu0 0
        %3487 = vmatpush2.bf16.msra.mxu0 0
        %3488 = vmatprep.subr.bf16.mxu0 0
        %3489 = vmatpush2.bf16.msra.mxu0 0
        %3490 = vmatprep.subr.bf16.mxu0 0
        %3491 = vmatpush2.bf16.msra.mxu0 0
        %3492 = vmatprep.subr.bf16.mxu0 0
        %3493 = vmatpush2.bf16.msra.mxu0 0
        %3494 = vmatprep.subr.bf16.mxu0 0
        %3495 = vmatpush2.bf16.msra.mxu0 0
        %3496 = vmatprep.subr.bf16.mxu0 0
        %3497 = vmatpush2.bf16.msra.mxu0 0
        %3498 = vmatprep.mubr.bf16.mxu0 0
        %3499 = vmatmul.mubr.bf16.gmra.mxu0 %v3455
        %v3500 = vpop.f32.mrf.mxu0
        %v3501 = vadd.f32 0.0, %v3500
        %v3502 = vpop.f32.mrf.mxu0
        %v3503 = vpop.f32.mrf.mxu0
        %v3504 = vadd.f32 0.0, %v3503
        %v3505 = vpop.f32.mrf.mxu0
        %3506 = vmatprep.mubr.bf16.mxu0 0
        %3507 = vmatmul.mubr.bf16.gmra.mxu0 %v3458
        %v3508 = vpop.f32.mrf.mxu0
        %v3509 = vadd.f32 0.0, %v3508
        %v3510 = vpop.f32.mrf.mxu0
        %v3511 = vpop.f32.mrf.mxu0
        %v3512 = vadd.f32 0.0, %v3511
        %v3513 = vpop.f32.mrf.mxu0
        %3514 = vmatprep.mubr.bf16.mxu0 0
        %3515 = vmatmul.mubr.bf16.gmra.mxu0 %v3461
        %v3516 = vpop.f32.mrf.mxu0
        %v3517 = vadd.f32 0.0, %v3516
        %v3518 = vpop.f32.mrf.mxu0
        %v3519 = vpop.f32.mrf.mxu0
        %v3520 = vadd.f32 0.0, %v3519
        %v3521 = vpop.f32.mrf.mxu0
        %3522 = vmatprep.mubr.bf16.mxu0 0
        %3523 = vmatmul.mubr.bf16.gmra.mxu0 %v3464
        %v3524 = vpop.f32.mrf.mxu0
        %v3525 = vadd.f32 0.0, %v3524
        %v3526 = vpop.f32.mrf.mxu0
        %v3527 = vpop.f32.mrf.mxu0
        %v3528 = vadd.f32 0.0, %v3527
        %v3529 = vpop.f32.mrf.mxu0
        %3530 = vdwg.mxu0
        %v3531 = vlaneseq
        %v3532 = vshrl.u32 %v3531, 7
        %v3533 = vsub.s32 0, %v3532
        %v3534 = vrot.slane %v298, %v3533
        %3536 = vrot.lane.b32.xlu0 %v3534, 32
        %v3537 = vpop.permute.xlu0 %3536
        %v3539 = vadd.f32 %v3501, %v3537
        %v3540 = vadd.f32 %v3504, %v3537
        %v3541 = vadd.f32 %v3509, %v3537
        %v3542 = vadd.f32 %v3512, %v3537
        %v3543 = vadd.f32 %v3517, %v3537
        %v3544 = vadd.f32 %v3520, %v3537
        %v3545 = vadd.f32 %v3525, %v3537
        %v3546 = vadd.f32 %v3528, %v3537
        %v3547 = vrot.slane %v3501, 7
        %v3548 = vrot.slane %v3504, 7
        %v3549 = vrot.slane %v3509, 7
        %v3550 = vrot.slane %v3512, 7
        %v3551 = vrot.slane %v3517, 7
        %v3552 = vrot.slane %v3520, 7
        %v3553 = vrot.slane %v3525, 7
        %v3554 = vrot.slane %v3528, 7
        %v3555 = vsel %vm560, %v3553, %v3554
        %v3556 = vsel %vm560, %v3552, %v3553
        %v3557 = vsel %vm560, %v3551, %v3552
        %v3558 = vsel %vm560, %v3550, %v3551
        %v3559 = vsel %vm560, %v3549, %v3550
        %v3560 = vsel %vm560, %v3548, %v3549
        %v3561 = vsel %vm560, %v3547, %v3548
        %v3562 = vsel %vm560, %v3554, %v3547
        %v3563 = vsel %vm577, 0.0, %v3562
        %v3564 = vsel %vm578, 0.0, %v3561
        %v3565 = vsel %vm579, 0.0, %v3560
        %v3566 = vsel %vm580, 0.0, %v3559
        %v3567 = vsel %vm581, 0.0, %v3558
        %v3568 = vsel %vm582, 0.0, %v3557
        %v3569 = vsel %vm583, 0.0, %v3556
        %v3570 = vsel %vm584, 0.0, %v3555
        %3579 = vrot.lane.b32.xlu0 %v3563, 32
        %v3580 = vpop.permute.xlu0 %3579
        %3581 = vrot.lane.b32.xlu0 %v3564, 32
        %v3582 = vpop.permute.xlu0 %3581
        %3583 = vrot.lane.b32.xlu0 %v3565, 32
        %v3584 = vpop.permute.xlu0 %3583
        %3585 = vrot.lane.b32.xlu0 %v3566, 32
        %v3586 = vpop.permute.xlu0 %3585
        %3587 = vrot.lane.b32.xlu0 %v3567, 32
        %v3588 = vpop.permute.xlu0 %3587
        %3589 = vrot.lane.b32.xlu0 %v3568, 32
        %v3590 = vpop.permute.xlu0 %3589
        %3591 = vrot.lane.b32.xlu0 %v3569, 32
        %v3592 = vpop.permute.xlu0 %3591
        %3593 = vrot.lane.b32.xlu0 %v3570, 32
        %v3594 = vpop.permute.xlu0 %3593
        %v3603 = vadd.f32 %v3539, %v3580
        %v3604 = vadd.f32 %v3540, %v3582
        %v3605 = vadd.f32 %v3541, %v3584
        %v3606 = vadd.f32 %v3542, %v3586
        %v3607 = vadd.f32 %v3543, %v3588
        %v3608 = vadd.f32 %v3544, %v3590
        %v3609 = vadd.f32 %v3545, %v3592
        %v3610 = vadd.f32 %v3546, %v3594
        %3619 = vrot.lane.b32.xlu0 %v3501, 64
        %v3620 = vpop.permute.xlu0 %3619
        %3621 = vrot.lane.b32.xlu0 %v3504, 64
        %v3622 = vpop.permute.xlu0 %3621
        %3623 = vrot.lane.b32.xlu0 %v3509, 64
        %v3624 = vpop.permute.xlu0 %3623
        %3625 = vrot.lane.b32.xlu0 %v3512, 64
        %v3626 = vpop.permute.xlu0 %3625
        %3627 = vrot.lane.b32.xlu0 %v3517, 64
        %v3628 = vpop.permute.xlu0 %3627
        %3629 = vrot.lane.b32.xlu0 %v3520, 64
        %v3630 = vpop.permute.xlu0 %3629
        %3631 = vrot.lane.b32.xlu0 %v3525, 64
        %v3632 = vpop.permute.xlu0 %3631
        %3633 = vrot.lane.b32.xlu0 %v3528, 64
        %v3634 = vpop.permute.xlu0 %3633
        %v3643 = vrot.slane %v3620, 1
        %v3644 = vrot.slane %v3622, 1
        %v3645 = vrot.slane %v3624, 1
        %v3646 = vrot.slane %v3626, 1
        %v3647 = vrot.slane %v3628, 1
        %v3648 = vrot.slane %v3630, 1
        %v3649 = vrot.slane %v3632, 1
        %v3650 = vrot.slane %v3634, 1
        %v3651 = vsel %vm673, %v3649, %v3650
        %v3652 = vsel %vm673, %v3648, %v3649
        %v3653 = vsel %vm673, %v3647, %v3648
        %v3654 = vsel %vm673, %v3646, %v3647
        %v3655 = vsel %vm673, %v3645, %v3646
        %v3656 = vsel %vm673, %v3644, %v3645
        %v3657 = vsel %vm673, %v3643, %v3644
        %v3658 = vsel %vm673, %v3650, %v3643
        %v3659 = vsel %vm690, 0.0, %v3657
        %v3660 = vsel %vm691, 0.0, %v3656
        %v3661 = vsel %vm692, 0.0, %v3655
        %v3662 = vsel %vm693, 0.0, %v3654
        %v3663 = vsel %vm694, 0.0, %v3653
        %v3664 = vsel %vm695, 0.0, %v3652
        %v3665 = vsel %vm696, 0.0, %v3651
        %v3666 = vsel %vm697, 0.0, %v3658
        %3675 = vrot.lane.b32.xlu0 %v3659, 32
        %v3676 = vpop.permute.xlu0 %3675
        %3677 = vrot.lane.b32.xlu0 %v3660, 32
        %v3678 = vpop.permute.xlu0 %3677
        %3679 = vrot.lane.b32.xlu0 %v3661, 32
        %v3680 = vpop.permute.xlu0 %3679
        %3681 = vrot.lane.b32.xlu0 %v3662, 32
        %v3682 = vpop.permute.xlu0 %3681
        %3683 = vrot.lane.b32.xlu0 %v3663, 32
        %v3684 = vpop.permute.xlu0 %3683
        %3685 = vrot.lane.b32.xlu0 %v3664, 32
        %v3686 = vpop.permute.xlu0 %3685
        %3687 = vrot.lane.b32.xlu0 %v3665, 32
        %v3688 = vpop.permute.xlu0 %3687
        %3689 = vrot.lane.b32.xlu0 %v3666, 32
        %v3690 = vpop.permute.xlu0 %3689
        %v3699 = vadd.f32 %v3603, %v3676
        %v3700 = vadd.f32 %v3604, %v3678
        %v3701 = vadd.f32 %v3605, %v3680
        %v3702 = vadd.f32 %v3606, %v3682
        %v3703 = vadd.f32 %v3607, %v3684
        %v3704 = vadd.f32 %v3608, %v3686
        %v3705 = vadd.f32 %v3609, %v3688
        %v3706 = vadd.f32 %v3610, %v3690
        %3715 = vrot.lane.b32.xlu0 %v3131, 32
        %v3716 = vpop.permute.xlu0 %3715
        %3717 = vrot.lane.b32.xlu0 %v3132, 32
        %v3718 = vpop.permute.xlu0 %3717
        %3719 = vrot.lane.b32.xlu0 %v3133, 32
        %v3720 = vpop.permute.xlu0 %3719
        %3721 = vrot.lane.b32.xlu0 %v3134, 32
        %v3722 = vpop.permute.xlu0 %3721
        %3723 = vrot.lane.b32.xlu0 %v3135, 32
        %v3724 = vpop.permute.xlu0 %3723
        %3725 = vrot.lane.b32.xlu0 %v3136, 32
        %v3726 = vpop.permute.xlu0 %3725
        %3727 = vrot.lane.b32.xlu0 %v3137, 32
        %v3728 = vpop.permute.xlu0 %3727
        %3729 = vrot.lane.b32.xlu0 %v3138, 32
        %v3730 = vpop.permute.xlu0 %3729
        %v3739 = vadd.f32 %v3699, %v3716
        %v3740 = vadd.f32 %v3700, %v3718
        %v3741 = vadd.f32 %v3701, %v3720
        %v3742 = vadd.f32 %v3702, %v3722
        %v3743 = vadd.f32 %v3703, %v3724
        %v3744 = vadd.f32 %v3704, %v3726
        %v3745 = vadd.f32 %v3705, %v3728
        %v3746 = vadd.f32 %v3706, %v3730
        %3755 = vrot.lane.b32.xlu0 %v3739, 96
        %v3756 = vpop.permute.xlu0 %3755
        %3757 = vrot.lane.b32.xlu0 %v3740, 96
        %v3758 = vpop.permute.xlu0 %3757
        %3759 = vrot.lane.b32.xlu0 %v3741, 96
        %v3760 = vpop.permute.xlu0 %3759
        %3761 = vrot.lane.b32.xlu0 %v3742, 96
        %v3762 = vpop.permute.xlu0 %3761
        %3763 = vrot.lane.b32.xlu0 %v3743, 96
        %v3764 = vpop.permute.xlu0 %3763
        %3765 = vrot.lane.b32.xlu0 %v3744, 96
        %v3766 = vpop.permute.xlu0 %3765
        %3767 = vrot.lane.b32.xlu0 %v3745, 96
        %v3768 = vpop.permute.xlu0 %3767
        %3769 = vrot.lane.b32.xlu0 %v3746, 96
        %v3770 = vpop.permute.xlu0 %3769
        %v3779 = vsel %vm458, %v3756, 0.0
        %3780 = vadd.xlane.f32.xlu0 %v3779
        %v3781 = vpop.xlane.xlu0 %3780
        %v3782 = vsel %vm458, %v3758, 0.0
        %3783 = vadd.xlane.f32.xlu0 %v3782
        %v3784 = vpop.xlane.xlu0 %3783
        %v3785 = vsel %vm458, %v3760, 0.0
        %3786 = vadd.xlane.f32.xlu0 %v3785
        %v3787 = vpop.xlane.xlu0 %3786
        %v3788 = vsel %vm458, %v3762, 0.0
        %3789 = vadd.xlane.f32.xlu0 %v3788
        %v3790 = vpop.xlane.xlu0 %3789
        %v3791 = vsel %vm458, %v3764, 0.0
        %3792 = vadd.xlane.f32.xlu0 %v3791
        %v3793 = vpop.xlane.xlu0 %3792
        %v3794 = vsel %vm458, %v3766, 0.0
        %3795 = vadd.xlane.f32.xlu0 %v3794
        %v3796 = vpop.xlane.xlu0 %3795
        %v3797 = vsel %vm458, %v3768, 0.0
        %3798 = vadd.xlane.f32.xlu0 %v3797
        %v3799 = vpop.xlane.xlu0 %3798
        %v3800 = vsel %vm458, %v3770, 0.0
        %3801 = vadd.xlane.f32.xlu0 %v3800
        %v3802 = vpop.xlane.xlu0 %3801
        %v3803 = vmul.f32 %v3781, %v810
        %v3804 = vmul.f32 %v3784, %v810
        %v3805 = vmul.f32 %v3787, %v810
        %v3806 = vmul.f32 %v3790, %v810
        %v3807 = vmul.f32 %v3793, %v810
        %v3808 = vmul.f32 %v3796, %v810
        %v3809 = vmul.f32 %v3799, %v810
        %v3810 = vmul.f32 %v3802, %v810
        %v3811 = vsub.f32 %v3739, %v3803
        %v3812 = vsub.f32 %v3740, %v3804
        %v3813 = vsub.f32 %v3741, %v3805
        %v3814 = vsub.f32 %v3742, %v3806
        %v3815 = vsub.f32 %v3743, %v3807
        %v3816 = vsub.f32 %v3744, %v3808
        %v3817 = vsub.f32 %v3745, %v3809
        %v3818 = vsub.f32 %v3746, %v3810
        %v3819 = vmul.f32 %v3811, %v3811
        %v3820 = vmul.f32 %v3812, %v3812
        %v3821 = vmul.f32 %v3813, %v3813
        %v3822 = vmul.f32 %v3814, %v3814
        %v3823 = vmul.f32 %v3815, %v3815
        %v3824 = vmul.f32 %v3816, %v3816
        %v3825 = vmul.f32 %v3817, %v3817
        %v3826 = vmul.f32 %v3818, %v3818
        %3835 = vrot.lane.b32.xlu0 %v3819, 96
        %v3836 = vpop.permute.xlu0 %3835
        %3837 = vrot.lane.b32.xlu0 %v3820, 96
        %v3838 = vpop.permute.xlu0 %3837
        %3839 = vrot.lane.b32.xlu0 %v3821, 96
        %v3840 = vpop.permute.xlu0 %3839
        %3841 = vrot.lane.b32.xlu0 %v3822, 96
        %v3842 = vpop.permute.xlu0 %3841
        %3843 = vrot.lane.b32.xlu0 %v3823, 96
        %v3844 = vpop.permute.xlu0 %3843
        %3845 = vrot.lane.b32.xlu0 %v3824, 96
        %v3846 = vpop.permute.xlu0 %3845
        %3847 = vrot.lane.b32.xlu0 %v3825, 96
        %v3848 = vpop.permute.xlu0 %3847
        %3849 = vrot.lane.b32.xlu0 %v3826, 96
        %v3850 = vpop.permute.xlu0 %3849
        %v3859 = vsel %vm458, %v3836, 0.0
        %3860 = vadd.xlane.f32.xlu0 %v3859
        %v3861 = vpop.xlane.xlu0 %3860
        %v3862 = vsel %vm458, %v3838, 0.0
        %3863 = vadd.xlane.f32.xlu0 %v3862
        %v3864 = vpop.xlane.xlu0 %3863
        %v3865 = vsel %vm458, %v3840, 0.0
        %3866 = vadd.xlane.f32.xlu0 %v3865
        %v3867 = vpop.xlane.xlu0 %3866
        %v3868 = vsel %vm458, %v3842, 0.0
        %3869 = vadd.xlane.f32.xlu0 %v3868
        %v3870 = vpop.xlane.xlu0 %3869
        %v3871 = vsel %vm458, %v3844, 0.0
        %3872 = vadd.xlane.f32.xlu0 %v3871
        %v3873 = vpop.xlane.xlu0 %3872
        %v3874 = vsel %vm458, %v3846, 0.0
        %3875 = vadd.xlane.f32.xlu0 %v3874
        %v3876 = vpop.xlane.xlu0 %3875
        %v3877 = vsel %vm458, %v3848, 0.0
        %3878 = vadd.xlane.f32.xlu0 %v3877
        %v3879 = vpop.xlane.xlu0 %3878
        %v3880 = vsel %vm458, %v3850, 0.0
        %3881 = vadd.xlane.f32.xlu0 %v3880
        %v3882 = vpop.xlane.xlu0 %3881
        %v3883 = vmul.f32 %v3861, %v810
        %v3884 = vmul.f32 %v3864, %v810
        %v3885 = vmul.f32 %v3867, %v810
        %v3886 = vmul.f32 %v3870, %v810
        %v3887 = vmul.f32 %v3873, %v810
        %v3888 = vmul.f32 %v3876, %v810
        %v3889 = vmul.f32 %v3879, %v810
        %v3890 = vmul.f32 %v3882, %v810
        %v3891 = vadd.f32 %v3883, 1e-05
        %v3892 = vadd.f32 %v3884, 1e-05
        %v3893 = vadd.f32 %v3885, 1e-05
        %v3894 = vadd.f32 %v3886, 1e-05
        %v3895 = vadd.f32 %v3887, 1e-05
        %v3896 = vadd.f32 %v3888, 1e-05
        %v3897 = vadd.f32 %v3889, 1e-05
        %v3898 = vadd.f32 %v3890, 1e-05
        %v3899 = vrsqrt.pop %v3891
        %v3900 = vrsqrt.pop %v3892
        %v3901 = vrsqrt.pop %v3893
        %v3902 = vrsqrt.pop %v3894
        %v3903 = vrsqrt.pop %v3895
        %v3904 = vrsqrt.pop %v3896
        %v3905 = vrsqrt.pop %v3897
        %v3906 = vrsqrt.pop %v3898
        %v3907 = vmul.f32 %v3811, %v3899
        %v3908 = vmul.f32 %v3812, %v3900
        %v3909 = vmul.f32 %v3813, %v3901
        %v3910 = vmul.f32 %v3814, %v3902
        %v3911 = vmul.f32 %v3815, %v3903
        %v3912 = vmul.f32 %v3816, %v3904
        %v3913 = vmul.f32 %v3817, %v3905
        %v3914 = vmul.f32 %v3818, %v3906
        %v3915 = vlaneseq
        %v3916 = vshrl.u32 %v3915, 7
        %v3917 = vsub.s32 0, %v3916
        %v3918 = vrot.slane %v299, %v3917
        %3920 = vrot.lane.b32.xlu0 %v3918, 32
        %v3921 = vpop.permute.xlu0 %3920
        %v3923 = vmul.f32 %v3907, %v3921
        %v3924 = vmul.f32 %v3908, %v3921
        %v3925 = vmul.f32 %v3909, %v3921
        %v3926 = vmul.f32 %v3910, %v3921
        %v3927 = vmul.f32 %v3911, %v3921
        %v3928 = vmul.f32 %v3912, %v3921
        %v3929 = vmul.f32 %v3913, %v3921
        %v3930 = vmul.f32 %v3914, %v3921
        %v3931 = vlaneseq
        %v3932 = vshrl.u32 %v3931, 7
        %v3933 = vsub.s32 0, %v3932
        %v3934 = vrot.slane %v300, %v3933
        %3936 = vrot.lane.b32.xlu0 %v3934, 32
        %v3937 = vpop.permute.xlu0 %3936
        %v3939 = vadd.f32 %v3923, %v3937
        %v3940 = vadd.f32 %v3924, %v3937
        %v3941 = vadd.f32 %v3925, %v3937
        %v3942 = vadd.f32 %v3926, %v3937
        %v3943 = vadd.f32 %v3927, %v3937
        %v3944 = vadd.f32 %v3928, %v3937
        %v3945 = vadd.f32 %v3929, %v3937
        %v3946 = vadd.f32 %v3930, %v3937
        %vm3947 = vcmask 523520
        %v3948 = vsel %vm3947, %v3939, 0.0
        %v3949 = vsel %vm3947, %v3940, 0.0
        %v3950 = vadd.f32 %v3948, %v3949
        %v3951 = vrot.slane %v3950, 4
        %v3952 = vadd.f32 %v3950, %v3951
        %v3953 = vrot.slane %v3952, 2
        %v3954 = vadd.f32 %v3952, %v3953
        %v3955 = vrot.slane %v3954, 1
        %v3956 = vadd.f32 %v3954, %v3955
        %v3957 = vsel %vm3947, %v3941, 0.0
        %v3958 = vsel %vm3947, %v3942, 0.0
        %v3959 = vadd.f32 %v3957, %v3958
        %v3960 = vrot.slane %v3959, 4
        %v3961 = vadd.f32 %v3959, %v3960
        %v3962 = vrot.slane %v3961, 2
        %v3963 = vadd.f32 %v3961, %v3962
        %v3964 = vrot.slane %v3963, 1
        %v3965 = vadd.f32 %v3963, %v3964
        %v3966 = vsel %vm3947, %v3943, 0.0
        %v3967 = vsel %vm3947, %v3944, 0.0
        %v3968 = vadd.f32 %v3966, %v3967
        %v3969 = vrot.slane %v3968, 4
        %v3970 = vadd.f32 %v3968, %v3969
        %v3971 = vrot.slane %v3970, 2
        %v3972 = vadd.f32 %v3970, %v3971
        %v3973 = vrot.slane %v3972, 1
        %v3974 = vadd.f32 %v3972, %v3973
        %v3975 = vsel %vm3947, %v3945, 0.0
        %v3976 = vsel %vm3947, %v3946, 0.0
        %v3977 = vadd.f32 %v3975, %v3976
        %v3978 = vrot.slane %v3977, 4
        %v3979 = vadd.f32 %v3977, %v3978
        %v3980 = vrot.slane %v3979, 2
        %v3981 = vadd.f32 %v3979, %v3980
        %v3982 = vrot.slane %v3981, 1
        %v3983 = vadd.f32 %v3981, %v3982
        %v3984 = vmul.f32 %v3956, 0.0625
        %v3985 = vmul.f32 %v3965, 0.0625
        %v3986 = vmul.f32 %v3974, 0.0625
        %v3987 = vmul.f32 %v3983, 0.0625
        %vm3992 = vcmask 1041409
        %v3993 = vsel %vm3992, %v3985, %v3984
        %vm3994 = vcmask 1042434
        %v3995 = vsel %vm3994, %v3986, %v3993
        %vm3996 = vcmask 1043459
        %v3997 = vsel %vm3996, %v3987, %v3995
        %3998 = vrot.lane.b32.xlu0 %v3997, 96
        %v3999 = vpop.permute.xlu0 %3998
        %vm4001 = vcmask 257024
        %4002 = vst.msk [vmem:[%s260] sm:$0xf] %vm4001, %v3999
        %s4003 = sand.u32 %s120, 1
        %s4004 = scalar_lea.sflag [#allocation4], %s4003
        %s4005 = sand.u32 %s120, 1
        %s4006 = smul.addr %s4005, 4
        %s4007 = scalar_lea.vmem [#allocation10], %s4006
        // Predicated region
        $region53: #{tpu_custom_call.1} parent=35 // pred_check
          %p4008 = pneg %p130
        $region54: #{tpu_custom_call.1} parent=35 // pred_check_branch
          %4010 = sbr.rel (%p4008) target = $region56
        $region55: #{tpu_custom_call.1} parent=35 // pred_region
          %s4012 = ssub.s32 64, 64
          %4013 = vsyncadd %s4004, %s4012
          %s4014 = smul.addr %s23, 64
          %s4015 = scalar_lea.hbm %s4, %s4014
          %s4017 = sshll.u32 %s4007, 4
          %s4018 = int_to_ptr.vmem [resolvable:$true] %s4017
          %4020 = dma.vmem_to_hbm [thread:$0]  %s4018, 64, %s4015, %s4004
        $region56: #{tpu_custom_call.1} parent=35 // pred_fallthru
          _
      $region36: #{tpu_custom_call.1} parent=5 // pred_fallthru
        _
      %p4021 = scmp.le.s32.totalorder 2, %s18
      // Predicated region
      $region57: #{tpu_custom_call.1} parent=5 // pred_check
        %p4022 = pneg %p4021
      $region58: #{tpu_custom_call.1} parent=5 // pred_check_branch
        %4024 = sbr.rel (%p4022) target = $region60
      $region59: #{tpu_custom_call.1} parent=5 // pred_region
        %s4025 = ssub.s32 %s18, 2
        // Predicated region
        $region61: #{tpu_custom_call.1} parent=59 // pred_check
          %p4026 = pneg %p136
        $region62: #{tpu_custom_call.1} parent=59 // pred_check_branch
          %4028 = sbr.rel (%p4026) target = $region64
        $region63: #{tpu_custom_call.1} parent=59 // pred_region
          %s4029 = sand.u32 %s121, 1
          %s4030 = scalar_lea.sflag [#allocation4], %s4029
          %s4031 = sand.u32 %s121, 1
          %s4032 = smul.addr %s4031, 4
          %s4033 = scalar_lea.vmem [#allocation10], %s4032
          %4034 = dma.done %s4030, 64
        $region64: #{tpu_custom_call.1} parent=59 // pred_fallthru
          _
      $region60: #{tpu_custom_call.1} parent=5 // pred_fallthru
        _
    $region6: #{tpu_custom_call.1} parent=1 // loop_footer
      %s22 = sadd.s32 1, %s18
    $region7: #{tpu_custom_call.1} parent=1 // loop_footer_branch
      %17 = sbr.rel target = $region3
    $region8: #{tpu_custom_call.1} parent=1 // loop_exit
      _
    %4035 = vsyncpa [#allocation3], 1
    %s4036 = scalar_lea.sflag [#allocation3], 1
    %4037 = vsyncpa %s4036, 1
    %4038 = vsyncpa [#allocation6], 1
    %4039 = vsyncpa [#allocation9], 1
    %4040 = vsyncpa [#allocation4], 1
    %s4041 = scalar_lea.sflag [#allocation4], 1
    %4042 = vsyncpa %s4041, 1

</llo_original>
